<compile_context>
chip_gen: v5e
topology: v5e:2x2
jax: 0.10.0
libtpu: 0.0.40
codegen_flags: <defaults>
</compile_context>

<pallas_src>
import functools

import jax
import jax.numpy as jnp
from jax import lax
from jax.experimental import pallas as pl
from jax.experimental.pallas import tpu as pltpu


def _round_up(x, m):
    return (x + m - 1) // m * m


# -----------------------------------------------------------------------------
# Pallas kernel: LSTM over (T, BB, D) + linear1/relu/linear2 head.
# Weight layout (prepared by the wrapper):
#   wih_ref : (D,  4*HP)  gate g lives in columns [g*HP, g*HP + H), rest zero
#   whh_ref : (HP, 4*HP)  rows H..HP-1 are zero (so the 128-wide h feeds it)
#   b_ref   : (1,  4*HP)  combined LSTM bias (b_ih + b_hh), gate-padded
#   w1_ref  : (HP, H)     rows H..HP-1 zero  -> hid = h_wide @ w1 + b1
#   w2_ref  : (H,  TP)    columns tags..TP-1 zero (lane-dense output)
# -----------------------------------------------------------------------------
def _kprn_kernel(x_ref,      # (T, BB, D)   f32  embedded sequence, time-major
                 len_ref,    # (BB, 1)      i32  path lengths
                 wih_ref,    # (D, 4*HP)    f32
                 whh_ref,    # (HP, 4*HP)   f32
                 b_ref,      # (1, 4*HP)    f32
                 w1_ref,     # (HP, H)      f32
                 b1_ref,     # (1, H)       f32
                 w2_ref,     # (H, TP)      f32
                 b2_ref,     # (1, TP)      f32
                 out_ref,    # (BB, TP)     f32
                 gx_scr,     # (T, BB, 4*HP) f32  hoisted input projections
                 h_scr,      # (BB, HP)     f32  hidden state (lanes >= H are 0)
                 c_scr):     # (BB, HP)     f32  cell state   (lanes >= H are 0)
    T, BB, _ = x_ref.shape
    HP = h_scr.shape[1]
    G4 = 4 * HP

    # --- hoisted, non-recurrent input projections (no serial dependence) ---
    bias = jnp.broadcast_to(b_ref[...], (BB, G4))   # broadcast once, reuse
    for t in range(T):                              # unrolled: T static & small
        gx_scr[t] = (
            jnp.dot(x_ref[t], wih_ref[...], preferred_element_type=jnp.float32)
            + bias
        )

    h_scr[...] = jnp.zeros_like(h_scr)
    c_scr[...] = jnp.zeros_like(c_scr)
    lengths = len_ref[...]                          # (BB, 1) int32, loaded once

    # --- fully unrolled recurrence: one MXU matmul per step ---
    for t in range(T):
        gates = gx_scr[t] + jnp.dot(
            h_scr[...], whh_ref[...], preferred_element_type=jnp.float32)
        # Each gate block is HP = 128 lanes wide -> slices land on vreg
        # boundaries, activations/updates are full-vreg VPU/EUP ops.
        i_g = jax.nn.sigmoid(gates[:, 0 * HP:1 * HP])
        f_g = jax.nn.sigmoid(gates[:, 1 * HP:2 * HP])
        g_g = jnp.tanh(gates[:, 2 * HP:3 * HP])
        o_g = jax.nn.sigmoid(gates[:, 3 * HP:4 * HP])

        c_new = f_g * c_scr[...] + i_g * g_g
        h_new = o_g * jnp.tanh(c_new)

        # pack_padded_sequence semantics: freeze state once t >= length,
        # so the final h equals the hidden at step (length - 1) per sequence.
        valid = t < lengths                          # t is a static Python int
        h_scr[...] = jnp.where(valid, h_new, h_scr[...])
        c_scr[...] = jnp.where(valid, c_new, c_scr[...])

    # --- fused head: linear1 -> relu -> linear2 (lane-dense output) ---
    hid = jnp.dot(h_scr[...], w1_ref[...],
                  preferred_element_type=jnp.float32) + b1_ref[...]
    hid = jnp.maximum(hid, 0.0)
    out = jnp.dot(hid, w2_ref[...],
                  preferred_element_type=jnp.float32) + b2_ref[...]
    out_ref[...] = out.astype(out_ref.dtype)


def kprn_lstm_head(x_tbd, path_lengths, wih, whh, b, w1, b1, w2, b2):
    """Run the Pallas kernel.

    x_tbd: (T, B, D) f32 time-major embedded paths, path_lengths: (B,) i32.
    LSTM weights are in the canonical layout: wih (D, 4H), whh (H, 4H),
    b (1, 4H) with gate order i, f, g, o; linear weights are (in, out).
    """
    T, B, D = x_tbd.shape
    H = whh.shape[0]
    tags = w2.shape[1]
    HP = 128          # padded per-gate width: one full vreg of lanes
    TP = 128          # lane-dense output width

    # ---- pad weights so every gate block / the head output is full-vreg ----
    def pad_gate_cols(w):  # (r, 4H) -> (r, 4*HP); gate g -> cols [g*HP, g*HP+H)
        r = w.shape[0]
        wp = jnp.zeros((r, 4 * HP), w.dtype)
        for g in range(4):
            wp = wp.at[:, g * HP:g * HP + H].set(w[:, g * H:(g + 1) * H])
        return wp

    wih_p = pad_gate_cols(wih)                                        # (D, 4HP)
    whh_p = jnp.zeros((HP, 4 * HP), whh.dtype).at[:H, :].set(pad_gate_cols(whh))
    b_p = pad_gate_cols(b)                                            # (1, 4HP)
    w1_p = jnp.zeros((HP, H), w1.dtype).at[:H, :].set(w1)             # (HP, H)
    w2_p = jnp.zeros((H, TP), w2.dtype).at[:, :tags].set(w2)          # (H, TP)
    b2_p = jnp.zeros((1, TP), b2.dtype).at[:, :tags].set(b2)          # (1, TP)
    # TODO(synk): cast matmul operands to bf16 (f32 accumulation) for large
    # batches; kept f32 here to preserve exact parity with the PyTorch module.

    # ---- pad batch to a sublane multiple, grid over batch blocks ----
    BB = min(128, _round_up(B, 8))        # paths processed per grid step
    B_pad = _round_up(B, BB)
    if B_pad != B:
        x_tbd = jnp.pad(x_tbd, ((0, 0), (0, B_pad - B), (0, 0)))
        path_lengths = jnp.pad(path_lengths, (0, B_pad - B))
    lengths_2d = path_lengths.reshape(B_pad, 1).astype(jnp.int32)

    grid = (B_pad // BB,)
    full = lambda i: (0, 0)

    out = pl.pallas_call(
        _kprn_kernel,
        out_shape=jax.ShapeDtypeStruct((B_pad, TP), jnp.float32),
        grid=grid,
        in_specs=[
            pl.BlockSpec((T, BB, D), lambda i: (0, i, 0)),     # x (streamed per batch block)
            pl.BlockSpec((BB, 1), lambda i: (i, 0)),           # lengths
            pl.BlockSpec((D, 4 * HP), full),                   # wih (resident)
            pl.BlockSpec((HP, 4 * HP), full),                  # whh
            pl.BlockSpec((1, 4 * HP), full),                   # lstm bias
            pl.BlockSpec((HP, H), full),                       # w1
            pl.BlockSpec((1, H), full),                        # b1
            pl.BlockSpec((H, TP), full),                       # w2
            pl.BlockSpec((1, TP), full),                       # b2
        ],
        out_specs=pl.BlockSpec((BB, TP), lambda i: (i, 0)),
        scratch_shapes=[
            pltpu.VMEM((T, BB, 4 * HP), jnp.float32),          # hoisted x @ Wih
            pltpu.VMEM((BB, HP), jnp.float32),                 # h
            pltpu.VMEM((BB, HP), jnp.float32),                 # c
        ],
        compiler_params=pltpu.CompilerParams(
            dimension_semantics=("parallel",)),
    )(x_tbd.astype(jnp.float32), lengths_2d, wih_p, whh_p, b_p,
      w1_p, b1, w2_p, b2_p)

    return out[:B, :tags]


# -----------------------------------------------------------------------------
# Full KPRN forward: embedding glue in plain JAX, recurrence + head in Pallas.
# -----------------------------------------------------------------------------
def kprn_forward(params, paths, path_lengths, no_rel=False):
    # paths: (B, T, 3) int32 with last dim = [entity, type, relation]
    # (equivalent to the PyTorch t_paths = transpose(paths, 1, 2) indexing)
    ent_idx = paths[:, :, 0]
    typ_idx = paths[:, :, 1]

    entity_embed = jnp.take(params["e_emb"], ent_idx, axis=0)   # (B, T, e_dim)
    type_embed = jnp.take(params["t_emb"], typ_idx, axis=0)     # (B, T, t_dim)
    if no_rel:
        triplet_embed = jnp.concatenate([entity_embed, type_embed], axis=2)
    else:
        rel_idx = paths[:, :, 2]
        rel_embed = jnp.take(params["r_emb"], rel_idx, axis=0)  # (B, T, r_dim)
        triplet_embed = jnp.concatenate([entity_embed, type_embed, rel_embed], axis=2)

    # layout: (B, T, D) -> (T, B, D) time-major for the LSTM kernel.
    x_tbd = jnp.transpose(triplet_embed, (1, 0, 2)).astype(jnp.float32)

    return kprn_lstm_head(
        x_tbd, path_lengths,
        params["wih"], params["whh"], params["b_lstm"],
        params["w1"], params["b1"], params["w2"], params["b2"],
    )


def weighted_pooling(path_scores, gamma=1.0):
    # Pure-JAX glue equivalent of KPRN.weighted_pooling (tiny reduction).
    return jnp.log(jnp.sum(jnp.exp(path_scores / gamma), axis=0))


# -----------------------------------------------------------------------------
# Pure-JAX reference (for correctness check against the kernel).
# -----------------------------------------------------------------------------
def _reference(params, paths, path_lengths, no_rel=False):
    ent = jnp.take(params["e_emb"], paths[:, :, 0], axis=0)
    typ = jnp.take(params["t_emb"], paths[:, :, 1], axis=0)
    if no_rel:
        trip = jnp.concatenate([ent, typ], axis=2)
    else:
        rel = jnp.take(params["r_emb"], paths[:, :, 2], axis=0)
        trip = jnp.concatenate([ent, typ, rel], axis=2)
    x = jnp.transpose(trip, (1, 0, 2)).astype(jnp.float32)  # (T, B, D)

    T, B, D = x.shape
    H = params["whh"].shape[0]
    wih, whh, b = params["wih"], params["whh"], params["b_lstm"]

    def step(carry, inp):
        h, c = carry
        x_t, t = inp
        gates = x_t @ wih + h @ whh + b
        i = jax.nn.sigmoid(gates[:, 0 * H:1 * H])
        f = jax.nn.sigmoid(gates[:, 1 * H:2 * H])
        g = jnp.tanh(gates[:, 2 * H:3 * H])
        o = jax.nn.sigmoid(gates[:, 3 * H:4 * H])
        c_new = f * c + i * g
        h_new = o * jnp.tanh(c_new)
        valid = (t < path_lengths)[:, None]
        return (jnp.where(valid, h_new, h), jnp.where(valid, c_new, c)), None

    init = (jnp.zeros((B, H), jnp.float32), jnp.zeros((B, H), jnp.float32))
    (h, _), _ = lax.scan(step, init, (x, jnp.arange(T)))

    hid = jnp.maximum(h @ params["w1"] + params["b1"], 0.0)
    return hid @ params["w2"] + params["b2"]


# -----------------------------------------------------------------------------
# Main
# -----------------------------------------------------------------------------
if __name__ == "__main__":
    # Model hyper-parameters (small but consistent with KPRN.__init__)
    e_emb_dim, t_emb_dim, r_emb_dim = 16, 16, 16
    hidden_dim = 32
    e_vocab, t_vocab, r_vocab = 50, 10, 12
    tagset_size = 2
    no_rel = False
    in_dim = e_emb_dim + t_emb_dim + (0 if no_rel else r_emb_dim)

    batch, seq_len = 8, 6

    key = jax.random.PRNGKey(0)
    keys = jax.random.split(key, 13)

    scale = 0.1
    params = {
        "e_emb": scale * jax.random.normal(keys[0], (e_vocab, e_emb_dim), jnp.float32),
        "t_emb": scale * jax.random.normal(keys[1], (t_vocab, t_emb_dim), jnp.float32),
        "r_emb": scale * jax.random.normal(keys[2], (r_vocab, r_emb_dim), jnp.float32),
        # LSTM weights stored transposed vs. PyTorch: (in, 4H) / (H, 4H),
        # gate order i, f, g, o; bias is b_ih + b_hh combined -> (1, 4H).
        "wih": scale * jax.random.normal(keys[3], (in_dim, 4 * hidden_dim), jnp.float32),
        "whh": scale * jax.random.normal(keys[4], (hidden_dim, 4 * hidden_dim), jnp.float32),
        "b_lstm": scale * jax.random.normal(keys[5], (1, 4 * hidden_dim), jnp.float32),
        # Linear layers stored as (in, out).
        "w1": scale * jax.random.normal(keys[6], (hidden_dim, hidden_dim), jnp.float32),
        "b1": scale * jax.random.normal(keys[7], (1, hidden_dim), jnp.float32),
        "w2": scale * jax.random.normal(keys[8], (hidden_dim, tagset_size), jnp.float32),
        "b2": scale * jax.random.normal(keys[9], (1, tagset_size), jnp.float32),
    }

    # Integer paths: (B, T, 3) with [entity, type, relation] indices.
    ent_ids = jax.random.randint(keys[10], (batch, seq_len), 0, e_vocab)
    typ_ids = jax.random.randint(keys[11], (batch, seq_len), 0, t_vocab)
    rel_ids = jax.random.randint(keys[12], (batch, seq_len), 0, r_vocab)
    paths = jnp.stack([ent_ids, typ_ids, rel_ids], axis=2).astype(jnp.int32)

    # Sorted-descending lengths (pack_padded_sequence requires this).
    path_lengths = jnp.array([6, 6, 5, 5, 4, 4, 3, 3], dtype=jnp.int32)

    fwd = jax.jit(functools.partial(kprn_forward, no_rel=no_rel))
    tag_scores = fwd(params, paths, path_lengths)
    jax.block_until_ready(tag_scores)

    ref = _reference(params, paths, path_lengths, no_rel=no_rel)
    assert tag_scores.shape == (batch, tagset_size)
    assert jnp.allclose(tag_scores, ref, atol=1e-4, rtol=1e-4), (
        f"mismatch:\n{tag_scores}\nvs\n{ref}"
    )

    # exercise weighted_pooling glue as well
    _ = jax.block_until_ready(weighted_pooling(tag_scores))

    print("KERNEL_OK")
</pallas_src>

<mosaic_0001>
module attributes {stable_mosaic.version = 11 : i64} {
  func.func @_kprn_kernel(%arg0: i32, %arg1: memref<6x8x48xf32, #tpu.memory_space<vmem>>, %arg2: memref<8x1xi32, #tpu.memory_space<vmem>>, %arg3: memref<48x512xf32, #tpu.memory_space<vmem>>, %arg4: memref<128x512xf32, #tpu.memory_space<vmem>>, %arg5: memref<1x512xf32, #tpu.memory_space<vmem>>, %arg6: memref<128x32xf32, #tpu.memory_space<vmem>>, %arg7: memref<1x32xf32, #tpu.memory_space<vmem>>, %arg8: memref<32x128xf32, #tpu.memory_space<vmem>>, %arg9: memref<1x128xf32, #tpu.memory_space<vmem>>, %arg10: memref<8x128xf32, #tpu.memory_space<vmem>>, %arg11: memref<6x8x512xf32, #tpu.memory_space<vmem>>, %arg12: memref<8x128xf32, #tpu.memory_space<vmem>>, %arg13: memref<8x128xf32, #tpu.memory_space<vmem>>) attributes {dimension_semantics = [#tpu.dimension_semantics<parallel>], iteration_bounds = array<i64: 1>, scalar_prefetch = 0 : i64, scratch_operands = 3 : i64, tpu.core_type = #tpu.core_type<tc>, window_params = [{transform_indices = @transform_0, window_bounds = array<i64: 6, 8, 48>}, {transform_indices = @transform_1, window_bounds = array<i64: 8, 1>}, {pipeline_mode = #tpu.pipeline_mode<synchronous>, transform_indices = @transform_2, window_bounds = array<i64: 48, 512>}, {pipeline_mode = #tpu.pipeline_mode<synchronous>, transform_indices = @transform_3, window_bounds = array<i64: 128, 512>}, {pipeline_mode = #tpu.pipeline_mode<synchronous>, transform_indices = @transform_4, window_bounds = array<i64: 1, 512>}, {pipeline_mode = #tpu.pipeline_mode<synchronous>, transform_indices = @transform_5, window_bounds = array<i64: 128, 32>}, {pipeline_mode = #tpu.pipeline_mode<synchronous>, transform_indices = @transform_6, window_bounds = array<i64: 1, 32>}, {pipeline_mode = #tpu.pipeline_mode<synchronous>, transform_indices = @transform_7, window_bounds = array<i64: 32, 128>}, {pipeline_mode = #tpu.pipeline_mode<synchronous>, transform_indices = @transform_8, window_bounds = array<i64: 1, 128>}, {transform_indices = @transform_9, window_bounds = array<i64: 8, 128>}]} {
    %c0 = arith.constant 0 : index
    %c0_0 = arith.constant 0 : index
    %0 = vector.load %arg5[%c0, %c0_0] : memref<1x512xf32, #tpu.memory_space<vmem>>, vector<1x512xf32>
    %1 = vector.shape_cast %0 : vector<1x512xf32> to vector<1x512xf32>
    %2 = vector.broadcast %1 : vector<1x512xf32> to vector<8x512xf32>
    %c0_1 = arith.constant 0 : index
    %c0_2 = arith.constant 0 : index
    %c0_3 = arith.constant 0 : index
    %3 = vector.load %arg1[%c0_1, %c0_2, %c0_3] : memref<6x8x48xf32, #tpu.memory_space<vmem>>, vector<1x8x48xf32>
    %4 = vector.shape_cast %3 : vector<1x8x48xf32> to vector<8x48xf32>
    %c0_4 = arith.constant 0 : index
    %c0_5 = arith.constant 0 : index
    %5 = vector.load %arg3[%c0_4, %c0_5] : memref<48x512xf32, #tpu.memory_space<vmem>>, vector<48x512xf32>
    %cst = arith.constant dense<0.000000e+00> : vector<8x512xf32>
    %6 = tpu.matmul %4, %5, %cst {dimension_numbers = #tpu.dot_dimension_numbers<[1], [0], [0], [1], [0, 0, 1, 1], [], []>} : vector<8x48xf32>, vector<48x512xf32>, vector<8x512xf32> -> vector<8x512xf32>
    %7 = arith.addf %6, %2 : vector<8x512xf32>
    %c0_6 = arith.constant 0 : index
    %c0_7 = arith.constant 0 : index
    %c0_8 = arith.constant 0 : index
    %8 = vector.load %arg11[%c0_6, %c0_7, %c0_8] : memref<6x8x512xf32, #tpu.memory_space<vmem>>, vector<1x8x512xf32>
    %9 = vector.shape_cast %8 : vector<1x8x512xf32> to vector<8x512xf32>
    %10 = vector.shape_cast %7 : vector<8x512xf32> to vector<1x8x512xf32>
    tpu.vector_store %arg11[%c0_6, %c0_7, %c0_8], %10 {strides = array<i32>} : memref<6x8x512xf32, #tpu.memory_space<vmem>>, vector<1x8x512xf32>,
    %c1 = arith.constant 1 : index
    %c0_9 = arith.constant 0 : index
    %c0_10 = arith.constant 0 : index
    %11 = vector.load %arg1[%c1, %c0_9, %c0_10] : memref<6x8x48xf32, #tpu.memory_space<vmem>>, vector<1x8x48xf32>
    %12 = vector.shape_cast %11 : vector<1x8x48xf32> to vector<8x48xf32>
    %c0_11 = arith.constant 0 : index
    %c0_12 = arith.constant 0 : index
    %13 = vector.load %arg3[%c0_11, %c0_12] : memref<48x512xf32, #tpu.memory_space<vmem>>, vector<48x512xf32>
    %cst_13 = arith.constant dense<0.000000e+00> : vector<8x512xf32>
    %14 = tpu.matmul %12, %13, %cst_13 {dimension_numbers = #tpu.dot_dimension_numbers<[1], [0], [0], [1], [0, 0, 1, 1], [], []>} : vector<8x48xf32>, vector<48x512xf32>, vector<8x512xf32> -> vector<8x512xf32>
    %15 = arith.addf %14, %2 : vector<8x512xf32>
    %c1_14 = arith.constant 1 : index
    %c0_15 = arith.constant 0 : index
    %c0_16 = arith.constant 0 : index
    %16 = vector.load %arg11[%c1_14, %c0_15, %c0_16] : memref<6x8x512xf32, #tpu.memory_space<vmem>>, vector<1x8x512xf32>
    %17 = vector.shape_cast %16 : vector<1x8x512xf32> to vector<8x512xf32>
    %18 = vector.shape_cast %15 : vector<8x512xf32> to vector<1x8x512xf32>
    tpu.vector_store %arg11[%c1_14, %c0_15, %c0_16], %18 {strides = array<i32>} : memref<6x8x512xf32, #tpu.memory_space<vmem>>, vector<1x8x512xf32>,
    %c2 = arith.constant 2 : index
    %c0_17 = arith.constant 0 : index
    %c0_18 = arith.constant 0 : index
    %19 = vector.load %arg1[%c2, %c0_17, %c0_18] : memref<6x8x48xf32, #tpu.memory_space<vmem>>, vector<1x8x48xf32>
    %20 = vector.shape_cast %19 : vector<1x8x48xf32> to vector<8x48xf32>
    %c0_19 = arith.constant 0 : index
    %c0_20 = arith.constant 0 : index
    %21 = vector.load %arg3[%c0_19, %c0_20] : memref<48x512xf32, #tpu.memory_space<vmem>>, vector<48x512xf32>
    %cst_21 = arith.constant dense<0.000000e+00> : vector<8x512xf32>
    %22 = tpu.matmul %20, %21, %cst_21 {dimension_numbers = #tpu.dot_dimension_numbers<[1], [0], [0], [1], [0, 0, 1, 1], [], []>} : vector<8x48xf32>, vector<48x512xf32>, vector<8x512xf32> -> vector<8x512xf32>
    %23 = arith.addf %22, %2 : vector<8x512xf32>
    %c2_22 = arith.constant 2 : index
    %c0_23 = arith.constant 0 : index
    %c0_24 = arith.constant 0 : index
    %24 = vector.load %arg11[%c2_22, %c0_23, %c0_24] : memref<6x8x512xf32, #tpu.memory_space<vmem>>, vector<1x8x512xf32>
    %25 = vector.shape_cast %24 : vector<1x8x512xf32> to vector<8x512xf32>
    %26 = vector.shape_cast %23 : vector<8x512xf32> to vector<1x8x512xf32>
    tpu.vector_store %arg11[%c2_22, %c0_23, %c0_24], %26 {strides = array<i32>} : memref<6x8x512xf32, #tpu.memory_space<vmem>>, vector<1x8x512xf32>,
    %c3 = arith.constant 3 : index
    %c0_25 = arith.constant 0 : index
    %c0_26 = arith.constant 0 : index
    %27 = vector.load %arg1[%c3, %c0_25, %c0_26] : memref<6x8x48xf32, #tpu.memory_space<vmem>>, vector<1x8x48xf32>
    %28 = vector.shape_cast %27 : vector<1x8x48xf32> to vector<8x48xf32>
    %c0_27 = arith.constant 0 : index
    %c0_28 = arith.constant 0 : index
    %29 = vector.load %arg3[%c0_27, %c0_28] : memref<48x512xf32, #tpu.memory_space<vmem>>, vector<48x512xf32>
    %cst_29 = arith.constant dense<0.000000e+00> : vector<8x512xf32>
    %30 = tpu.matmul %28, %29, %cst_29 {dimension_numbers = #tpu.dot_dimension_numbers<[1], [0], [0], [1], [0, 0, 1, 1], [], []>} : vector<8x48xf32>, vector<48x512xf32>, vector<8x512xf32> -> vector<8x512xf32>
    %31 = arith.addf %30, %2 : vector<8x512xf32>
    %c3_30 = arith.constant 3 : index
    %c0_31 = arith.constant 0 : index
    %c0_32 = arith.constant 0 : index
    %32 = vector.load %arg11[%c3_30, %c0_31, %c0_32] : memref<6x8x512xf32, #tpu.memory_space<vmem>>, vector<1x8x512xf32>
    %33 = vector.shape_cast %32 : vector<1x8x512xf32> to vector<8x512xf32>
    %34 = vector.shape_cast %31 : vector<8x512xf32> to vector<1x8x512xf32>
    tpu.vector_store %arg11[%c3_30, %c0_31, %c0_32], %34 {strides = array<i32>} : memref<6x8x512xf32, #tpu.memory_space<vmem>>, vector<1x8x512xf32>,
    %c4 = arith.constant 4 : index
    %c0_33 = arith.constant 0 : index
    %c0_34 = arith.constant 0 : index
    %35 = vector.load %arg1[%c4, %c0_33, %c0_34] : memref<6x8x48xf32, #tpu.memory_space<vmem>>, vector<1x8x48xf32>
    %36 = vector.shape_cast %35 : vector<1x8x48xf32> to vector<8x48xf32>
    %c0_35 = arith.constant 0 : index
    %c0_36 = arith.constant 0 : index
    %37 = vector.load %arg3[%c0_35, %c0_36] : memref<48x512xf32, #tpu.memory_space<vmem>>, vector<48x512xf32>
    %cst_37 = arith.constant dense<0.000000e+00> : vector<8x512xf32>
    %38 = tpu.matmul %36, %37, %cst_37 {dimension_numbers = #tpu.dot_dimension_numbers<[1], [0], [0], [1], [0, 0, 1, 1], [], []>} : vector<8x48xf32>, vector<48x512xf32>, vector<8x512xf32> -> vector<8x512xf32>
    %39 = arith.addf %38, %2 : vector<8x512xf32>
    %c4_38 = arith.constant 4 : index
    %c0_39 = arith.constant 0 : index
    %c0_40 = arith.constant 0 : index
    %40 = vector.load %arg11[%c4_38, %c0_39, %c0_40] : memref<6x8x512xf32, #tpu.memory_space<vmem>>, vector<1x8x512xf32>
    %41 = vector.shape_cast %40 : vector<1x8x512xf32> to vector<8x512xf32>
    %42 = vector.shape_cast %39 : vector<8x512xf32> to vector<1x8x512xf32>
    tpu.vector_store %arg11[%c4_38, %c0_39, %c0_40], %42 {strides = array<i32>} : memref<6x8x512xf32, #tpu.memory_space<vmem>>, vector<1x8x512xf32>,
    %c5 = arith.constant 5 : index
    %c0_41 = arith.constant 0 : index
    %c0_42 = arith.constant 0 : index
    %43 = vector.load %arg1[%c5, %c0_41, %c0_42] : memref<6x8x48xf32, #tpu.memory_space<vmem>>, vector<1x8x48xf32>
    %44 = vector.shape_cast %43 : vector<1x8x48xf32> to vector<8x48xf32>
    %c0_43 = arith.constant 0 : index
    %c0_44 = arith.constant 0 : index
    %45 = vector.load %arg3[%c0_43, %c0_44] : memref<48x512xf32, #tpu.memory_space<vmem>>, vector<48x512xf32>
    %cst_45 = arith.constant dense<0.000000e+00> : vector<8x512xf32>
    %46 = tpu.matmul %44, %45, %cst_45 {dimension_numbers = #tpu.dot_dimension_numbers<[1], [0], [0], [1], [0, 0, 1, 1], [], []>} : vector<8x48xf32>, vector<48x512xf32>, vector<8x512xf32> -> vector<8x512xf32>
    %47 = arith.addf %46, %2 : vector<8x512xf32>
    %c5_46 = arith.constant 5 : index
    %c0_47 = arith.constant 0 : index
    %c0_48 = arith.constant 0 : index
    %48 = vector.load %arg11[%c5_46, %c0_47, %c0_48] : memref<6x8x512xf32, #tpu.memory_space<vmem>>, vector<1x8x512xf32>
    %49 = vector.shape_cast %48 : vector<1x8x512xf32> to vector<8x512xf32>
    %50 = vector.shape_cast %47 : vector<8x512xf32> to vector<1x8x512xf32>
    tpu.vector_store %arg11[%c5_46, %c0_47, %c0_48], %50 {strides = array<i32>} : memref<6x8x512xf32, #tpu.memory_space<vmem>>, vector<1x8x512xf32>,
    %cst_49 = arith.constant 0.000000e+00 : f32
    %51 = vector.broadcast %cst_49 : f32 to vector<8x128xf32>
    %c0_50 = arith.constant 0 : index
    %c0_51 = arith.constant 0 : index
    %52 = vector.load %arg12[%c0_50, %c0_51] : memref<8x128xf32, #tpu.memory_space<vmem>>, vector<8x128xf32>
    tpu.vector_store %arg12[%c0_50, %c0_51], %51 {strides = array<i32>} : memref<8x128xf32, #tpu.memory_space<vmem>>, vector<8x128xf32>,
    %cst_52 = arith.constant 0.000000e+00 : f32
    %53 = vector.broadcast %cst_52 : f32 to vector<8x128xf32>
    %c0_53 = arith.constant 0 : index
    %c0_54 = arith.constant 0 : index
    %54 = vector.load %arg13[%c0_53, %c0_54] : memref<8x128xf32, #tpu.memory_space<vmem>>, vector<8x128xf32>
    tpu.vector_store %arg13[%c0_53, %c0_54], %53 {strides = array<i32>} : memref<8x128xf32, #tpu.memory_space<vmem>>, vector<8x128xf32>,
    %c0_55 = arith.constant 0 : index
    %c0_56 = arith.constant 0 : index
    %55 = vector.load %arg2[%c0_55, %c0_56] : memref<8x1xi32, #tpu.memory_space<vmem>>, vector<8x1xi32>
    %c0_57 = arith.constant 0 : index
    %c0_58 = arith.constant 0 : index
    %c0_59 = arith.constant 0 : index
    %56 = vector.load %arg11[%c0_57, %c0_58, %c0_59] : memref<6x8x512xf32, #tpu.memory_space<vmem>>, vector<1x8x512xf32>
    %57 = vector.shape_cast %56 : vector<1x8x512xf32> to vector<8x512xf32>
    %c0_60 = arith.constant 0 : index
    %c0_61 = arith.constant 0 : index
    %58 = vector.load %arg12[%c0_60, %c0_61] : memref<8x128xf32, #tpu.memory_space<vmem>>, vector<8x128xf32>
    %c0_62 = arith.constant 0 : index
    %c0_63 = arith.constant 0 : index
    %59 = vector.load %arg4[%c0_62, %c0_63] : memref<128x512xf32, #tpu.memory_space<vmem>>, vector<128x512xf32>
    %cst_64 = arith.constant dense<0.000000e+00> : vector<8x512xf32>
    %60 = tpu.matmul %58, %59, %cst_64 {dimension_numbers = #tpu.dot_dimension_numbers<[1], [0], [0], [1], [0, 0, 1, 1], [], []>} : vector<8x128xf32>, vector<128x512xf32>, vector<8x512xf32> -> vector<8x512xf32>
    %61 = arith.addf %57, %60 : vector<8x512xf32>
    %62 = vector.extract_strided_slice %61 {offsets = [0, 0], sizes = [8, 128], strides = [1, 1]} : vector<8x512xf32> to vector<8x128xf32>
    %63 = arith.negf %62 : vector<8x128xf32>
    %64 = math.exp %63 : vector<8x128xf32>
    %cst_65 = arith.constant 1.000000e+00 : f32
    %65 = vector.broadcast %cst_65 : f32 to vector<8x128xf32>
    %66 = arith.addf %65, %64 : vector<8x128xf32>
    %67 = arith.divf %65, %66 : vector<8x128xf32>
    %68 = vector.extract_strided_slice %61 {offsets = [0, 128], sizes = [8, 128], strides = [1, 1]} : vector<8x512xf32> to vector<8x128xf32>
    %69 = arith.negf %68 : vector<8x128xf32>
    %70 = math.exp %69 : vector<8x128xf32>
    %cst_66 = arith.constant 1.000000e+00 : f32
    %71 = vector.broadcast %cst_66 : f32 to vector<8x128xf32>
    %72 = arith.addf %71, %70 : vector<8x128xf32>
    %73 = arith.divf %71, %72 : vector<8x128xf32>
    %74 = vector.extract_strided_slice %61 {offsets = [0, 256], sizes = [8, 128], strides = [1, 1]} : vector<8x512xf32> to vector<8x128xf32>
    %75 = math.tanh %74 : vector<8x128xf32>
    %76 = vector.extract_strided_slice %61 {offsets = [0, 384], sizes = [8, 128], strides = [1, 1]} : vector<8x512xf32> to vector<8x128xf32>
    %77 = arith.negf %76 : vector<8x128xf32>
    %78 = math.exp %77 : vector<8x128xf32>
    %cst_67 = arith.constant 1.000000e+00 : f32
    %79 = vector.broadcast %cst_67 : f32 to vector<8x128xf32>
    %80 = arith.addf %79, %78 : vector<8x128xf32>
    %81 = arith.divf %79, %80 : vector<8x128xf32>
    %c0_68 = arith.constant 0 : index
    %c0_69 = arith.constant 0 : index
    %82 = vector.load %arg13[%c0_68, %c0_69] : memref<8x128xf32, #tpu.memory_space<vmem>>, vector<8x128xf32>
    %83 = arith.mulf %73, %82 : vector<8x128xf32>
    %84 = arith.mulf %67, %75 : vector<8x128xf32>
    %85 = arith.addf %83, %84 : vector<8x128xf32>
    %86 = math.tanh %85 : vector<8x128xf32>
    %87 = arith.mulf %81, %86 : vector<8x128xf32>
    %c0_i32 = arith.constant 0 : i32
    %88 = vector.broadcast %c0_i32 : i32 to vector<8x1xi32>
    %89 = arith.cmpi sgt, %55, %88 : vector<8x1xi32>
    %c0_70 = arith.constant 0 : index
    %c0_71 = arith.constant 0 : index
    %90 = vector.load %arg12[%c0_70, %c0_71] : memref<8x128xf32, #tpu.memory_space<vmem>>, vector<8x128xf32>
    %91 = vector.shape_cast %89 : vector<8x1xi1> to vector<8x1xi1>
    %92 = vector.broadcast %91 : vector<8x1xi1> to vector<8x128xi1>
    %93 = arith.select %92, %87, %90 : vector<8x128xi1>, vector<8x128xf32>
    %c0_72 = arith.constant 0 : index
    %c0_73 = arith.constant 0 : index
    %94 = vector.load %arg12[%c0_72, %c0_73] : memref<8x128xf32, #tpu.memory_space<vmem>>, vector<8x128xf32>
    tpu.vector_store %arg12[%c0_72, %c0_73], %93 {strides = array<i32>} : memref<8x128xf32, #tpu.memory_space<vmem>>, vector<8x128xf32>,
    %c0_74 = arith.constant 0 : index
    %c0_75 = arith.constant 0 : index
    %95 = vector.load %arg13[%c0_74, %c0_75] : memref<8x128xf32, #tpu.memory_space<vmem>>, vector<8x128xf32>
    %96 = vector.shape_cast %89 : vector<8x1xi1> to vector<8x1xi1>
    %97 = vector.broadcast %96 : vector<8x1xi1> to vector<8x128xi1>
    %98 = arith.select %97, %85, %95 : vector<8x128xi1>, vector<8x128xf32>
    %c0_76 = arith.constant 0 : index
    %c0_77 = arith.constant 0 : index
    %99 = vector.load %arg13[%c0_76, %c0_77] : memref<8x128xf32, #tpu.memory_space<vmem>>, vector<8x128xf32>
    tpu.vector_store %arg13[%c0_76, %c0_77], %98 {strides = array<i32>} : memref<8x128xf32, #tpu.memory_space<vmem>>, vector<8x128xf32>,
    %c1_78 = arith.constant 1 : index
    %c0_79 = arith.constant 0 : index
    %c0_80 = arith.constant 0 : index
    %100 = vector.load %arg11[%c1_78, %c0_79, %c0_80] : memref<6x8x512xf32, #tpu.memory_space<vmem>>, vector<1x8x512xf32>
    %101 = vector.shape_cast %100 : vector<1x8x512xf32> to vector<8x512xf32>
    %c0_81 = arith.constant 0 : index
    %c0_82 = arith.constant 0 : index
    %102 = vector.load %arg12[%c0_81, %c0_82] : memref<8x128xf32, #tpu.memory_space<vmem>>, vector<8x128xf32>
    %c0_83 = arith.constant 0 : index
    %c0_84 = arith.constant 0 : index
    %103 = vector.load %arg4[%c0_83, %c0_84] : memref<128x512xf32, #tpu.memory_space<vmem>>, vector<128x512xf32>
    %cst_85 = arith.constant dense<0.000000e+00> : vector<8x512xf32>
    %104 = tpu.matmul %102, %103, %cst_85 {dimension_numbers = #tpu.dot_dimension_numbers<[1], [0], [0], [1], [0, 0, 1, 1], [], []>} : vector<8x128xf32>, vector<128x512xf32>, vector<8x512xf32> -> vector<8x512xf32>
    %105 = arith.addf %101, %104 : vector<8x512xf32>
    %106 = vector.extract_strided_slice %105 {offsets = [0, 0], sizes = [8, 128], strides = [1, 1]} : vector<8x512xf32> to vector<8x128xf32>
    %107 = arith.negf %106 : vector<8x128xf32>
    %108 = math.exp %107 : vector<8x128xf32>
    %cst_86 = arith.constant 1.000000e+00 : f32
    %109 = vector.broadcast %cst_86 : f32 to vector<8x128xf32>
    %110 = arith.addf %109, %108 : vector<8x128xf32>
    %111 = arith.divf %109, %110 : vector<8x128xf32>
    %112 = vector.extract_strided_slice %105 {offsets = [0, 128], sizes = [8, 128], strides = [1, 1]} : vector<8x512xf32> to vector<8x128xf32>
    %113 = arith.negf %112 : vector<8x128xf32>
    %114 = math.exp %113 : vector<8x128xf32>
    %cst_87 = arith.constant 1.000000e+00 : f32
    %115 = vector.broadcast %cst_87 : f32 to vector<8x128xf32>
    %116 = arith.addf %115, %114 : vector<8x128xf32>
    %117 = arith.divf %115, %116 : vector<8x128xf32>
    %118 = vector.extract_strided_slice %105 {offsets = [0, 256], sizes = [8, 128], strides = [1, 1]} : vector<8x512xf32> to vector<8x128xf32>
    %119 = math.tanh %118 : vector<8x128xf32>
    %120 = vector.extract_strided_slice %105 {offsets = [0, 384], sizes = [8, 128], strides = [1, 1]} : vector<8x512xf32> to vector<8x128xf32>
    %121 = arith.negf %120 : vector<8x128xf32>
    %122 = math.exp %121 : vector<8x128xf32>
    %cst_88 = arith.constant 1.000000e+00 : f32
    %123 = vector.broadcast %cst_88 : f32 to vector<8x128xf32>
    %124 = arith.addf %123, %122 : vector<8x128xf32>
    %125 = arith.divf %123, %124 : vector<8x128xf32>
    %c0_89 = arith.constant 0 : index
    %c0_90 = arith.constant 0 : index
    %126 = vector.load %arg13[%c0_89, %c0_90] : memref<8x128xf32, #tpu.memory_space<vmem>>, vector<8x128xf32>
    %127 = arith.mulf %117, %126 : vector<8x128xf32>
    %128 = arith.mulf %111, %119 : vector<8x128xf32>
    %129 = arith.addf %127, %128 : vector<8x128xf32>
    %130 = math.tanh %129 : vector<8x128xf32>
    %131 = arith.mulf %125, %130 : vector<8x128xf32>
    %c1_i32 = arith.constant 1 : i32
    %132 = vector.broadcast %c1_i32 : i32 to vector<8x1xi32>
    %133 = arith.cmpi sgt, %55, %132 : vector<8x1xi32>
    %c0_91 = arith.constant 0 : index
    %c0_92 = arith.constant 0 : index
    %134 = vector.load %arg12[%c0_91, %c0_92] : memref<8x128xf32, #tpu.memory_space<vmem>>, vector<8x128xf32>
    %135 = vector.shape_cast %133 : vector<8x1xi1> to vector<8x1xi1>
    %136 = vector.broadcast %135 : vector<8x1xi1> to vector<8x128xi1>
    %137 = arith.select %136, %131, %134 : vector<8x128xi1>, vector<8x128xf32>
    %c0_93 = arith.constant 0 : index
    %c0_94 = arith.constant 0 : index
    %138 = vector.load %arg12[%c0_93, %c0_94] : memref<8x128xf32, #tpu.memory_space<vmem>>, vector<8x128xf32>
    tpu.vector_store %arg12[%c0_93, %c0_94], %137 {strides = array<i32>} : memref<8x128xf32, #tpu.memory_space<vmem>>, vector<8x128xf32>,
    %c0_95 = arith.constant 0 : index
    %c0_96 = arith.constant 0 : index
    %139 = vector.load %arg13[%c0_95, %c0_96] : memref<8x128xf32, #tpu.memory_space<vmem>>, vector<8x128xf32>
    %140 = vector.shape_cast %133 : vector<8x1xi1> to vector<8x1xi1>
    %141 = vector.broadcast %140 : vector<8x1xi1> to vector<8x128xi1>
    %142 = arith.select %141, %129, %139 : vector<8x128xi1>, vector<8x128xf32>
    %c0_97 = arith.constant 0 : index
    %c0_98 = arith.constant 0 : index
    %143 = vector.load %arg13[%c0_97, %c0_98] : memref<8x128xf32, #tpu.memory_space<vmem>>, vector<8x128xf32>
    tpu.vector_store %arg13[%c0_97, %c0_98], %142 {strides = array<i32>} : memref<8x128xf32, #tpu.memory_space<vmem>>, vector<8x128xf32>,
    %c2_99 = arith.constant 2 : index
    %c0_100 = arith.constant 0 : index
    %c0_101 = arith.constant 0 : index
    %144 = vector.load %arg11[%c2_99, %c0_100, %c0_101] : memref<6x8x512xf32, #tpu.memory_space<vmem>>, vector<1x8x512xf32>
    %145 = vector.shape_cast %144 : vector<1x8x512xf32> to vector<8x512xf32>
    %c0_102 = arith.constant 0 : index
    %c0_103 = arith.constant 0 : index
    %146 = vector.load %arg12[%c0_102, %c0_103] : memref<8x128xf32, #tpu.memory_space<vmem>>, vector<8x128xf32>
    %c0_104 = arith.constant 0 : index
    %c0_105 = arith.constant 0 : index
    %147 = vector.load %arg4[%c0_104, %c0_105] : memref<128x512xf32, #tpu.memory_space<vmem>>, vector<128x512xf32>
    %cst_106 = arith.constant dense<0.000000e+00> : vector<8x512xf32>
    %148 = tpu.matmul %146, %147, %cst_106 {dimension_numbers = #tpu.dot_dimension_numbers<[1], [0], [0], [1], [0, 0, 1, 1], [], []>} : vector<8x128xf32>, vector<128x512xf32>, vector<8x512xf32> -> vector<8x512xf32>
    %149 = arith.addf %145, %148 : vector<8x512xf32>
    %150 = vector.extract_strided_slice %149 {offsets = [0, 0], sizes = [8, 128], strides = [1, 1]} : vector<8x512xf32> to vector<8x128xf32>
    %151 = arith.negf %150 : vector<8x128xf32>
    %152 = math.exp %151 : vector<8x128xf32>
    %cst_107 = arith.constant 1.000000e+00 : f32
    %153 = vector.broadcast %cst_107 : f32 to vector<8x128xf32>
    %154 = arith.addf %153, %152 : vector<8x128xf32>
    %155 = arith.divf %153, %154 : vector<8x128xf32>
    %156 = vector.extract_strided_slice %149 {offsets = [0, 128], sizes = [8, 128], strides = [1, 1]} : vector<8x512xf32> to vector<8x128xf32>
    %157 = arith.negf %156 : vector<8x128xf32>
    %158 = math.exp %157 : vector<8x128xf32>
    %cst_108 = arith.constant 1.000000e+00 : f32
    %159 = vector.broadcast %cst_108 : f32 to vector<8x128xf32>
    %160 = arith.addf %159, %158 : vector<8x128xf32>
    %161 = arith.divf %159, %160 : vector<8x128xf32>
    %162 = vector.extract_strided_slice %149 {offsets = [0, 256], sizes = [8, 128], strides = [1, 1]} : vector<8x512xf32> to vector<8x128xf32>
    %163 = math.tanh %162 : vector<8x128xf32>
    %164 = vector.extract_strided_slice %149 {offsets = [0, 384], sizes = [8, 128], strides = [1, 1]} : vector<8x512xf32> to vector<8x128xf32>
    %165 = arith.negf %164 : vector<8x128xf32>
    %166 = math.exp %165 : vector<8x128xf32>
    %cst_109 = arith.constant 1.000000e+00 : f32
    %167 = vector.broadcast %cst_109 : f32 to vector<8x128xf32>
    %168 = arith.addf %167, %166 : vector<8x128xf32>
    %169 = arith.divf %167, %168 : vector<8x128xf32>
    %c0_110 = arith.constant 0 : index
    %c0_111 = arith.constant 0 : index
    %170 = vector.load %arg13[%c0_110, %c0_111] : memref<8x128xf32, #tpu.memory_space<vmem>>, vector<8x128xf32>
    %171 = arith.mulf %161, %170 : vector<8x128xf32>
    %172 = arith.mulf %155, %163 : vector<8x128xf32>
    %173 = arith.addf %171, %172 : vector<8x128xf32>
    %174 = math.tanh %173 : vector<8x128xf32>
    %175 = arith.mulf %169, %174 : vector<8x128xf32>
    %c2_i32 = arith.constant 2 : i32
    %176 = vector.broadcast %c2_i32 : i32 to vector<8x1xi32>
    %177 = arith.cmpi sgt, %55, %176 : vector<8x1xi32>
    %c0_112 = arith.constant 0 : index
    %c0_113 = arith.constant 0 : index
    %178 = vector.load %arg12[%c0_112, %c0_113] : memref<8x128xf32, #tpu.memory_space<vmem>>, vector<8x128xf32>
    %179 = vector.shape_cast %177 : vector<8x1xi1> to vector<8x1xi1>
    %180 = vector.broadcast %179 : vector<8x1xi1> to vector<8x128xi1>
    %181 = arith.select %180, %175, %178 : vector<8x128xi1>, vector<8x128xf32>
    %c0_114 = arith.constant 0 : index
    %c0_115 = arith.constant 0 : index
    %182 = vector.load %arg12[%c0_114, %c0_115] : memref<8x128xf32, #tpu.memory_space<vmem>>, vector<8x128xf32>
    tpu.vector_store %arg12[%c0_114, %c0_115], %181 {strides = array<i32>} : memref<8x128xf32, #tpu.memory_space<vmem>>, vector<8x128xf32>,
    %c0_116 = arith.constant 0 : index
    %c0_117 = arith.constant 0 : index
    %183 = vector.load %arg13[%c0_116, %c0_117] : memref<8x128xf32, #tpu.memory_space<vmem>>, vector<8x128xf32>
    %184 = vector.shape_cast %177 : vector<8x1xi1> to vector<8x1xi1>
    %185 = vector.broadcast %184 : vector<8x1xi1> to vector<8x128xi1>
    %186 = arith.select %185, %173, %183 : vector<8x128xi1>, vector<8x128xf32>
    %c0_118 = arith.constant 0 : index
    %c0_119 = arith.constant 0 : index
    %187 = vector.load %arg13[%c0_118, %c0_119] : memref<8x128xf32, #tpu.memory_space<vmem>>, vector<8x128xf32>
    tpu.vector_store %arg13[%c0_118, %c0_119], %186 {strides = array<i32>} : memref<8x128xf32, #tpu.memory_space<vmem>>, vector<8x128xf32>,
    %c3_120 = arith.constant 3 : index
    %c0_121 = arith.constant 0 : index
    %c0_122 = arith.constant 0 : index
    %188 = vector.load %arg11[%c3_120, %c0_121, %c0_122] : memref<6x8x512xf32, #tpu.memory_space<vmem>>, vector<1x8x512xf32>
    %189 = vector.shape_cast %188 : vector<1x8x512xf32> to vector<8x512xf32>
    %c0_123 = arith.constant 0 : index
    %c0_124 = arith.constant 0 : index
    %190 = vector.load %arg12[%c0_123, %c0_124] : memref<8x128xf32, #tpu.memory_space<vmem>>, vector<8x128xf32>
    %c0_125 = arith.constant 0 : index
    %c0_126 = arith.constant 0 : index
    %191 = vector.load %arg4[%c0_125, %c0_126] : memref<128x512xf32, #tpu.memory_space<vmem>>, vector<128x512xf32>
    %cst_127 = arith.constant dense<0.000000e+00> : vector<8x512xf32>
    %192 = tpu.matmul %190, %191, %cst_127 {dimension_numbers = #tpu.dot_dimension_numbers<[1], [0], [0], [1], [0, 0, 1, 1], [], []>} : vector<8x128xf32>, vector<128x512xf32>, vector<8x512xf32> -> vector<8x512xf32>
    %193 = arith.addf %189, %192 : vector<8x512xf32>
    %194 = vector.extract_strided_slice %193 {offsets = [0, 0], sizes = [8, 128], strides = [1, 1]} : vector<8x512xf32> to vector<8x128xf32>
    %195 = arith.negf %194 : vector<8x128xf32>
    %196 = math.exp %195 : vector<8x128xf32>
    %cst_128 = arith.constant 1.000000e+00 : f32
    %197 = vector.broadcast %cst_128 : f32 to vector<8x128xf32>
    %198 = arith.addf %197, %196 : vector<8x128xf32>
    %199 = arith.divf %197, %198 : vector<8x128xf32>
    %200 = vector.extract_strided_slice %193 {offsets = [0, 128], sizes = [8, 128], strides = [1, 1]} : vector<8x512xf32> to vector<8x128xf32>
    %201 = arith.negf %200 : vector<8x128xf32>
    %202 = math.exp %201 : vector<8x128xf32>
    %cst_129 = arith.constant 1.000000e+00 : f32
    %203 = vector.broadcast %cst_129 : f32 to vector<8x128xf32>
    %204 = arith.addf %203, %202 : vector<8x128xf32>
    %205 = arith.divf %203, %204 : vector<8x128xf32>
    %206 = vector.extract_strided_slice %193 {offsets = [0, 256], sizes = [8, 128], strides = [1, 1]} : vector<8x512xf32> to vector<8x128xf32>
    %207 = math.tanh %206 : vector<8x128xf32>
    %208 = vector.extract_strided_slice %193 {offsets = [0, 384], sizes = [8, 128], strides = [1, 1]} : vector<8x512xf32> to vector<8x128xf32>
    %209 = arith.negf %208 : vector<8x128xf32>
    %210 = math.exp %209 : vector<8x128xf32>
    %cst_130 = arith.constant 1.000000e+00 : f32
    %211 = vector.broadcast %cst_130 : f32 to vector<8x128xf32>
    %212 = arith.addf %211, %210 : vector<8x128xf32>
    %213 = arith.divf %211, %212 : vector<8x128xf32>
    %c0_131 = arith.constant 0 : index
    %c0_132 = arith.constant 0 : index
    %214 = vector.load %arg13[%c0_131, %c0_132] : memref<8x128xf32, #tpu.memory_space<vmem>>, vector<8x128xf32>
    %215 = arith.mulf %205, %214 : vector<8x128xf32>
    %216 = arith.mulf %199, %207 : vector<8x128xf32>
    %217 = arith.addf %215, %216 : vector<8x128xf32>
    %218 = math.tanh %217 : vector<8x128xf32>
    %219 = arith.mulf %213, %218 : vector<8x128xf32>
    %c3_i32 = arith.constant 3 : i32
    %220 = vector.broadcast %c3_i32 : i32 to vector<8x1xi32>
    %221 = arith.cmpi sgt, %55, %220 : vector<8x1xi32>
    %c0_133 = arith.constant 0 : index
    %c0_134 = arith.constant 0 : index
    %222 = vector.load %arg12[%c0_133, %c0_134] : memref<8x128xf32, #tpu.memory_space<vmem>>, vector<8x128xf32>
    %223 = vector.shape_cast %221 : vector<8x1xi1> to vector<8x1xi1>
    %224 = vector.broadcast %223 : vector<8x1xi1> to vector<8x128xi1>
    %225 = arith.select %224, %219, %222 : vector<8x128xi1>, vector<8x128xf32>
    %c0_135 = arith.constant 0 : index
    %c0_136 = arith.constant 0 : index
    %226 = vector.load %arg12[%c0_135, %c0_136] : memref<8x128xf32, #tpu.memory_space<vmem>>, vector<8x128xf32>
    tpu.vector_store %arg12[%c0_135, %c0_136], %225 {strides = array<i32>} : memref<8x128xf32, #tpu.memory_space<vmem>>, vector<8x128xf32>,
    %c0_137 = arith.constant 0 : index
    %c0_138 = arith.constant 0 : index
    %227 = vector.load %arg13[%c0_137, %c0_138] : memref<8x128xf32, #tpu.memory_space<vmem>>, vector<8x128xf32>
    %228 = vector.shape_cast %221 : vector<8x1xi1> to vector<8x1xi1>
    %229 = vector.broadcast %228 : vector<8x1xi1> to vector<8x128xi1>
    %230 = arith.select %229, %217, %227 : vector<8x128xi1>, vector<8x128xf32>
    %c0_139 = arith.constant 0 : index
    %c0_140 = arith.constant 0 : index
    %231 = vector.load %arg13[%c0_139, %c0_140] : memref<8x128xf32, #tpu.memory_space<vmem>>, vector<8x128xf32>
    tpu.vector_store %arg13[%c0_139, %c0_140], %230 {strides = array<i32>} : memref<8x128xf32, #tpu.memory_space<vmem>>, vector<8x128xf32>,
    %c4_141 = arith.constant 4 : index
    %c0_142 = arith.constant 0 : index
    %c0_143 = arith.constant 0 : index
    %232 = vector.load %arg11[%c4_141, %c0_142, %c0_143] : memref<6x8x512xf32, #tpu.memory_space<vmem>>, vector<1x8x512xf32>
    %233 = vector.shape_cast %232 : vector<1x8x512xf32> to vector<8x512xf32>
    %c0_144 = arith.constant 0 : index
    %c0_145 = arith.constant 0 : index
    %234 = vector.load %arg12[%c0_144, %c0_145] : memref<8x128xf32, #tpu.memory_space<vmem>>, vector<8x128xf32>
    %c0_146 = arith.constant 0 : index
    %c0_147 = arith.constant 0 : index
    %235 = vector.load %arg4[%c0_146, %c0_147] : memref<128x512xf32, #tpu.memory_space<vmem>>, vector<128x512xf32>
    %cst_148 = arith.constant dense<0.000000e+00> : vector<8x512xf32>
    %236 = tpu.matmul %234, %235, %cst_148 {dimension_numbers = #tpu.dot_dimension_numbers<[1], [0], [0], [1], [0, 0, 1, 1], [], []>} : vector<8x128xf32>, vector<128x512xf32>, vector<8x512xf32> -> vector<8x512xf32>
    %237 = arith.addf %233, %236 : vector<8x512xf32>
    %238 = vector.extract_strided_slice %237 {offsets = [0, 0], sizes = [8, 128], strides = [1, 1]} : vector<8x512xf32> to vector<8x128xf32>
    %239 = arith.negf %238 : vector<8x128xf32>
    %240 = math.exp %239 : vector<8x128xf32>
    %cst_149 = arith.constant 1.000000e+00 : f32
    %241 = vector.broadcast %cst_149 : f32 to vector<8x128xf32>
    %242 = arith.addf %241, %240 : vector<8x128xf32>
    %243 = arith.divf %241, %242 : vector<8x128xf32>
    %244 = vector.extract_strided_slice %237 {offsets = [0, 128], sizes = [8, 128], strides = [1, 1]} : vector<8x512xf32> to vector<8x128xf32>
    %245 = arith.negf %244 : vector<8x128xf32>
    %246 = math.exp %245 : vector<8x128xf32>
    %cst_150 = arith.constant 1.000000e+00 : f32
    %247 = vector.broadcast %cst_150 : f32 to vector<8x128xf32>
    %248 = arith.addf %247, %246 : vector<8x128xf32>
    %249 = arith.divf %247, %248 : vector<8x128xf32>
    %250 = vector.extract_strided_slice %237 {offsets = [0, 256], sizes = [8, 128], strides = [1, 1]} : vector<8x512xf32> to vector<8x128xf32>
    %251 = math.tanh %250 : vector<8x128xf32>
    %252 = vector.extract_strided_slice %237 {offsets = [0, 384], sizes = [8, 128], strides = [1, 1]} : vector<8x512xf32> to vector<8x128xf32>
    %253 = arith.negf %252 : vector<8x128xf32>
    %254 = math.exp %253 : vector<8x128xf32>
    %cst_151 = arith.constant 1.000000e+00 : f32
    %255 = vector.broadcast %cst_151 : f32 to vector<8x128xf32>
    %256 = arith.addf %255, %254 : vector<8x128xf32>
    %257 = arith.divf %255, %256 : vector<8x128xf32>
    %c0_152 = arith.constant 0 : index
    %c0_153 = arith.constant 0 : index
    %258 = vector.load %arg13[%c0_152, %c0_153] : memref<8x128xf32, #tpu.memory_space<vmem>>, vector<8x128xf32>
    %259 = arith.mulf %249, %258 : vector<8x128xf32>
    %260 = arith.mulf %243, %251 : vector<8x128xf32>
    %261 = arith.addf %259, %260 : vector<8x128xf32>
    %262 = math.tanh %261 : vector<8x128xf32>
    %263 = arith.mulf %257, %262 : vector<8x128xf32>
    %c4_i32 = arith.constant 4 : i32
    %264 = vector.broadcast %c4_i32 : i32 to vector<8x1xi32>
    %265 = arith.cmpi sgt, %55, %264 : vector<8x1xi32>
    %c0_154 = arith.constant 0 : index
    %c0_155 = arith.constant 0 : index
    %266 = vector.load %arg12[%c0_154, %c0_155] : memref<8x128xf32, #tpu.memory_space<vmem>>, vector<8x128xf32>
    %267 = vector.shape_cast %265 : vector<8x1xi1> to vector<8x1xi1>
    %268 = vector.broadcast %267 : vector<8x1xi1> to vector<8x128xi1>
    %269 = arith.select %268, %263, %266 : vector<8x128xi1>, vector<8x128xf32>
    %c0_156 = arith.constant 0 : index
    %c0_157 = arith.constant 0 : index
    %270 = vector.load %arg12[%c0_156, %c0_157] : memref<8x128xf32, #tpu.memory_space<vmem>>, vector<8x128xf32>
    tpu.vector_store %arg12[%c0_156, %c0_157], %269 {strides = array<i32>} : memref<8x128xf32, #tpu.memory_space<vmem>>, vector<8x128xf32>,
    %c0_158 = arith.constant 0 : index
    %c0_159 = arith.constant 0 : index
    %271 = vector.load %arg13[%c0_158, %c0_159] : memref<8x128xf32, #tpu.memory_space<vmem>>, vector<8x128xf32>
    %272 = vector.shape_cast %265 : vector<8x1xi1> to vector<8x1xi1>
    %273 = vector.broadcast %272 : vector<8x1xi1> to vector<8x128xi1>
    %274 = arith.select %273, %261, %271 : vector<8x128xi1>, vector<8x128xf32>
    %c0_160 = arith.constant 0 : index
    %c0_161 = arith.constant 0 : index
    %275 = vector.load %arg13[%c0_160, %c0_161] : memref<8x128xf32, #tpu.memory_space<vmem>>, vector<8x128xf32>
    tpu.vector_store %arg13[%c0_160, %c0_161], %274 {strides = array<i32>} : memref<8x128xf32, #tpu.memory_space<vmem>>, vector<8x128xf32>,
    %c5_162 = arith.constant 5 : index
    %c0_163 = arith.constant 0 : index
    %c0_164 = arith.constant 0 : index
    %276 = vector.load %arg11[%c5_162, %c0_163, %c0_164] : memref<6x8x512xf32, #tpu.memory_space<vmem>>, vector<1x8x512xf32>
    %277 = vector.shape_cast %276 : vector<1x8x512xf32> to vector<8x512xf32>
    %c0_165 = arith.constant 0 : index
    %c0_166 = arith.constant 0 : index
    %278 = vector.load %arg12[%c0_165, %c0_166] : memref<8x128xf32, #tpu.memory_space<vmem>>, vector<8x128xf32>
    %c0_167 = arith.constant 0 : index
    %c0_168 = arith.constant 0 : index
    %279 = vector.load %arg4[%c0_167, %c0_168] : memref<128x512xf32, #tpu.memory_space<vmem>>, vector<128x512xf32>
    %cst_169 = arith.constant dense<0.000000e+00> : vector<8x512xf32>
    %280 = tpu.matmul %278, %279, %cst_169 {dimension_numbers = #tpu.dot_dimension_numbers<[1], [0], [0], [1], [0, 0, 1, 1], [], []>} : vector<8x128xf32>, vector<128x512xf32>, vector<8x512xf32> -> vector<8x512xf32>
    %281 = arith.addf %277, %280 : vector<8x512xf32>
    %282 = vector.extract_strided_slice %281 {offsets = [0, 0], sizes = [8, 128], strides = [1, 1]} : vector<8x512xf32> to vector<8x128xf32>
    %283 = arith.negf %282 : vector<8x128xf32>
    %284 = math.exp %283 : vector<8x128xf32>
    %cst_170 = arith.constant 1.000000e+00 : f32
    %285 = vector.broadcast %cst_170 : f32 to vector<8x128xf32>
    %286 = arith.addf %285, %284 : vector<8x128xf32>
    %287 = arith.divf %285, %286 : vector<8x128xf32>
    %288 = vector.extract_strided_slice %281 {offsets = [0, 128], sizes = [8, 128], strides = [1, 1]} : vector<8x512xf32> to vector<8x128xf32>
    %289 = arith.negf %288 : vector<8x128xf32>
    %290 = math.exp %289 : vector<8x128xf32>
    %cst_171 = arith.constant 1.000000e+00 : f32
    %291 = vector.broadcast %cst_171 : f32 to vector<8x128xf32>
    %292 = arith.addf %291, %290 : vector<8x128xf32>
    %293 = arith.divf %291, %292 : vector<8x128xf32>
    %294 = vector.extract_strided_slice %281 {offsets = [0, 256], sizes = [8, 128], strides = [1, 1]} : vector<8x512xf32> to vector<8x128xf32>
    %295 = math.tanh %294 : vector<8x128xf32>
    %296 = vector.extract_strided_slice %281 {offsets = [0, 384], sizes = [8, 128], strides = [1, 1]} : vector<8x512xf32> to vector<8x128xf32>
    %297 = arith.negf %296 : vector<8x128xf32>
    %298 = math.exp %297 : vector<8x128xf32>
    %cst_172 = arith.constant 1.000000e+00 : f32
    %299 = vector.broadcast %cst_172 : f32 to vector<8x128xf32>
    %300 = arith.addf %299, %298 : vector<8x128xf32>
    %301 = arith.divf %299, %300 : vector<8x128xf32>
    %c0_173 = arith.constant 0 : index
    %c0_174 = arith.constant 0 : index
    %302 = vector.load %arg13[%c0_173, %c0_174] : memref<8x128xf32, #tpu.memory_space<vmem>>, vector<8x128xf32>
    %303 = arith.mulf %293, %302 : vector<8x128xf32>
    %304 = arith.mulf %287, %295 : vector<8x128xf32>
    %305 = arith.addf %303, %304 : vector<8x128xf32>
    %306 = math.tanh %305 : vector<8x128xf32>
    %307 = arith.mulf %301, %306 : vector<8x128xf32>
    %c5_i32 = arith.constant 5 : i32
    %308 = vector.broadcast %c5_i32 : i32 to vector<8x1xi32>
    %309 = arith.cmpi sgt, %55, %308 : vector<8x1xi32>
    %c0_175 = arith.constant 0 : index
    %c0_176 = arith.constant 0 : index
    %310 = vector.load %arg12[%c0_175, %c0_176] : memref<8x128xf32, #tpu.memory_space<vmem>>, vector<8x128xf32>
    %311 = vector.shape_cast %309 : vector<8x1xi1> to vector<8x1xi1>
    %312 = vector.broadcast %311 : vector<8x1xi1> to vector<8x128xi1>
    %313 = arith.select %312, %307, %310 : vector<8x128xi1>, vector<8x128xf32>
    %c0_177 = arith.constant 0 : index
    %c0_178 = arith.constant 0 : index
    %314 = vector.load %arg12[%c0_177, %c0_178] : memref<8x128xf32, #tpu.memory_space<vmem>>, vector<8x128xf32>
    tpu.vector_store %arg12[%c0_177, %c0_178], %313 {strides = array<i32>} : memref<8x128xf32, #tpu.memory_space<vmem>>, vector<8x128xf32>,
    %c0_179 = arith.constant 0 : index
    %c0_180 = arith.constant 0 : index
    %315 = vector.load %arg13[%c0_179, %c0_180] : memref<8x128xf32, #tpu.memory_space<vmem>>, vector<8x128xf32>
    %316 = vector.shape_cast %309 : vector<8x1xi1> to vector<8x1xi1>
    %317 = vector.broadcast %316 : vector<8x1xi1> to vector<8x128xi1>
    %318 = arith.select %317, %305, %315 : vector<8x128xi1>, vector<8x128xf32>
    %c0_181 = arith.constant 0 : index
    %c0_182 = arith.constant 0 : index
    %319 = vector.load %arg13[%c0_181, %c0_182] : memref<8x128xf32, #tpu.memory_space<vmem>>, vector<8x128xf32>
    tpu.vector_store %arg13[%c0_181, %c0_182], %318 {strides = array<i32>} : memref<8x128xf32, #tpu.memory_space<vmem>>, vector<8x128xf32>,
    %c0_183 = arith.constant 0 : index
    %c0_184 = arith.constant 0 : index
    %320 = vector.load %arg12[%c0_183, %c0_184] : memref<8x128xf32, #tpu.memory_space<vmem>>, vector<8x128xf32>
    %c0_185 = arith.constant 0 : index
    %c0_186 = arith.constant 0 : index
    %321 = vector.load %arg6[%c0_185, %c0_186] : memref<128x32xf32, #tpu.memory_space<vmem>>, vector<128x32xf32>
    %cst_187 = arith.constant dense<0.000000e+00> : vector<8x32xf32>
    %322 = tpu.matmul %320, %321, %cst_187 {dimension_numbers = #tpu.dot_dimension_numbers<[1], [0], [0], [1], [0, 0, 1, 1], [], []>} : vector<8x128xf32>, vector<128x32xf32>, vector<8x32xf32> -> vector<8x32xf32>
    %c0_188 = arith.constant 0 : index
    %c0_189 = arith.constant 0 : index
    %323 = vector.load %arg7[%c0_188, %c0_189] : memref<1x32xf32, #tpu.memory_space<vmem>>, vector<1x32xf32>
    %324 = vector.broadcast %323 : vector<1x32xf32> to vector<8x32xf32>
    %325 = arith.addf %322, %324 : vector<8x32xf32>
    %cst_190 = arith.constant 0.000000e+00 : f32
    %326 = vector.broadcast %cst_190 : f32 to vector<8x32xf32>
    %327 = arith.maximumf %325, %326 : vector<8x32xf32>
    %c0_191 = arith.constant 0 : index
    %c0_192 = arith.constant 0 : index
    %328 = vector.load %arg8[%c0_191, %c0_192] : memref<32x128xf32, #tpu.memory_space<vmem>>, vector<32x128xf32>
    %cst_193 = arith.constant dense<0.000000e+00> : vector<8x128xf32>
    %329 = tpu.matmul %327, %328, %cst_193 {dimension_numbers = #tpu.dot_dimension_numbers<[1], [0], [0], [1], [0, 0, 1, 1], [], []>} : vector<8x32xf32>, vector<32x128xf32>, vector<8x128xf32> -> vector<8x128xf32>
    %c0_194 = arith.constant 0 : index
    %c0_195 = arith.constant 0 : index
    %330 = vector.load %arg9[%c0_194, %c0_195] : memref<1x128xf32, #tpu.memory_space<vmem>>, vector<1x128xf32>
    %331 = vector.broadcast %330 : vector<1x128xf32> to vector<8x128xf32>
    %332 = arith.addf %329, %331 : vector<8x128xf32>
    %c0_196 = arith.constant 0 : index
    %c0_197 = arith.constant 0 : index
    %333 = vector.load %arg10[%c0_196, %c0_197] : memref<8x128xf32, #tpu.memory_space<vmem>>, vector<8x128xf32>
    tpu.vector_store %arg10[%c0_196, %c0_197], %332 {strides = array<i32>} : memref<8x128xf32, #tpu.memory_space<vmem>>, vector<8x128xf32>,
    return
  }
  func.func @transform_0(%arg0: i32) -> (i32, i32, i32) {
    %c0_i32 = arith.constant 0 : i32
    %c0_i32_0 = arith.constant 0 : i32
    %c0_i32_1 = arith.constant 0 : i32
    return %c0_i32, %arg0, %c0_i32_0 : i32, i32, i32
  }
  func.func @transform_1(%arg0: i32) -> (i32, i32) {
    %c0_i32 = arith.constant 0 : i32
    %c0_i32_0 = arith.constant 0 : i32
    return %arg0, %c0_i32 : i32, i32
  }
  func.func @transform_2(%arg0: i32) -> (i32, i32) {
    %c0_i32 = arith.constant 0 : i32
    %c0_i32_0 = arith.constant 0 : i32
    %c0_i32_1 = arith.constant 0 : i32
    return %c0_i32, %c0_i32_0 : i32, i32
  }
  func.func @transform_3(%arg0: i32) -> (i32, i32) {
    %c0_i32 = arith.constant 0 : i32
    %c0_i32_0 = arith.constant 0 : i32
    %c0_i32_1 = arith.constant 0 : i32
    return %c0_i32, %c0_i32_0 : i32, i32
  }
  func.func @transform_4(%arg0: i32) -> (i32, i32) {
    %c0_i32 = arith.constant 0 : i32
    %c0_i32_0 = arith.constant 0 : i32
    %c0_i32_1 = arith.constant 0 : i32
    return %c0_i32, %c0_i32_0 : i32, i32
  }
  func.func @transform_5(%arg0: i32) -> (i32, i32) {
    %c0_i32 = arith.constant 0 : i32
    %c0_i32_0 = arith.constant 0 : i32
    %c0_i32_1 = arith.constant 0 : i32
    return %c0_i32, %c0_i32_0 : i32, i32
  }
  func.func @transform_6(%arg0: i32) -> (i32, i32) {
    %c0_i32 = arith.constant 0 : i32
    %c0_i32_0 = arith.constant 0 : i32
    %c0_i32_1 = arith.constant 0 : i32
    return %c0_i32, %c0_i32_0 : i32, i32
  }
  func.func @transform_7(%arg0: i32) -> (i32, i32) {
    %c0_i32 = arith.constant 0 : i32
    %c0_i32_0 = arith.constant 0 : i32
    %c0_i32_1 = arith.constant 0 : i32
    return %c0_i32, %c0_i32_0 : i32, i32
  }
  func.func @transform_8(%arg0: i32) -> (i32, i32) {
    %c0_i32 = arith.constant 0 : i32
    %c0_i32_0 = arith.constant 0 : i32
    %c0_i32_1 = arith.constant 0 : i32
    return %c0_i32, %c0_i32_0 : i32, i32
  }
  func.func @transform_9(%arg0: i32) -> (i32, i32) {
    %c0_i32 = arith.constant 0 : i32
    %c0_i32_0 = arith.constant 0 : i32
    return %arg0, %c0_i32 : i32, i32
  }
}

</mosaic_0001>

<llo_original>
// kernel: kprn_forward.1
$region0: #{kprn_forward.1}
  #allocation0 [shape = 'u32[]', space=smem, size = 0x4, offset = 0x4, fixed_abs, tag = 'smem constant byte address 0x4 - core index']
  #allocation1 [shape = 'u32[72,128]{1,0:T(1,128)}', space=vmem, size = 0x9000, scoped, tag = 'internal scratch']
  #allocation2 [shape = 'f32[6,8,512]{2,1,0:T(8,128)}', space=vmem, size = 0x18000, scoped, tag = 'scratch operand']
  #allocation3 [shape = 'f32[8,128]{1,0:T(8,128)}', space=vmem, size = 0x1000, scoped, tag = 'scratch operand']
  #allocation4 [shape = 'f32[8,128]{1,0:T(8,128)}', space=vmem, size = 0x1000, scoped, tag = 'scratch operand']
  %s0 = inlined_call_operand.vmem [shape: f32[6,8,48], index: 0, kind: input, shape index: {}]
  %s1 = inlined_call_operand.vmem [shape: s32[8,1], index: 1, kind: input, shape index: {}]
  %s2 = inlined_call_operand.vmem [shape: f32[48,512], index: 2, kind: input, shape index: {}]
  %s3 = inlined_call_operand.vmem [shape: f32[128,512], index: 3, kind: input, shape index: {}]
  %s4 = inlined_call_operand.vmem [shape: f32[1,512], index: 4, kind: input, shape index: {}]
  %s5 = inlined_call_operand.vmem [shape: f32[128,32], index: 5, kind: input, shape index: {}]
  %s6 = inlined_call_operand.vmem [shape: f32[1,32], index: 6, kind: input, shape index: {}]
  %s7 = inlined_call_operand.vmem [shape: f32[32,128], index: 7, kind: input, shape index: {}]
  %s8 = inlined_call_operand.vmem [shape: f32[1,128], index: 8, kind: input, shape index: {}]
  %s9 = inlined_call_operand.vmem [shape: f32[8,128], index: 9, kind: output, shape index: {}]
  %s10 = sld [smem:[#allocation0]]
  $region46: #{kprn_forward.1} parent=0
    _
  %s12 = ssub.s32 1, %s10
  %s13 = scalar_select 0, %s12, %s10
  // Predicated region
  $region2: #{kprn_forward.1} parent=0 // pred_check
    _
  $region3: #{kprn_forward.1} parent=0 // pred_check_branch
    %15 = sbr.rel (0) target = $region5
  $region4: #{kprn_forward.1} parent=0 // pred_region
    _
  $region5: #{kprn_forward.1} parent=0 // pred_fallthru
    _
  // Predicated region
  $region6: #{kprn_forward.1} parent=0 // pred_check
    _
  $region7: #{kprn_forward.1} parent=0 // pred_check_branch
    %17 = sbr.rel (0) target = $region9
  $region8: #{kprn_forward.1} parent=0 // pred_region
    _
  $region9: #{kprn_forward.1} parent=0 // pred_fallthru
    _
  // Predicated region
  $region10: #{kprn_forward.1} parent=0 // pred_check
    _
  $region11: #{kprn_forward.1} parent=0 // pred_check_branch
    %19 = sbr.rel (0) target = $region13
  $region12: #{kprn_forward.1} parent=0 // pred_region
    _
  $region13: #{kprn_forward.1} parent=0 // pred_fallthru
    _
  // Predicated region
  $region14: #{kprn_forward.1} parent=0 // pred_check
    _
  $region15: #{kprn_forward.1} parent=0 // pred_check_branch
    %21 = sbr.rel (0) target = $region17
  $region16: #{kprn_forward.1} parent=0 // pred_region
    _
  $region17: #{kprn_forward.1} parent=0 // pred_fallthru
    _
  // Predicated region
  $region18: #{kprn_forward.1} parent=0 // pred_check
    _
  $region19: #{kprn_forward.1} parent=0 // pred_check_branch
    %23 = sbr.rel (0) target = $region21
  $region20: #{kprn_forward.1} parent=0 // pred_region
    _
  $region21: #{kprn_forward.1} parent=0 // pred_fallthru
    _
  // Predicated region
  $region22: #{kprn_forward.1} parent=0 // pred_check
    _
  $region23: #{kprn_forward.1} parent=0 // pred_check_branch
    %25 = sbr.rel (0) target = $region25
  $region24: #{kprn_forward.1} parent=0 // pred_region
    _
  $region25: #{kprn_forward.1} parent=0 // pred_fallthru
    _
  // Predicated region
  $region26: #{kprn_forward.1} parent=0 // pred_check
    _
  $region27: #{kprn_forward.1} parent=0 // pred_check_branch
    %27 = sbr.rel (0) target = $region29
  $region28: #{kprn_forward.1} parent=0 // pred_region
    _
  $region29: #{kprn_forward.1} parent=0 // pred_fallthru
    _
  // Predicated region
  $region30: #{kprn_forward.1} parent=0 // pred_check
    _
  $region31: #{kprn_forward.1} parent=0 // pred_check_branch
    %29 = sbr.rel (0) target = $region33
  $region32: #{kprn_forward.1} parent=0 // pred_region
    _
  $region33: #{kprn_forward.1} parent=0 // pred_fallthru
    _
  // Predicated region
  $region34: #{kprn_forward.1} parent=0 // pred_check
    _
  $region35: #{kprn_forward.1} parent=0 // pred_check_branch
    %31 = sbr.rel (0) target = $region37
  $region36: #{kprn_forward.1} parent=0 // pred_region
    _
  $region37: #{kprn_forward.1} parent=0 // pred_fallthru
    _
  %v32 = vld [vmem:[%s4] sm:$0xf]
  %v34 = vperm.slane %v32, 0
  %v35 = vperm.slane %v32, 1
  %v36 = vperm.slane %v32, 2
  %v37 = vperm.slane %v32, 3
  %v42 = vld [vmem:[%s0] sm:$0xff]
  %v43 = vld [vmem:[%s2] sm:$0xff]
  %v44 = vld [vmem:[%s2 + $0x8] sm:$0xff]
  %v45 = vld [vmem:[%s2 + $0x10] sm:$0xff]
  %v46 = vld [vmem:[%s2 + $0x18] sm:$0xff]
  %v47 = vld [vmem:[%s2 + $0x20] sm:$0xff]
  %v48 = vld [vmem:[%s2 + $0x28] sm:$0xff]
  %v49 = vld [vmem:[%s2 + $0x30] sm:$0xff]
  %v50 = vld [vmem:[%s2 + $0x38] sm:$0xff]
  %v51 = vld [vmem:[%s2 + $0x40] sm:$0xff]
  %v52 = vld [vmem:[%s2 + $0x48] sm:$0xff]
  %v53 = vld [vmem:[%s2 + $0x50] sm:$0xff]
  %v54 = vld [vmem:[%s2 + $0x58] sm:$0xff]
  %v55 = vld [vmem:[%s2 + $0x60] sm:$0xff]
  %v56 = vld [vmem:[%s2 + $0x68] sm:$0xff]
  %v57 = vld [vmem:[%s2 + $0x70] sm:$0xff]
  %v58 = vld [vmem:[%s2 + $0x78] sm:$0xff]
  %v59 = vld [vmem:[%s2 + $0x80] sm:$0xff]
  %v60 = vld [vmem:[%s2 + $0x88] sm:$0xff]
  %v61 = vld [vmem:[%s2 + $0x90] sm:$0xff]
  %v62 = vld [vmem:[%s2 + $0x98] sm:$0xff]
  %v63 = vld [vmem:[%s2 + $0xa0] sm:$0xff]
  %v64 = vld [vmem:[%s2 + $0xa8] sm:$0xff]
  %v65 = vld [vmem:[%s2 + $0xb0] sm:$0xff]
  %v66 = vld [vmem:[%s2 + $0xb8] sm:$0xff]
  %vm67 = vcmask 392192
  %v69 = vsel %vm67, %v42, 0
  %71 = vmatpush.msra.mxu0 0.0
  %72 = vmatpush.msra.mxu0 0.0
  %73 = vmatpush.msra.mxu0 0.0
  %74 = vmatpush.msra.mxu0 0.0
  %75 = vmatpush.msra.mxu0 0.0
  %76 = vmatpush.msra.mxu0 0.0
  %77 = vmatpush.msra.mxu0 0.0
  %78 = vmatpush.msra.mxu0 0.0
  %79 = vmatpush.msra.mxu0 0.0
  %80 = vmatpush.msra.mxu0 0.0
  %81 = vmatpush.msra.mxu0 %v63
  %82 = vmatpush.msra.mxu0 %v59
  %83 = vmatpush.msra.mxu0 %v55
  %84 = vmatpush.msra.mxu0 %v51
  %85 = vmatpush.msra.mxu0 %v47
  %86 = vmatpush.msra.mxu0 %v43
  %87 = vmatmul.f32.gmra.mxu0 %v69
  %v88 = vpop.f32.mrf.mxu0
  %v89 = vadd.f32 %v34, %v88
  %90 = vdwg.mxu0
  %91 = vmatpush.msra.mxu0 0.0
  %92 = vmatpush.msra.mxu0 0.0
  %93 = vmatpush.msra.mxu0 0.0
  %94 = vmatpush.msra.mxu0 0.0
  %95 = vmatpush.msra.mxu0 0.0
  %96 = vmatpush.msra.mxu0 0.0
  %97 = vmatpush.msra.mxu0 0.0
  %98 = vmatpush.msra.mxu0 0.0
  %99 = vmatpush.msra.mxu0 0.0
  %100 = vmatpush.msra.mxu0 0.0
  %101 = vmatpush.msra.mxu0 %v64
  %102 = vmatpush.msra.mxu0 %v60
  %103 = vmatpush.msra.mxu0 %v56
  %104 = vmatpush.msra.mxu0 %v52
  %105 = vmatpush.msra.mxu0 %v48
  %106 = vmatpush.msra.mxu0 %v44
  %107 = vmatmul.f32.gmra.mxu0 %v69
  %v108 = vpop.f32.mrf.mxu0
  %v109 = vadd.f32 %v35, %v108
  %110 = vdwg.mxu0
  %111 = vmatpush.msra.mxu0 0.0
  %112 = vmatpush.msra.mxu0 0.0
  %113 = vmatpush.msra.mxu0 0.0
  %114 = vmatpush.msra.mxu0 0.0
  %115 = vmatpush.msra.mxu0 0.0
  %116 = vmatpush.msra.mxu0 0.0
  %117 = vmatpush.msra.mxu0 0.0
  %118 = vmatpush.msra.mxu0 0.0
  %119 = vmatpush.msra.mxu0 0.0
  %120 = vmatpush.msra.mxu0 0.0
  %121 = vmatpush.msra.mxu0 %v65
  %122 = vmatpush.msra.mxu0 %v61
  %123 = vmatpush.msra.mxu0 %v57
  %124 = vmatpush.msra.mxu0 %v53
  %125 = vmatpush.msra.mxu0 %v49
  %126 = vmatpush.msra.mxu0 %v45
  %127 = vmatmul.f32.gmra.mxu0 %v69
  %v128 = vpop.f32.mrf.mxu0
  %v129 = vadd.f32 %v36, %v128
  %130 = vdwg.mxu0
  %131 = vmatpush.msra.mxu0 0.0
  %132 = vmatpush.msra.mxu0 0.0
  %133 = vmatpush.msra.mxu0 0.0
  %134 = vmatpush.msra.mxu0 0.0
  %135 = vmatpush.msra.mxu0 0.0
  %136 = vmatpush.msra.mxu0 0.0
  %137 = vmatpush.msra.mxu0 0.0
  %138 = vmatpush.msra.mxu0 0.0
  %139 = vmatpush.msra.mxu0 0.0
  %140 = vmatpush.msra.mxu0 0.0
  %141 = vmatpush.msra.mxu0 %v66
  %142 = vmatpush.msra.mxu0 %v62
  %143 = vmatpush.msra.mxu0 %v58
  %144 = vmatpush.msra.mxu0 %v54
  %145 = vmatpush.msra.mxu0 %v50
  %146 = vmatpush.msra.mxu0 %v46
  %147 = vmatmul.f32.gmra.mxu0 %v69
  %v148 = vpop.f32.mrf.mxu0
  %v149 = vadd.f32 %v37, %v148
  %150 = vdwg.mxu0
  %151 = vst [vmem:[#allocation2] sm:$0xff] %v89
  %152 = vst [vmem:[#allocation2 + $0x8] sm:$0xff] %v109
  %153 = vst [vmem:[#allocation2 + $0x10] sm:$0xff] %v129
  %154 = vst [vmem:[#allocation2 + $0x18] sm:$0xff] %v149
  %s155 = scalar_lea.vmem %s0, 8
  %v156 = vld [vmem:[%s155] sm:$0xff]
  %v157 = vld [vmem:[%s2] sm:$0xff]
  %v158 = vld [vmem:[%s2 + $0x8] sm:$0xff]
  %v159 = vld [vmem:[%s2 + $0x10] sm:$0xff]
  %v160 = vld [vmem:[%s2 + $0x18] sm:$0xff]
  %v161 = vld [vmem:[%s2 + $0x20] sm:$0xff]
  %v162 = vld [vmem:[%s2 + $0x28] sm:$0xff]
  %v163 = vld [vmem:[%s2 + $0x30] sm:$0xff]
  %v164 = vld [vmem:[%s2 + $0x38] sm:$0xff]
  %v165 = vld [vmem:[%s2 + $0x40] sm:$0xff]
  %v166 = vld [vmem:[%s2 + $0x48] sm:$0xff]
  %v167 = vld [vmem:[%s2 + $0x50] sm:$0xff]
  %v168 = vld [vmem:[%s2 + $0x58] sm:$0xff]
  %v169 = vld [vmem:[%s2 + $0x60] sm:$0xff]
  %v170 = vld [vmem:[%s2 + $0x68] sm:$0xff]
  %v171 = vld [vmem:[%s2 + $0x70] sm:$0xff]
  %v172 = vld [vmem:[%s2 + $0x78] sm:$0xff]
  %v173 = vld [vmem:[%s2 + $0x80] sm:$0xff]
  %v174 = vld [vmem:[%s2 + $0x88] sm:$0xff]
  %v175 = vld [vmem:[%s2 + $0x90] sm:$0xff]
  %v176 = vld [vmem:[%s2 + $0x98] sm:$0xff]
  %v177 = vld [vmem:[%s2 + $0xa0] sm:$0xff]
  %v178 = vld [vmem:[%s2 + $0xa8] sm:$0xff]
  %v179 = vld [vmem:[%s2 + $0xb0] sm:$0xff]
  %v180 = vld [vmem:[%s2 + $0xb8] sm:$0xff]
  %v182 = vsel %vm67, %v156, 0
  %184 = vmatpush.msra.mxu0 0.0
  %185 = vmatpush.msra.mxu0 0.0
  %186 = vmatpush.msra.mxu0 0.0
  %187 = vmatpush.msra.mxu0 0.0
  %188 = vmatpush.msra.mxu0 0.0
  %189 = vmatpush.msra.mxu0 0.0
  %190 = vmatpush.msra.mxu0 0.0
  %191 = vmatpush.msra.mxu0 0.0
  %192 = vmatpush.msra.mxu0 0.0
  %193 = vmatpush.msra.mxu0 0.0
  %194 = vmatpush.msra.mxu0 %v177
  %195 = vmatpush.msra.mxu0 %v173
  %196 = vmatpush.msra.mxu0 %v169
  %197 = vmatpush.msra.mxu0 %v165
  %198 = vmatpush.msra.mxu0 %v161
  %199 = vmatpush.msra.mxu0 %v157
  %200 = vmatmul.f32.gmra.mxu0 %v182
  %v201 = vpop.f32.mrf.mxu0
  %v202 = vadd.f32 %v34, %v201
  %203 = vdwg.mxu0
  %204 = vmatpush.msra.mxu0 0.0
  %205 = vmatpush.msra.mxu0 0.0
  %206 = vmatpush.msra.mxu0 0.0
  %207 = vmatpush.msra.mxu0 0.0
  %208 = vmatpush.msra.mxu0 0.0
  %209 = vmatpush.msra.mxu0 0.0
  %210 = vmatpush.msra.mxu0 0.0
  %211 = vmatpush.msra.mxu0 0.0
  %212 = vmatpush.msra.mxu0 0.0
  %213 = vmatpush.msra.mxu0 0.0
  %214 = vmatpush.msra.mxu0 %v178
  %215 = vmatpush.msra.mxu0 %v174
  %216 = vmatpush.msra.mxu0 %v170
  %217 = vmatpush.msra.mxu0 %v166
  %218 = vmatpush.msra.mxu0 %v162
  %219 = vmatpush.msra.mxu0 %v158
  %220 = vmatmul.f32.gmra.mxu0 %v182
  %v221 = vpop.f32.mrf.mxu0
  %v222 = vadd.f32 %v35, %v221
  %223 = vdwg.mxu0
  %224 = vmatpush.msra.mxu0 0.0
  %225 = vmatpush.msra.mxu0 0.0
  %226 = vmatpush.msra.mxu0 0.0
  %227 = vmatpush.msra.mxu0 0.0
  %228 = vmatpush.msra.mxu0 0.0
  %229 = vmatpush.msra.mxu0 0.0
  %230 = vmatpush.msra.mxu0 0.0
  %231 = vmatpush.msra.mxu0 0.0
  %232 = vmatpush.msra.mxu0 0.0
  %233 = vmatpush.msra.mxu0 0.0
  %234 = vmatpush.msra.mxu0 %v179
  %235 = vmatpush.msra.mxu0 %v175
  %236 = vmatpush.msra.mxu0 %v171
  %237 = vmatpush.msra.mxu0 %v167
  %238 = vmatpush.msra.mxu0 %v163
  %239 = vmatpush.msra.mxu0 %v159
  %240 = vmatmul.f32.gmra.mxu0 %v182
  %v241 = vpop.f32.mrf.mxu0
  %v242 = vadd.f32 %v36, %v241
  %243 = vdwg.mxu0
  %244 = vmatpush.msra.mxu0 0.0
  %245 = vmatpush.msra.mxu0 0.0
  %246 = vmatpush.msra.mxu0 0.0
  %247 = vmatpush.msra.mxu0 0.0
  %248 = vmatpush.msra.mxu0 0.0
  %249 = vmatpush.msra.mxu0 0.0
  %250 = vmatpush.msra.mxu0 0.0
  %251 = vmatpush.msra.mxu0 0.0
  %252 = vmatpush.msra.mxu0 0.0
  %253 = vmatpush.msra.mxu0 0.0
  %254 = vmatpush.msra.mxu0 %v180
  %255 = vmatpush.msra.mxu0 %v176
  %256 = vmatpush.msra.mxu0 %v172
  %257 = vmatpush.msra.mxu0 %v168
  %258 = vmatpush.msra.mxu0 %v164
  %259 = vmatpush.msra.mxu0 %v160
  %260 = vmatmul.f32.gmra.mxu0 %v182
  %v261 = vpop.f32.mrf.mxu0
  %v262 = vadd.f32 %v37, %v261
  %263 = vdwg.mxu0
  %s264 = scalar_lea.vmem [#allocation2], 32
  %265 = vst [vmem:[%s264] sm:$0xff] %v202
  %266 = vst [vmem:[%s264 + $0x8] sm:$0xff] %v222
  %267 = vst [vmem:[%s264 + $0x10] sm:$0xff] %v242
  %268 = vst [vmem:[%s264 + $0x18] sm:$0xff] %v262
  %s269 = scalar_lea.vmem %s0, 16
  %v270 = vld [vmem:[%s269] sm:$0xff]
  %v271 = vld [vmem:[%s2] sm:$0xff]
  %v272 = vld [vmem:[%s2 + $0x8] sm:$0xff]
  %v273 = vld [vmem:[%s2 + $0x10] sm:$0xff]
  %v274 = vld [vmem:[%s2 + $0x18] sm:$0xff]
  %v275 = vld [vmem:[%s2 + $0x20] sm:$0xff]
  %v276 = vld [vmem:[%s2 + $0x28] sm:$0xff]
  %v277 = vld [vmem:[%s2 + $0x30] sm:$0xff]
  %v278 = vld [vmem:[%s2 + $0x38] sm:$0xff]
  %v279 = vld [vmem:[%s2 + $0x40] sm:$0xff]
  %v280 = vld [vmem:[%s2 + $0x48] sm:$0xff]
  %v281 = vld [vmem:[%s2 + $0x50] sm:$0xff]
  %v282 = vld [vmem:[%s2 + $0x58] sm:$0xff]
  %v283 = vld [vmem:[%s2 + $0x60] sm:$0xff]
  %v284 = vld [vmem:[%s2 + $0x68] sm:$0xff]
  %v285 = vld [vmem:[%s2 + $0x70] sm:$0xff]
  %v286 = vld [vmem:[%s2 + $0x78] sm:$0xff]
  %v287 = vld [vmem:[%s2 + $0x80] sm:$0xff]
  %v288 = vld [vmem:[%s2 + $0x88] sm:$0xff]
  %v289 = vld [vmem:[%s2 + $0x90] sm:$0xff]
  %v290 = vld [vmem:[%s2 + $0x98] sm:$0xff]
  %v291 = vld [vmem:[%s2 + $0xa0] sm:$0xff]
  %v292 = vld [vmem:[%s2 + $0xa8] sm:$0xff]
  %v293 = vld [vmem:[%s2 + $0xb0] sm:$0xff]
  %v294 = vld [vmem:[%s2 + $0xb8] sm:$0xff]
  %v296 = vsel %vm67, %v270, 0
  %298 = vmatpush.msra.mxu0 0.0
  %299 = vmatpush.msra.mxu0 0.0
  %300 = vmatpush.msra.mxu0 0.0
  %301 = vmatpush.msra.mxu0 0.0
  %302 = vmatpush.msra.mxu0 0.0
  %303 = vmatpush.msra.mxu0 0.0
  %304 = vmatpush.msra.mxu0 0.0
  %305 = vmatpush.msra.mxu0 0.0
  %306 = vmatpush.msra.mxu0 0.0
  %307 = vmatpush.msra.mxu0 0.0
  %308 = vmatpush.msra.mxu0 %v291
  %309 = vmatpush.msra.mxu0 %v287
  %310 = vmatpush.msra.mxu0 %v283
  %311 = vmatpush.msra.mxu0 %v279
  %312 = vmatpush.msra.mxu0 %v275
  %313 = vmatpush.msra.mxu0 %v271
  %314 = vmatmul.f32.gmra.mxu0 %v296
  %v315 = vpop.f32.mrf.mxu0
  %v316 = vadd.f32 %v34, %v315
  %317 = vdwg.mxu0
  %318 = vmatpush.msra.mxu0 0.0
  %319 = vmatpush.msra.mxu0 0.0
  %320 = vmatpush.msra.mxu0 0.0
  %321 = vmatpush.msra.mxu0 0.0
  %322 = vmatpush.msra.mxu0 0.0
  %323 = vmatpush.msra.mxu0 0.0
  %324 = vmatpush.msra.mxu0 0.0
  %325 = vmatpush.msra.mxu0 0.0
  %326 = vmatpush.msra.mxu0 0.0
  %327 = vmatpush.msra.mxu0 0.0
  %328 = vmatpush.msra.mxu0 %v292
  %329 = vmatpush.msra.mxu0 %v288
  %330 = vmatpush.msra.mxu0 %v284
  %331 = vmatpush.msra.mxu0 %v280
  %332 = vmatpush.msra.mxu0 %v276
  %333 = vmatpush.msra.mxu0 %v272
  %334 = vmatmul.f32.gmra.mxu0 %v296
  %v335 = vpop.f32.mrf.mxu0
  %v336 = vadd.f32 %v35, %v335
  %337 = vdwg.mxu0
  %338 = vmatpush.msra.mxu0 0.0
  %339 = vmatpush.msra.mxu0 0.0
  %340 = vmatpush.msra.mxu0 0.0
  %341 = vmatpush.msra.mxu0 0.0
  %342 = vmatpush.msra.mxu0 0.0
  %343 = vmatpush.msra.mxu0 0.0
  %344 = vmatpush.msra.mxu0 0.0
  %345 = vmatpush.msra.mxu0 0.0
  %346 = vmatpush.msra.mxu0 0.0
  %347 = vmatpush.msra.mxu0 0.0
  %348 = vmatpush.msra.mxu0 %v293
  %349 = vmatpush.msra.mxu0 %v289
  %350 = vmatpush.msra.mxu0 %v285
  %351 = vmatpush.msra.mxu0 %v281
  %352 = vmatpush.msra.mxu0 %v277
  %353 = vmatpush.msra.mxu0 %v273
  %354 = vmatmul.f32.gmra.mxu0 %v296
  %v355 = vpop.f32.mrf.mxu0
  %v356 = vadd.f32 %v36, %v355
  %357 = vdwg.mxu0
  %358 = vmatpush.msra.mxu0 0.0
  %359 = vmatpush.msra.mxu0 0.0
  %360 = vmatpush.msra.mxu0 0.0
  %361 = vmatpush.msra.mxu0 0.0
  %362 = vmatpush.msra.mxu0 0.0
  %363 = vmatpush.msra.mxu0 0.0
  %364 = vmatpush.msra.mxu0 0.0
  %365 = vmatpush.msra.mxu0 0.0
  %366 = vmatpush.msra.mxu0 0.0
  %367 = vmatpush.msra.mxu0 0.0
  %368 = vmatpush.msra.mxu0 %v294
  %369 = vmatpush.msra.mxu0 %v290
  %370 = vmatpush.msra.mxu0 %v286
  %371 = vmatpush.msra.mxu0 %v282
  %372 = vmatpush.msra.mxu0 %v278
  %373 = vmatpush.msra.mxu0 %v274
  %374 = vmatmul.f32.gmra.mxu0 %v296
  %v375 = vpop.f32.mrf.mxu0
  %v376 = vadd.f32 %v37, %v375
  %377 = vdwg.mxu0
  %s378 = scalar_lea.vmem [#allocation2], 64
  %379 = vst [vmem:[%s378] sm:$0xff] %v316
  %380 = vst [vmem:[%s378 + $0x8] sm:$0xff] %v336
  %381 = vst [vmem:[%s378 + $0x10] sm:$0xff] %v356
  %382 = vst [vmem:[%s378 + $0x18] sm:$0xff] %v376
  %s383 = scalar_lea.vmem %s0, 24
  %v384 = vld [vmem:[%s383] sm:$0xff]
  %v385 = vld [vmem:[%s2] sm:$0xff]
  %v386 = vld [vmem:[%s2 + $0x8] sm:$0xff]
  %v387 = vld [vmem:[%s2 + $0x10] sm:$0xff]
  %v388 = vld [vmem:[%s2 + $0x18] sm:$0xff]
  %v389 = vld [vmem:[%s2 + $0x20] sm:$0xff]
  %v390 = vld [vmem:[%s2 + $0x28] sm:$0xff]
  %v391 = vld [vmem:[%s2 + $0x30] sm:$0xff]
  %v392 = vld [vmem:[%s2 + $0x38] sm:$0xff]
  %v393 = vld [vmem:[%s2 + $0x40] sm:$0xff]
  %v394 = vld [vmem:[%s2 + $0x48] sm:$0xff]
  %v395 = vld [vmem:[%s2 + $0x50] sm:$0xff]
  %v396 = vld [vmem:[%s2 + $0x58] sm:$0xff]
  %v397 = vld [vmem:[%s2 + $0x60] sm:$0xff]
  %v398 = vld [vmem:[%s2 + $0x68] sm:$0xff]
  %v399 = vld [vmem:[%s2 + $0x70] sm:$0xff]
  %v400 = vld [vmem:[%s2 + $0x78] sm:$0xff]
  %v401 = vld [vmem:[%s2 + $0x80] sm:$0xff]
  %v402 = vld [vmem:[%s2 + $0x88] sm:$0xff]
  %v403 = vld [vmem:[%s2 + $0x90] sm:$0xff]
  %v404 = vld [vmem:[%s2 + $0x98] sm:$0xff]
  %v405 = vld [vmem:[%s2 + $0xa0] sm:$0xff]
  %v406 = vld [vmem:[%s2 + $0xa8] sm:$0xff]
  %v407 = vld [vmem:[%s2 + $0xb0] sm:$0xff]
  %v408 = vld [vmem:[%s2 + $0xb8] sm:$0xff]
  %v410 = vsel %vm67, %v384, 0
  %412 = vmatpush.msra.mxu0 0.0
  %413 = vmatpush.msra.mxu0 0.0
  %414 = vmatpush.msra.mxu0 0.0
  %415 = vmatpush.msra.mxu0 0.0
  %416 = vmatpush.msra.mxu0 0.0
  %417 = vmatpush.msra.mxu0 0.0
  %418 = vmatpush.msra.mxu0 0.0
  %419 = vmatpush.msra.mxu0 0.0
  %420 = vmatpush.msra.mxu0 0.0
  %421 = vmatpush.msra.mxu0 0.0
  %422 = vmatpush.msra.mxu0 %v405
  %423 = vmatpush.msra.mxu0 %v401
  %424 = vmatpush.msra.mxu0 %v397
  %425 = vmatpush.msra.mxu0 %v393
  %426 = vmatpush.msra.mxu0 %v389
  %427 = vmatpush.msra.mxu0 %v385
  %428 = vmatmul.f32.gmra.mxu0 %v410
  %v429 = vpop.f32.mrf.mxu0
  %v430 = vadd.f32 %v34, %v429
  %431 = vdwg.mxu0
  %432 = vmatpush.msra.mxu0 0.0
  %433 = vmatpush.msra.mxu0 0.0
  %434 = vmatpush.msra.mxu0 0.0
  %435 = vmatpush.msra.mxu0 0.0
  %436 = vmatpush.msra.mxu0 0.0
  %437 = vmatpush.msra.mxu0 0.0
  %438 = vmatpush.msra.mxu0 0.0
  %439 = vmatpush.msra.mxu0 0.0
  %440 = vmatpush.msra.mxu0 0.0
  %441 = vmatpush.msra.mxu0 0.0
  %442 = vmatpush.msra.mxu0 %v406
  %443 = vmatpush.msra.mxu0 %v402
  %444 = vmatpush.msra.mxu0 %v398
  %445 = vmatpush.msra.mxu0 %v394
  %446 = vmatpush.msra.mxu0 %v390
  %447 = vmatpush.msra.mxu0 %v386
  %448 = vmatmul.f32.gmra.mxu0 %v410
  %v449 = vpop.f32.mrf.mxu0
  %v450 = vadd.f32 %v35, %v449
  %451 = vdwg.mxu0
  %452 = vmatpush.msra.mxu0 0.0
  %453 = vmatpush.msra.mxu0 0.0
  %454 = vmatpush.msra.mxu0 0.0
  %455 = vmatpush.msra.mxu0 0.0
  %456 = vmatpush.msra.mxu0 0.0
  %457 = vmatpush.msra.mxu0 0.0
  %458 = vmatpush.msra.mxu0 0.0
  %459 = vmatpush.msra.mxu0 0.0
  %460 = vmatpush.msra.mxu0 0.0
  %461 = vmatpush.msra.mxu0 0.0
  %462 = vmatpush.msra.mxu0 %v407
  %463 = vmatpush.msra.mxu0 %v403
  %464 = vmatpush.msra.mxu0 %v399
  %465 = vmatpush.msra.mxu0 %v395
  %466 = vmatpush.msra.mxu0 %v391
  %467 = vmatpush.msra.mxu0 %v387
  %468 = vmatmul.f32.gmra.mxu0 %v410
  %v469 = vpop.f32.mrf.mxu0
  %v470 = vadd.f32 %v36, %v469
  %471 = vdwg.mxu0
  %472 = vmatpush.msra.mxu0 0.0
  %473 = vmatpush.msra.mxu0 0.0
  %474 = vmatpush.msra.mxu0 0.0
  %475 = vmatpush.msra.mxu0 0.0
  %476 = vmatpush.msra.mxu0 0.0
  %477 = vmatpush.msra.mxu0 0.0
  %478 = vmatpush.msra.mxu0 0.0
  %479 = vmatpush.msra.mxu0 0.0
  %480 = vmatpush.msra.mxu0 0.0
  %481 = vmatpush.msra.mxu0 0.0
  %482 = vmatpush.msra.mxu0 %v408
  %483 = vmatpush.msra.mxu0 %v404
  %484 = vmatpush.msra.mxu0 %v400
  %485 = vmatpush.msra.mxu0 %v396
  %486 = vmatpush.msra.mxu0 %v392
  %487 = vmatpush.msra.mxu0 %v388
  %488 = vmatmul.f32.gmra.mxu0 %v410
  %v489 = vpop.f32.mrf.mxu0
  %v490 = vadd.f32 %v37, %v489
  %491 = vdwg.mxu0
  %s492 = scalar_lea.vmem [#allocation2], 96
  %493 = vst [vmem:[%s492] sm:$0xff] %v430
  %494 = vst [vmem:[%s492 + $0x8] sm:$0xff] %v450
  %495 = vst [vmem:[%s492 + $0x10] sm:$0xff] %v470
  %496 = vst [vmem:[%s492 + $0x18] sm:$0xff] %v490
  %s497 = scalar_lea.vmem %s0, 32
  %v498 = vld [vmem:[%s497] sm:$0xff]
  %v499 = vld [vmem:[%s2] sm:$0xff]
  %v500 = vld [vmem:[%s2 + $0x8] sm:$0xff]
  %v501 = vld [vmem:[%s2 + $0x10] sm:$0xff]
  %v502 = vld [vmem:[%s2 + $0x18] sm:$0xff]
  %v503 = vld [vmem:[%s2 + $0x20] sm:$0xff]
  %v504 = vld [vmem:[%s2 + $0x28] sm:$0xff]
  %v505 = vld [vmem:[%s2 + $0x30] sm:$0xff]
  %v506 = vld [vmem:[%s2 + $0x38] sm:$0xff]
  %v507 = vld [vmem:[%s2 + $0x40] sm:$0xff]
  %v508 = vld [vmem:[%s2 + $0x48] sm:$0xff]
  %v509 = vld [vmem:[%s2 + $0x50] sm:$0xff]
  %v510 = vld [vmem:[%s2 + $0x58] sm:$0xff]
  %v511 = vld [vmem:[%s2 + $0x60] sm:$0xff]
  %v512 = vld [vmem:[%s2 + $0x68] sm:$0xff]
  %v513 = vld [vmem:[%s2 + $0x70] sm:$0xff]
  %v514 = vld [vmem:[%s2 + $0x78] sm:$0xff]
  %v515 = vld [vmem:[%s2 + $0x80] sm:$0xff]
  %v516 = vld [vmem:[%s2 + $0x88] sm:$0xff]
  %v517 = vld [vmem:[%s2 + $0x90] sm:$0xff]
  %v518 = vld [vmem:[%s2 + $0x98] sm:$0xff]
  %v519 = vld [vmem:[%s2 + $0xa0] sm:$0xff]
  %v520 = vld [vmem:[%s2 + $0xa8] sm:$0xff]
  %v521 = vld [vmem:[%s2 + $0xb0] sm:$0xff]
  %v522 = vld [vmem:[%s2 + $0xb8] sm:$0xff]
  %v524 = vsel %vm67, %v498, 0
  %526 = vmatpush.msra.mxu0 0.0
  %527 = vmatpush.msra.mxu0 0.0
  %528 = vmatpush.msra.mxu0 0.0
  %529 = vmatpush.msra.mxu0 0.0
  %530 = vmatpush.msra.mxu0 0.0
  %531 = vmatpush.msra.mxu0 0.0
  %532 = vmatpush.msra.mxu0 0.0
  %533 = vmatpush.msra.mxu0 0.0
  %534 = vmatpush.msra.mxu0 0.0
  %535 = vmatpush.msra.mxu0 0.0
  %536 = vmatpush.msra.mxu0 %v519
  %537 = vmatpush.msra.mxu0 %v515
  %538 = vmatpush.msra.mxu0 %v511
  %539 = vmatpush.msra.mxu0 %v507
  %540 = vmatpush.msra.mxu0 %v503
  %541 = vmatpush.msra.mxu0 %v499
  %542 = vmatmul.f32.gmra.mxu0 %v524
  %v543 = vpop.f32.mrf.mxu0
  %v544 = vadd.f32 %v34, %v543
  %545 = vdwg.mxu0
  %546 = vmatpush.msra.mxu0 0.0
  %547 = vmatpush.msra.mxu0 0.0
  %548 = vmatpush.msra.mxu0 0.0
  %549 = vmatpush.msra.mxu0 0.0
  %550 = vmatpush.msra.mxu0 0.0
  %551 = vmatpush.msra.mxu0 0.0
  %552 = vmatpush.msra.mxu0 0.0
  %553 = vmatpush.msra.mxu0 0.0
  %554 = vmatpush.msra.mxu0 0.0
  %555 = vmatpush.msra.mxu0 0.0
  %556 = vmatpush.msra.mxu0 %v520
  %557 = vmatpush.msra.mxu0 %v516
  %558 = vmatpush.msra.mxu0 %v512
  %559 = vmatpush.msra.mxu0 %v508
  %560 = vmatpush.msra.mxu0 %v504
  %561 = vmatpush.msra.mxu0 %v500
  %562 = vmatmul.f32.gmra.mxu0 %v524
  %v563 = vpop.f32.mrf.mxu0
  %v564 = vadd.f32 %v35, %v563
  %565 = vdwg.mxu0
  %566 = vmatpush.msra.mxu0 0.0
  %567 = vmatpush.msra.mxu0 0.0
  %568 = vmatpush.msra.mxu0 0.0
  %569 = vmatpush.msra.mxu0 0.0
  %570 = vmatpush.msra.mxu0 0.0
  %571 = vmatpush.msra.mxu0 0.0
  %572 = vmatpush.msra.mxu0 0.0
  %573 = vmatpush.msra.mxu0 0.0
  %574 = vmatpush.msra.mxu0 0.0
  %575 = vmatpush.msra.mxu0 0.0
  %576 = vmatpush.msra.mxu0 %v521
  %577 = vmatpush.msra.mxu0 %v517
  %578 = vmatpush.msra.mxu0 %v513
  %579 = vmatpush.msra.mxu0 %v509
  %580 = vmatpush.msra.mxu0 %v505
  %581 = vmatpush.msra.mxu0 %v501
  %582 = vmatmul.f32.gmra.mxu0 %v524
  %v583 = vpop.f32.mrf.mxu0
  %v584 = vadd.f32 %v36, %v583
  %585 = vdwg.mxu0
  %586 = vmatpush.msra.mxu0 0.0
  %587 = vmatpush.msra.mxu0 0.0
  %588 = vmatpush.msra.mxu0 0.0
  %589 = vmatpush.msra.mxu0 0.0
  %590 = vmatpush.msra.mxu0 0.0
  %591 = vmatpush.msra.mxu0 0.0
  %592 = vmatpush.msra.mxu0 0.0
  %593 = vmatpush.msra.mxu0 0.0
  %594 = vmatpush.msra.mxu0 0.0
  %595 = vmatpush.msra.mxu0 0.0
  %596 = vmatpush.msra.mxu0 %v522
  %597 = vmatpush.msra.mxu0 %v518
  %598 = vmatpush.msra.mxu0 %v514
  %599 = vmatpush.msra.mxu0 %v510
  %600 = vmatpush.msra.mxu0 %v506
  %601 = vmatpush.msra.mxu0 %v502
  %602 = vmatmul.f32.gmra.mxu0 %v524
  %v603 = vpop.f32.mrf.mxu0
  %v604 = vadd.f32 %v37, %v603
  %605 = vdwg.mxu0
  %s606 = scalar_lea.vmem [#allocation2], 128
  %607 = vst [vmem:[%s606] sm:$0xff] %v544
  %608 = vst [vmem:[%s606 + $0x8] sm:$0xff] %v564
  %609 = vst [vmem:[%s606 + $0x10] sm:$0xff] %v584
  %610 = vst [vmem:[%s606 + $0x18] sm:$0xff] %v604
  %s611 = scalar_lea.vmem %s0, 40
  %v612 = vld [vmem:[%s611] sm:$0xff]
  %v613 = vld [vmem:[%s2] sm:$0xff]
  %v614 = vld [vmem:[%s2 + $0x8] sm:$0xff]
  %v615 = vld [vmem:[%s2 + $0x10] sm:$0xff]
  %v616 = vld [vmem:[%s2 + $0x18] sm:$0xff]
  %v617 = vld [vmem:[%s2 + $0x20] sm:$0xff]
  %v618 = vld [vmem:[%s2 + $0x28] sm:$0xff]
  %v619 = vld [vmem:[%s2 + $0x30] sm:$0xff]
  %v620 = vld [vmem:[%s2 + $0x38] sm:$0xff]
  %v621 = vld [vmem:[%s2 + $0x40] sm:$0xff]
  %v622 = vld [vmem:[%s2 + $0x48] sm:$0xff]
  %v623 = vld [vmem:[%s2 + $0x50] sm:$0xff]
  %v624 = vld [vmem:[%s2 + $0x58] sm:$0xff]
  %v625 = vld [vmem:[%s2 + $0x60] sm:$0xff]
  %v626 = vld [vmem:[%s2 + $0x68] sm:$0xff]
  %v627 = vld [vmem:[%s2 + $0x70] sm:$0xff]
  %v628 = vld [vmem:[%s2 + $0x78] sm:$0xff]
  %v629 = vld [vmem:[%s2 + $0x80] sm:$0xff]
  %v630 = vld [vmem:[%s2 + $0x88] sm:$0xff]
  %v631 = vld [vmem:[%s2 + $0x90] sm:$0xff]
  %v632 = vld [vmem:[%s2 + $0x98] sm:$0xff]
  %v633 = vld [vmem:[%s2 + $0xa0] sm:$0xff]
  %v634 = vld [vmem:[%s2 + $0xa8] sm:$0xff]
  %v635 = vld [vmem:[%s2 + $0xb0] sm:$0xff]
  %v636 = vld [vmem:[%s2 + $0xb8] sm:$0xff]
  %v638 = vsel %vm67, %v612, 0
  %640 = vmatpush.msra.mxu0 0.0
  %641 = vmatpush.msra.mxu0 0.0
  %642 = vmatpush.msra.mxu0 0.0
  %643 = vmatpush.msra.mxu0 0.0
  %644 = vmatpush.msra.mxu0 0.0
  %645 = vmatpush.msra.mxu0 0.0
  %646 = vmatpush.msra.mxu0 0.0
  %647 = vmatpush.msra.mxu0 0.0
  %648 = vmatpush.msra.mxu0 0.0
  %649 = vmatpush.msra.mxu0 0.0
  %650 = vmatpush.msra.mxu0 %v633
  %651 = vmatpush.msra.mxu0 %v629
  %652 = vmatpush.msra.mxu0 %v625
  %653 = vmatpush.msra.mxu0 %v621
  %654 = vmatpush.msra.mxu0 %v617
  %655 = vmatpush.msra.mxu0 %v613
  %656 = vmatmul.f32.gmra.mxu0 %v638
  %v657 = vpop.f32.mrf.mxu0
  %v658 = vadd.f32 %v34, %v657
  %659 = vdwg.mxu0
  %660 = vmatpush.msra.mxu0 0.0
  %661 = vmatpush.msra.mxu0 0.0
  %662 = vmatpush.msra.mxu0 0.0
  %663 = vmatpush.msra.mxu0 0.0
  %664 = vmatpush.msra.mxu0 0.0
  %665 = vmatpush.msra.mxu0 0.0
  %666 = vmatpush.msra.mxu0 0.0
  %667 = vmatpush.msra.mxu0 0.0
  %668 = vmatpush.msra.mxu0 0.0
  %669 = vmatpush.msra.mxu0 0.0
  %670 = vmatpush.msra.mxu0 %v634
  %671 = vmatpush.msra.mxu0 %v630
  %672 = vmatpush.msra.mxu0 %v626
  %673 = vmatpush.msra.mxu0 %v622
  %674 = vmatpush.msra.mxu0 %v618
  %675 = vmatpush.msra.mxu0 %v614
  %676 = vmatmul.f32.gmra.mxu0 %v638
  %v677 = vpop.f32.mrf.mxu0
  %v678 = vadd.f32 %v35, %v677
  %679 = vdwg.mxu0
  %680 = vmatpush.msra.mxu0 0.0
  %681 = vmatpush.msra.mxu0 0.0
  %682 = vmatpush.msra.mxu0 0.0
  %683 = vmatpush.msra.mxu0 0.0
  %684 = vmatpush.msra.mxu0 0.0
  %685 = vmatpush.msra.mxu0 0.0
  %686 = vmatpush.msra.mxu0 0.0
  %687 = vmatpush.msra.mxu0 0.0
  %688 = vmatpush.msra.mxu0 0.0
  %689 = vmatpush.msra.mxu0 0.0
  %690 = vmatpush.msra.mxu0 %v635
  %691 = vmatpush.msra.mxu0 %v631
  %692 = vmatpush.msra.mxu0 %v627
  %693 = vmatpush.msra.mxu0 %v623
  %694 = vmatpush.msra.mxu0 %v619
  %695 = vmatpush.msra.mxu0 %v615
  %696 = vmatmul.f32.gmra.mxu0 %v638
  %v697 = vpop.f32.mrf.mxu0
  %v698 = vadd.f32 %v36, %v697
  %699 = vdwg.mxu0
  %700 = vmatpush.msra.mxu0 0.0
  %701 = vmatpush.msra.mxu0 0.0
  %702 = vmatpush.msra.mxu0 0.0
  %703 = vmatpush.msra.mxu0 0.0
  %704 = vmatpush.msra.mxu0 0.0
  %705 = vmatpush.msra.mxu0 0.0
  %706 = vmatpush.msra.mxu0 0.0
  %707 = vmatpush.msra.mxu0 0.0
  %708 = vmatpush.msra.mxu0 0.0
  %709 = vmatpush.msra.mxu0 0.0
  %710 = vmatpush.msra.mxu0 %v636
  %711 = vmatpush.msra.mxu0 %v632
  %712 = vmatpush.msra.mxu0 %v628
  %713 = vmatpush.msra.mxu0 %v624
  %714 = vmatpush.msra.mxu0 %v620
  %715 = vmatpush.msra.mxu0 %v616
  %716 = vmatmul.f32.gmra.mxu0 %v638
  %v717 = vpop.f32.mrf.mxu0
  %v718 = vadd.f32 %v37, %v717
  %719 = vdwg.mxu0
  %s720 = scalar_lea.vmem [#allocation2], 160
  %721 = vst [vmem:[%s720] sm:$0xff] %v658
  %722 = vst [vmem:[%s720 + $0x8] sm:$0xff] %v678
  %723 = vst [vmem:[%s720 + $0x10] sm:$0xff] %v698
  %724 = vst [vmem:[%s720 + $0x18] sm:$0xff] %v718
  %725 = vst [vmem:[#allocation3] sm:$0xff] 0.0
  %726 = vst [vmem:[#allocation4] sm:$0xff] 0.0
  %v727 = vld [vmem:[%s1] sm:$0xff]
  %v728 = vld [vmem:[#allocation2] sm:$0xff]
  %v729 = vld [vmem:[#allocation2 + $0x8] sm:$0xff]
  %v730 = vld [vmem:[#allocation2 + $0x10] sm:$0xff]
  %v731 = vld [vmem:[#allocation2 + $0x18] sm:$0xff]
  %v732 = vld [vmem:[#allocation3] sm:$0xff]
  %v733 = vld [vmem:[%s3] sm:$0xff]
  %v734 = vld [vmem:[%s3 + $0x8] sm:$0xff]
  %v735 = vld [vmem:[%s3 + $0x10] sm:$0xff]
  %v736 = vld [vmem:[%s3 + $0x18] sm:$0xff]
  %v737 = vld [vmem:[%s3 + $0x20] sm:$0xff]
  %v738 = vld [vmem:[%s3 + $0x28] sm:$0xff]
  %v739 = vld [vmem:[%s3 + $0x30] sm:$0xff]
  %v740 = vld [vmem:[%s3 + $0x38] sm:$0xff]
  %v741 = vld [vmem:[%s3 + $0x40] sm:$0xff]
  %v742 = vld [vmem:[%s3 + $0x48] sm:$0xff]
  %v743 = vld [vmem:[%s3 + $0x50] sm:$0xff]
  %v744 = vld [vmem:[%s3 + $0x58] sm:$0xff]
  %v745 = vld [vmem:[%s3 + $0x60] sm:$0xff]
  %v746 = vld [vmem:[%s3 + $0x68] sm:$0xff]
  %v747 = vld [vmem:[%s3 + $0x70] sm:$0xff]
  %v748 = vld [vmem:[%s3 + $0x78] sm:$0xff]
  %v749 = vld [vmem:[%s3 + $0x80] sm:$0xff]
  %v750 = vld [vmem:[%s3 + $0x88] sm:$0xff]
  %v751 = vld [vmem:[%s3 + $0x90] sm:$0xff]
  %v752 = vld [vmem:[%s3 + $0x98] sm:$0xff]
  %v753 = vld [vmem:[%s3 + $0xa0] sm:$0xff]
  %v754 = vld [vmem:[%s3 + $0xa8] sm:$0xff]
  %v755 = vld [vmem:[%s3 + $0xb0] sm:$0xff]
  %v756 = vld [vmem:[%s3 + $0xb8] sm:$0xff]
  %v757 = vld [vmem:[%s3 + $0xc0] sm:$0xff]
  %v758 = vld [vmem:[%s3 + $0xc8] sm:$0xff]
  %v759 = vld [vmem:[%s3 + $0xd0] sm:$0xff]
  %v760 = vld [vmem:[%s3 + $0xd8] sm:$0xff]
  %v761 = vld [vmem:[%s3 + $0xe0] sm:$0xff]
  %v762 = vld [vmem:[%s3 + $0xe8] sm:$0xff]
  %v763 = vld [vmem:[%s3 + $0xf0] sm:$0xff]
  %v764 = vld [vmem:[%s3 + $0xf8] sm:$0xff]
  %v765 = vld [vmem:[%s3 + $0x100] sm:$0xff]
  %v766 = vld [vmem:[%s3 + $0x108] sm:$0xff]
  %v767 = vld [vmem:[%s3 + $0x110] sm:$0xff]
  %v768 = vld [vmem:[%s3 + $0x118] sm:$0xff]
  %v769 = vld [vmem:[%s3 + $0x120] sm:$0xff]
  %v770 = vld [vmem:[%s3 + $0x128] sm:$0xff]
  %v771 = vld [vmem:[%s3 + $0x130] sm:$0xff]
  %v772 = vld [vmem:[%s3 + $0x138] sm:$0xff]
  %v773 = vld [vmem:[%s3 + $0x140] sm:$0xff]
  %v774 = vld [vmem:[%s3 + $0x148] sm:$0xff]
  %v775 = vld [vmem:[%s3 + $0x150] sm:$0xff]
  %v776 = vld [vmem:[%s3 + $0x158] sm:$0xff]
  %v777 = vld [vmem:[%s3 + $0x160] sm:$0xff]
  %v778 = vld [vmem:[%s3 + $0x168] sm:$0xff]
  %v779 = vld [vmem:[%s3 + $0x170] sm:$0xff]
  %v780 = vld [vmem:[%s3 + $0x178] sm:$0xff]
  %v781 = vld [vmem:[%s3 + $0x180] sm:$0xff]
  %v782 = vld [vmem:[%s3 + $0x188] sm:$0xff]
  %v783 = vld [vmem:[%s3 + $0x190] sm:$0xff]
  %v784 = vld [vmem:[%s3 + $0x198] sm:$0xff]
  %v785 = vld [vmem:[%s3 + $0x1a0] sm:$0xff]
  %v786 = vld [vmem:[%s3 + $0x1a8] sm:$0xff]
  %v787 = vld [vmem:[%s3 + $0x1b0] sm:$0xff]
  %v788 = vld [vmem:[%s3 + $0x1b8] sm:$0xff]
  %v789 = vld [vmem:[%s3 + $0x1c0] sm:$0xff]
  %v790 = vld [vmem:[%s3 + $0x1c8] sm:$0xff]
  %v791 = vld [vmem:[%s3 + $0x1d0] sm:$0xff]
  %v792 = vld [vmem:[%s3 + $0x1d8] sm:$0xff]
  %v793 = vld [vmem:[%s3 + $0x1e0] sm:$0xff]
  %v794 = vld [vmem:[%s3 + $0x1e8] sm:$0xff]
  %v795 = vld [vmem:[%s3 + $0x1f0] sm:$0xff]
  %v796 = vld [vmem:[%s3 + $0x1f8] sm:$0xff]
  %797 = vmatpush.msra.mxu0 %v793
  %798 = vmatpush.msra.mxu0 %v789
  %799 = vmatpush.msra.mxu0 %v785
  %800 = vmatpush.msra.mxu0 %v781
  %801 = vmatpush.msra.mxu0 %v777
  %802 = vmatpush.msra.mxu0 %v773
  %803 = vmatpush.msra.mxu0 %v769
  %804 = vmatpush.msra.mxu0 %v765
  %805 = vmatpush.msra.mxu0 %v761
  %806 = vmatpush.msra.mxu0 %v757
  %807 = vmatpush.msra.mxu0 %v753
  %808 = vmatpush.msra.mxu0 %v749
  %809 = vmatpush.msra.mxu0 %v745
  %810 = vmatpush.msra.mxu0 %v741
  %811 = vmatpush.msra.mxu0 %v737
  %812 = vmatpush.msra.mxu0 %v733
  %813 = vmatmul.f32.gmra.mxu0 %v732
  %v814 = vpop.f32.mrf.mxu0
  %v815 = vadd.f32 0.0, %v814
  %816 = vdwg.mxu0
  %817 = vmatpush.msra.mxu0 %v794
  %818 = vmatpush.msra.mxu0 %v790
  %819 = vmatpush.msra.mxu0 %v786
  %820 = vmatpush.msra.mxu0 %v782
  %821 = vmatpush.msra.mxu0 %v778
  %822 = vmatpush.msra.mxu0 %v774
  %823 = vmatpush.msra.mxu0 %v770
  %824 = vmatpush.msra.mxu0 %v766
  %825 = vmatpush.msra.mxu0 %v762
  %826 = vmatpush.msra.mxu0 %v758
  %827 = vmatpush.msra.mxu0 %v754
  %828 = vmatpush.msra.mxu0 %v750
  %829 = vmatpush.msra.mxu0 %v746
  %830 = vmatpush.msra.mxu0 %v742
  %831 = vmatpush.msra.mxu0 %v738
  %832 = vmatpush.msra.mxu0 %v734
  %833 = vmatmul.f32.gmra.mxu0 %v732
  %v834 = vpop.f32.mrf.mxu0
  %v835 = vadd.f32 0.0, %v834
  %836 = vdwg.mxu0
  %837 = vmatpush.msra.mxu0 %v795
  %838 = vmatpush.msra.mxu0 %v791
  %839 = vmatpush.msra.mxu0 %v787
  %840 = vmatpush.msra.mxu0 %v783
  %841 = vmatpush.msra.mxu0 %v779
  %842 = vmatpush.msra.mxu0 %v775
  %843 = vmatpush.msra.mxu0 %v771
  %844 = vmatpush.msra.mxu0 %v767
  %845 = vmatpush.msra.mxu0 %v763
  %846 = vmatpush.msra.mxu0 %v759
  %847 = vmatpush.msra.mxu0 %v755
  %848 = vmatpush.msra.mxu0 %v751
  %849 = vmatpush.msra.mxu0 %v747
  %850 = vmatpush.msra.mxu0 %v743
  %851 = vmatpush.msra.mxu0 %v739
  %852 = vmatpush.msra.mxu0 %v735
  %853 = vmatmul.f32.gmra.mxu0 %v732
  %v854 = vpop.f32.mrf.mxu0
  %v855 = vadd.f32 0.0, %v854
  %856 = vdwg.mxu0
  %857 = vmatpush.msra.mxu0 %v796
  %858 = vmatpush.msra.mxu0 %v792
  %859 = vmatpush.msra.mxu0 %v788
  %860 = vmatpush.msra.mxu0 %v784
  %861 = vmatpush.msra.mxu0 %v780
  %862 = vmatpush.msra.mxu0 %v776
  %863 = vmatpush.msra.mxu0 %v772
  %864 = vmatpush.msra.mxu0 %v768
  %865 = vmatpush.msra.mxu0 %v764
  %866 = vmatpush.msra.mxu0 %v760
  %867 = vmatpush.msra.mxu0 %v756
  %868 = vmatpush.msra.mxu0 %v752
  %869 = vmatpush.msra.mxu0 %v748
  %870 = vmatpush.msra.mxu0 %v744
  %871 = vmatpush.msra.mxu0 %v740
  %872 = vmatpush.msra.mxu0 %v736
  %873 = vmatmul.f32.gmra.mxu0 %v732
  %v874 = vpop.f32.mrf.mxu0
  %v875 = vadd.f32 0.0, %v874
  %876 = vdwg.mxu0
  %v877 = vadd.f32 %v728, %v815
  %v878 = vadd.f32 %v729, %v835
  %v879 = vadd.f32 %v730, %v855
  %v880 = vadd.f32 %v731, %v875
  %v881 = vxor.u32 %v877, 2147483648
  %v882 = vmul.f32 %v881, 1.442695
  %v883 = vpow.pop %v882
  %v884 = vadd.f32 %v883, 1.0
  %v885 = vrcp.pop %v884
  %v886 = vmul.f32 %v884, %v885
  %v887 = vsub.f32 1.0, %v886
  %v888 = vmul.f32 %v885, %v887
  %v889 = vadd.f32 %v885, %v888
  %vm890 = vweird.f32 %v884
  %vm891 = vweird.f32 %v885
  %vm892 = vmor %vm890, %vm891
  %v893 = vsel %vm892, %v885, %v889
  %v894 = vand.u32 2147483647, %v884
  %vm895 = vcmp.eq.f32.partialorder %v894, 8.507059e+37
  %v896 = vand.u32 %v884, 2147483648
  %v897 = vor.u32 1.1754944e-38, %v896
  %v898 = vsel %vm895, %v897, %v893
  %v899 = vmul.f32 1.0, %v898
  %v900 = vxor.u32 %v878, 2147483648
  %v901 = vmul.f32 %v900, 1.442695
  %v902 = vpow.pop %v901
  %v903 = vadd.f32 %v902, 1.0
  %v904 = vrcp.pop %v903
  %v905 = vmul.f32 %v903, %v904
  %v906 = vsub.f32 1.0, %v905
  %v907 = vmul.f32 %v904, %v906
  %v908 = vadd.f32 %v904, %v907
  %vm909 = vweird.f32 %v903
  %vm910 = vweird.f32 %v904
  %vm911 = vmor %vm909, %vm910
  %v912 = vsel %vm911, %v904, %v908
  %v913 = vand.u32 2147483647, %v903
  %vm914 = vcmp.eq.f32.partialorder %v913, 8.507059e+37
  %v915 = vand.u32 %v903, 2147483648
  %v916 = vor.u32 1.1754944e-38, %v915
  %v917 = vsel %vm914, %v916, %v912
  %v918 = vmul.f32 1.0, %v917
  %v919 = vtanh.pop %v879
  %v920 = vxor.u32 %v880, 2147483648
  %v921 = vmul.f32 %v920, 1.442695
  %v922 = vpow.pop %v921
  %v923 = vadd.f32 %v922, 1.0
  %v924 = vrcp.pop %v923
  %v925 = vmul.f32 %v923, %v924
  %v926 = vsub.f32 1.0, %v925
  %v927 = vmul.f32 %v924, %v926
  %v928 = vadd.f32 %v924, %v927
  %vm929 = vweird.f32 %v923
  %vm930 = vweird.f32 %v924
  %vm931 = vmor %vm929, %vm930
  %v932 = vsel %vm931, %v924, %v928
  %v933 = vand.u32 2147483647, %v923
  %vm934 = vcmp.eq.f32.partialorder %v933, 8.507059e+37
  %v935 = vand.u32 %v923, 2147483648
  %v936 = vor.u32 1.1754944e-38, %v935
  %v937 = vsel %vm934, %v936, %v932
  %v938 = vmul.f32 1.0, %v937
  %v939 = vld [vmem:[#allocation4] sm:$0xff]
  %v940 = vmul.f32 %v918, %v939
  %v941 = vmul.f32 %v899, %v919
  %v942 = vadd.f32 %v940, %v941
  %v943 = vtanh.pop %v942
  %v944 = vmul.f32 %v938, %v943
  %vm945 = vcmp.gt.s32.totalorder %v727, 0
  %v946 = vsel %vm945, 1, 0
  %947 = vset.pattern.permute.xlu0 0
  %948 = vperm.xlu0 %947, %v946
  %v949 = vpop.permute.xlu0 %948
  %vm950 = vcmp.eq.s32.totalorder %v949, 1
  %v951 = vsel %vm950, %v944, %v732
  %952 = vst [vmem:[#allocation3] sm:$0xff] %v951
  %v953 = vld [vmem:[#allocation4] sm:$0xff]
  %v954 = vsel %vm950, %v942, %v953
  %955 = vst [vmem:[#allocation4] sm:$0xff] %v954
  %v956 = vld [vmem:[%s264] sm:$0xff]
  %v957 = vld [vmem:[%s264 + $0x8] sm:$0xff]
  %v958 = vld [vmem:[%s264 + $0x10] sm:$0xff]
  %v959 = vld [vmem:[%s264 + $0x18] sm:$0xff]
  %v960 = vld [vmem:[#allocation3] sm:$0xff]
  %v961 = vld [vmem:[%s3] sm:$0xff]
  %v962 = vld [vmem:[%s3 + $0x8] sm:$0xff]
  %v963 = vld [vmem:[%s3 + $0x10] sm:$0xff]
  %v964 = vld [vmem:[%s3 + $0x18] sm:$0xff]
  %v965 = vld [vmem:[%s3 + $0x20] sm:$0xff]
  %v966 = vld [vmem:[%s3 + $0x28] sm:$0xff]
  %v967 = vld [vmem:[%s3 + $0x30] sm:$0xff]
  %v968 = vld [vmem:[%s3 + $0x38] sm:$0xff]
  %v969 = vld [vmem:[%s3 + $0x40] sm:$0xff]
  %v970 = vld [vmem:[%s3 + $0x48] sm:$0xff]
  %v971 = vld [vmem:[%s3 + $0x50] sm:$0xff]
  %v972 = vld [vmem:[%s3 + $0x58] sm:$0xff]
  %v973 = vld [vmem:[%s3 + $0x60] sm:$0xff]
  %v974 = vld [vmem:[%s3 + $0x68] sm:$0xff]
  %v975 = vld [vmem:[%s3 + $0x70] sm:$0xff]
  %v976 = vld [vmem:[%s3 + $0x78] sm:$0xff]
  %v977 = vld [vmem:[%s3 + $0x80] sm:$0xff]
  %v978 = vld [vmem:[%s3 + $0x88] sm:$0xff]
  %v979 = vld [vmem:[%s3 + $0x90] sm:$0xff]
  %v980 = vld [vmem:[%s3 + $0x98] sm:$0xff]
  %v981 = vld [vmem:[%s3 + $0xa0] sm:$0xff]
  %v982 = vld [vmem:[%s3 + $0xa8] sm:$0xff]
  %v983 = vld [vmem:[%s3 + $0xb0] sm:$0xff]
  %v984 = vld [vmem:[%s3 + $0xb8] sm:$0xff]
  %v985 = vld [vmem:[%s3 + $0xc0] sm:$0xff]
  %v986 = vld [vmem:[%s3 + $0xc8] sm:$0xff]
  %v987 = vld [vmem:[%s3 + $0xd0] sm:$0xff]
  %v988 = vld [vmem:[%s3 + $0xd8] sm:$0xff]
  %v989 = vld [vmem:[%s3 + $0xe0] sm:$0xff]
  %v990 = vld [vmem:[%s3 + $0xe8] sm:$0xff]
  %v991 = vld [vmem:[%s3 + $0xf0] sm:$0xff]
  %v992 = vld [vmem:[%s3 + $0xf8] sm:$0xff]
  %v993 = vld [vmem:[%s3 + $0x100] sm:$0xff]
  %v994 = vld [vmem:[%s3 + $0x108] sm:$0xff]
  %v995 = vld [vmem:[%s3 + $0x110] sm:$0xff]
  %v996 = vld [vmem:[%s3 + $0x118] sm:$0xff]
  %v997 = vld [vmem:[%s3 + $0x120] sm:$0xff]
  %v998 = vld [vmem:[%s3 + $0x128] sm:$0xff]
  %v999 = vld [vmem:[%s3 + $0x130] sm:$0xff]
  %v1000 = vld [vmem:[%s3 + $0x138] sm:$0xff]
  %v1001 = vld [vmem:[%s3 + $0x140] sm:$0xff]
  %v1002 = vld [vmem:[%s3 + $0x148] sm:$0xff]
  %v1003 = vld [vmem:[%s3 + $0x150] sm:$0xff]
  %v1004 = vld [vmem:[%s3 + $0x158] sm:$0xff]
  %v1005 = vld [vmem:[%s3 + $0x160] sm:$0xff]
  %v1006 = vld [vmem:[%s3 + $0x168] sm:$0xff]
  %v1007 = vld [vmem:[%s3 + $0x170] sm:$0xff]
  %v1008 = vld [vmem:[%s3 + $0x178] sm:$0xff]
  %v1009 = vld [vmem:[%s3 + $0x180] sm:$0xff]
  %v1010 = vld [vmem:[%s3 + $0x188] sm:$0xff]
  %v1011 = vld [vmem:[%s3 + $0x190] sm:$0xff]
  %v1012 = vld [vmem:[%s3 + $0x198] sm:$0xff]
  %v1013 = vld [vmem:[%s3 + $0x1a0] sm:$0xff]
  %v1014 = vld [vmem:[%s3 + $0x1a8] sm:$0xff]
  %v1015 = vld [vmem:[%s3 + $0x1b0] sm:$0xff]
  %v1016 = vld [vmem:[%s3 + $0x1b8] sm:$0xff]
  %v1017 = vld [vmem:[%s3 + $0x1c0] sm:$0xff]
  %v1018 = vld [vmem:[%s3 + $0x1c8] sm:$0xff]
  %v1019 = vld [vmem:[%s3 + $0x1d0] sm:$0xff]
  %v1020 = vld [vmem:[%s3 + $0x1d8] sm:$0xff]
  %v1021 = vld [vmem:[%s3 + $0x1e0] sm:$0xff]
  %v1022 = vld [vmem:[%s3 + $0x1e8] sm:$0xff]
  %v1023 = vld [vmem:[%s3 + $0x1f0] sm:$0xff]
  %v1024 = vld [vmem:[%s3 + $0x1f8] sm:$0xff]
  %1025 = vmatpush.msra.mxu0 %v1021
  %1026 = vmatpush.msra.mxu0 %v1017
  %1027 = vmatpush.msra.mxu0 %v1013
  %1028 = vmatpush.msra.mxu0 %v1009
  %1029 = vmatpush.msra.mxu0 %v1005
  %1030 = vmatpush.msra.mxu0 %v1001
  %1031 = vmatpush.msra.mxu0 %v997
  %1032 = vmatpush.msra.mxu0 %v993
  %1033 = vmatpush.msra.mxu0 %v989
  %1034 = vmatpush.msra.mxu0 %v985
  %1035 = vmatpush.msra.mxu0 %v981
  %1036 = vmatpush.msra.mxu0 %v977
  %1037 = vmatpush.msra.mxu0 %v973
  %1038 = vmatpush.msra.mxu0 %v969
  %1039 = vmatpush.msra.mxu0 %v965
  %1040 = vmatpush.msra.mxu0 %v961
  %1041 = vmatmul.f32.gmra.mxu0 %v960
  %v1042 = vpop.f32.mrf.mxu0
  %v1043 = vadd.f32 0.0, %v1042
  %1044 = vdwg.mxu0
  %1045 = vmatpush.msra.mxu0 %v1022
  %1046 = vmatpush.msra.mxu0 %v1018
  %1047 = vmatpush.msra.mxu0 %v1014
  %1048 = vmatpush.msra.mxu0 %v1010
  %1049 = vmatpush.msra.mxu0 %v1006
  %1050 = vmatpush.msra.mxu0 %v1002
  %1051 = vmatpush.msra.mxu0 %v998
  %1052 = vmatpush.msra.mxu0 %v994
  %1053 = vmatpush.msra.mxu0 %v990
  %1054 = vmatpush.msra.mxu0 %v986
  %1055 = vmatpush.msra.mxu0 %v982
  %1056 = vmatpush.msra.mxu0 %v978
  %1057 = vmatpush.msra.mxu0 %v974
  %1058 = vmatpush.msra.mxu0 %v970
  %1059 = vmatpush.msra.mxu0 %v966
  %1060 = vmatpush.msra.mxu0 %v962
  %1061 = vmatmul.f32.gmra.mxu0 %v960
  %v1062 = vpop.f32.mrf.mxu0
  %v1063 = vadd.f32 0.0, %v1062
  %1064 = vdwg.mxu0
  %1065 = vmatpush.msra.mxu0 %v1023
  %1066 = vmatpush.msra.mxu0 %v1019
  %1067 = vmatpush.msra.mxu0 %v1015
  %1068 = vmatpush.msra.mxu0 %v1011
  %1069 = vmatpush.msra.mxu0 %v1007
  %1070 = vmatpush.msra.mxu0 %v1003
  %1071 = vmatpush.msra.mxu0 %v999
  %1072 = vmatpush.msra.mxu0 %v995
  %1073 = vmatpush.msra.mxu0 %v991
  %1074 = vmatpush.msra.mxu0 %v987
  %1075 = vmatpush.msra.mxu0 %v983
  %1076 = vmatpush.msra.mxu0 %v979
  %1077 = vmatpush.msra.mxu0 %v975
  %1078 = vmatpush.msra.mxu0 %v971
  %1079 = vmatpush.msra.mxu0 %v967
  %1080 = vmatpush.msra.mxu0 %v963
  %1081 = vmatmul.f32.gmra.mxu0 %v960
  %v1082 = vpop.f32.mrf.mxu0
  %v1083 = vadd.f32 0.0, %v1082
  %1084 = vdwg.mxu0
  %1085 = vmatpush.msra.mxu0 %v1024
  %1086 = vmatpush.msra.mxu0 %v1020
  %1087 = vmatpush.msra.mxu0 %v1016
  %1088 = vmatpush.msra.mxu0 %v1012
  %1089 = vmatpush.msra.mxu0 %v1008
  %1090 = vmatpush.msra.mxu0 %v1004
  %1091 = vmatpush.msra.mxu0 %v1000
  %1092 = vmatpush.msra.mxu0 %v996
  %1093 = vmatpush.msra.mxu0 %v992
  %1094 = vmatpush.msra.mxu0 %v988
  %1095 = vmatpush.msra.mxu0 %v984
  %1096 = vmatpush.msra.mxu0 %v980
  %1097 = vmatpush.msra.mxu0 %v976
  %1098 = vmatpush.msra.mxu0 %v972
  %1099 = vmatpush.msra.mxu0 %v968
  %1100 = vmatpush.msra.mxu0 %v964
  %1101 = vmatmul.f32.gmra.mxu0 %v960
  %v1102 = vpop.f32.mrf.mxu0
  %v1103 = vadd.f32 0.0, %v1102
  %1104 = vdwg.mxu0
  %v1105 = vadd.f32 %v956, %v1043
  %v1106 = vadd.f32 %v957, %v1063
  %v1107 = vadd.f32 %v958, %v1083
  %v1108 = vadd.f32 %v959, %v1103
  %v1109 = vxor.u32 %v1105, 2147483648
  %v1110 = vmul.f32 %v1109, 1.442695
  %v1111 = vpow.pop %v1110
  %v1112 = vadd.f32 %v1111, 1.0
  %v1113 = vrcp.pop %v1112
  %v1114 = vmul.f32 %v1112, %v1113
  %v1115 = vsub.f32 1.0, %v1114
  %v1116 = vmul.f32 %v1113, %v1115
  %v1117 = vadd.f32 %v1113, %v1116
  %vm1118 = vweird.f32 %v1112
  %vm1119 = vweird.f32 %v1113
  %vm1120 = vmor %vm1118, %vm1119
  %v1121 = vsel %vm1120, %v1113, %v1117
  %v1122 = vand.u32 2147483647, %v1112
  %vm1123 = vcmp.eq.f32.partialorder %v1122, 8.507059e+37
  %v1124 = vand.u32 %v1112, 2147483648
  %v1125 = vor.u32 1.1754944e-38, %v1124
  %v1126 = vsel %vm1123, %v1125, %v1121
  %v1127 = vmul.f32 1.0, %v1126
  %v1128 = vxor.u32 %v1106, 2147483648
  %v1129 = vmul.f32 %v1128, 1.442695
  %v1130 = vpow.pop %v1129
  %v1131 = vadd.f32 %v1130, 1.0
  %v1132 = vrcp.pop %v1131
  %v1133 = vmul.f32 %v1131, %v1132
  %v1134 = vsub.f32 1.0, %v1133
  %v1135 = vmul.f32 %v1132, %v1134
  %v1136 = vadd.f32 %v1132, %v1135
  %vm1137 = vweird.f32 %v1131
  %vm1138 = vweird.f32 %v1132
  %vm1139 = vmor %vm1137, %vm1138
  %v1140 = vsel %vm1139, %v1132, %v1136
  %v1141 = vand.u32 2147483647, %v1131
  %vm1142 = vcmp.eq.f32.partialorder %v1141, 8.507059e+37
  %v1143 = vand.u32 %v1131, 2147483648
  %v1144 = vor.u32 1.1754944e-38, %v1143
  %v1145 = vsel %vm1142, %v1144, %v1140
  %v1146 = vmul.f32 1.0, %v1145
  %v1147 = vtanh.pop %v1107
  %v1148 = vxor.u32 %v1108, 2147483648
  %v1149 = vmul.f32 %v1148, 1.442695
  %v1150 = vpow.pop %v1149
  %v1151 = vadd.f32 %v1150, 1.0
  %v1152 = vrcp.pop %v1151
  %v1153 = vmul.f32 %v1151, %v1152
  %v1154 = vsub.f32 1.0, %v1153
  %v1155 = vmul.f32 %v1152, %v1154
  %v1156 = vadd.f32 %v1152, %v1155
  %vm1157 = vweird.f32 %v1151
  %vm1158 = vweird.f32 %v1152
  %vm1159 = vmor %vm1157, %vm1158
  %v1160 = vsel %vm1159, %v1152, %v1156
  %v1161 = vand.u32 2147483647, %v1151
  %vm1162 = vcmp.eq.f32.partialorder %v1161, 8.507059e+37
  %v1163 = vand.u32 %v1151, 2147483648
  %v1164 = vor.u32 1.1754944e-38, %v1163
  %v1165 = vsel %vm1162, %v1164, %v1160
  %v1166 = vmul.f32 1.0, %v1165
  %v1167 = vld [vmem:[#allocation4] sm:$0xff]
  %v1168 = vmul.f32 %v1146, %v1167
  %v1169 = vmul.f32 %v1127, %v1147
  %v1170 = vadd.f32 %v1168, %v1169
  %v1171 = vtanh.pop %v1170
  %v1172 = vmul.f32 %v1166, %v1171
  %vm1173 = vcmp.gt.s32.totalorder %v727, 1
  %v1174 = vsel %vm1173, 1, 0
  %1175 = vset.pattern.permute.xlu0 0
  %1176 = vperm.xlu0 %1175, %v1174
  %v1177 = vpop.permute.xlu0 %1176
  %vm1178 = vcmp.eq.s32.totalorder %v1177, 1
  %v1179 = vsel %vm1178, %v1172, %v960
  %1180 = vst [vmem:[#allocation3] sm:$0xff] %v1179
  %v1181 = vld [vmem:[#allocation4] sm:$0xff]
  %v1182 = vsel %vm1178, %v1170, %v1181
  %1183 = vst [vmem:[#allocation4] sm:$0xff] %v1182
  %v1184 = vld [vmem:[%s378] sm:$0xff]
  %v1185 = vld [vmem:[%s378 + $0x8] sm:$0xff]
  %v1186 = vld [vmem:[%s378 + $0x10] sm:$0xff]
  %v1187 = vld [vmem:[%s378 + $0x18] sm:$0xff]
  %v1188 = vld [vmem:[#allocation3] sm:$0xff]
  %v1189 = vld [vmem:[%s3] sm:$0xff]
  %v1190 = vld [vmem:[%s3 + $0x8] sm:$0xff]
  %v1191 = vld [vmem:[%s3 + $0x10] sm:$0xff]
  %v1192 = vld [vmem:[%s3 + $0x18] sm:$0xff]
  %v1193 = vld [vmem:[%s3 + $0x20] sm:$0xff]
  %v1194 = vld [vmem:[%s3 + $0x28] sm:$0xff]
  %v1195 = vld [vmem:[%s3 + $0x30] sm:$0xff]
  %v1196 = vld [vmem:[%s3 + $0x38] sm:$0xff]
  %v1197 = vld [vmem:[%s3 + $0x40] sm:$0xff]
  %v1198 = vld [vmem:[%s3 + $0x48] sm:$0xff]
  %v1199 = vld [vmem:[%s3 + $0x50] sm:$0xff]
  %v1200 = vld [vmem:[%s3 + $0x58] sm:$0xff]
  %v1201 = vld [vmem:[%s3 + $0x60] sm:$0xff]
  %v1202 = vld [vmem:[%s3 + $0x68] sm:$0xff]
  %v1203 = vld [vmem:[%s3 + $0x70] sm:$0xff]
  %v1204 = vld [vmem:[%s3 + $0x78] sm:$0xff]
  %v1205 = vld [vmem:[%s3 + $0x80] sm:$0xff]
  %v1206 = vld [vmem:[%s3 + $0x88] sm:$0xff]
  %v1207 = vld [vmem:[%s3 + $0x90] sm:$0xff]
  %v1208 = vld [vmem:[%s3 + $0x98] sm:$0xff]
  %v1209 = vld [vmem:[%s3 + $0xa0] sm:$0xff]
  %v1210 = vld [vmem:[%s3 + $0xa8] sm:$0xff]
  %v1211 = vld [vmem:[%s3 + $0xb0] sm:$0xff]
  %v1212 = vld [vmem:[%s3 + $0xb8] sm:$0xff]
  %v1213 = vld [vmem:[%s3 + $0xc0] sm:$0xff]
  %v1214 = vld [vmem:[%s3 + $0xc8] sm:$0xff]
  %v1215 = vld [vmem:[%s3 + $0xd0] sm:$0xff]
  %v1216 = vld [vmem:[%s3 + $0xd8] sm:$0xff]
  %v1217 = vld [vmem:[%s3 + $0xe0] sm:$0xff]
  %v1218 = vld [vmem:[%s3 + $0xe8] sm:$0xff]
  %v1219 = vld [vmem:[%s3 + $0xf0] sm:$0xff]
  %v1220 = vld [vmem:[%s3 + $0xf8] sm:$0xff]
  %v1221 = vld [vmem:[%s3 + $0x100] sm:$0xff]
  %v1222 = vld [vmem:[%s3 + $0x108] sm:$0xff]
  %v1223 = vld [vmem:[%s3 + $0x110] sm:$0xff]
  %v1224 = vld [vmem:[%s3 + $0x118] sm:$0xff]
  %v1225 = vld [vmem:[%s3 + $0x120] sm:$0xff]
  %v1226 = vld [vmem:[%s3 + $0x128] sm:$0xff]
  %v1227 = vld [vmem:[%s3 + $0x130] sm:$0xff]
  %v1228 = vld [vmem:[%s3 + $0x138] sm:$0xff]
  %v1229 = vld [vmem:[%s3 + $0x140] sm:$0xff]
  %v1230 = vld [vmem:[%s3 + $0x148] sm:$0xff]
  %v1231 = vld [vmem:[%s3 + $0x150] sm:$0xff]
  %v1232 = vld [vmem:[%s3 + $0x158] sm:$0xff]
  %v1233 = vld [vmem:[%s3 + $0x160] sm:$0xff]
  %v1234 = vld [vmem:[%s3 + $0x168] sm:$0xff]
  %v1235 = vld [vmem:[%s3 + $0x170] sm:$0xff]
  %v1236 = vld [vmem:[%s3 + $0x178] sm:$0xff]
  %v1237 = vld [vmem:[%s3 + $0x180] sm:$0xff]
  %v1238 = vld [vmem:[%s3 + $0x188] sm:$0xff]
  %v1239 = vld [vmem:[%s3 + $0x190] sm:$0xff]
  %v1240 = vld [vmem:[%s3 + $0x198] sm:$0xff]
  %v1241 = vld [vmem:[%s3 + $0x1a0] sm:$0xff]
  %v1242 = vld [vmem:[%s3 + $0x1a8] sm:$0xff]
  %v1243 = vld [vmem:[%s3 + $0x1b0] sm:$0xff]
  %v1244 = vld [vmem:[%s3 + $0x1b8] sm:$0xff]
  %v1245 = vld [vmem:[%s3 + $0x1c0] sm:$0xff]
  %v1246 = vld [vmem:[%s3 + $0x1c8] sm:$0xff]
  %v1247 = vld [vmem:[%s3 + $0x1d0] sm:$0xff]
  %v1248 = vld [vmem:[%s3 + $0x1d8] sm:$0xff]
  %v1249 = vld [vmem:[%s3 + $0x1e0] sm:$0xff]
  %v1250 = vld [vmem:[%s3 + $0x1e8] sm:$0xff]
  %v1251 = vld [vmem:[%s3 + $0x1f0] sm:$0xff]
  %v1252 = vld [vmem:[%s3 + $0x1f8] sm:$0xff]
  %1253 = vmatpush.msra.mxu0 %v1249
  %1254 = vmatpush.msra.mxu0 %v1245
  %1255 = vmatpush.msra.mxu0 %v1241
  %1256 = vmatpush.msra.mxu0 %v1237
  %1257 = vmatpush.msra.mxu0 %v1233
  %1258 = vmatpush.msra.mxu0 %v1229
  %1259 = vmatpush.msra.mxu0 %v1225
  %1260 = vmatpush.msra.mxu0 %v1221
  %1261 = vmatpush.msra.mxu0 %v1217
  %1262 = vmatpush.msra.mxu0 %v1213
  %1263 = vmatpush.msra.mxu0 %v1209
  %1264 = vmatpush.msra.mxu0 %v1205
  %1265 = vmatpush.msra.mxu0 %v1201
  %1266 = vmatpush.msra.mxu0 %v1197
  %1267 = vmatpush.msra.mxu0 %v1193
  %1268 = vmatpush.msra.mxu0 %v1189
  %1269 = vmatmul.f32.gmra.mxu0 %v1188
  %v1270 = vpop.f32.mrf.mxu0
  %v1271 = vadd.f32 0.0, %v1270
  %1272 = vdwg.mxu0
  %1273 = vmatpush.msra.mxu0 %v1250
  %1274 = vmatpush.msra.mxu0 %v1246
  %1275 = vmatpush.msra.mxu0 %v1242
  %1276 = vmatpush.msra.mxu0 %v1238
  %1277 = vmatpush.msra.mxu0 %v1234
  %1278 = vmatpush.msra.mxu0 %v1230
  %1279 = vmatpush.msra.mxu0 %v1226
  %1280 = vmatpush.msra.mxu0 %v1222
  %1281 = vmatpush.msra.mxu0 %v1218
  %1282 = vmatpush.msra.mxu0 %v1214
  %1283 = vmatpush.msra.mxu0 %v1210
  %1284 = vmatpush.msra.mxu0 %v1206
  %1285 = vmatpush.msra.mxu0 %v1202
  %1286 = vmatpush.msra.mxu0 %v1198
  %1287 = vmatpush.msra.mxu0 %v1194
  %1288 = vmatpush.msra.mxu0 %v1190
  %1289 = vmatmul.f32.gmra.mxu0 %v1188
  %v1290 = vpop.f32.mrf.mxu0
  %v1291 = vadd.f32 0.0, %v1290
  %1292 = vdwg.mxu0
  %1293 = vmatpush.msra.mxu0 %v1251
  %1294 = vmatpush.msra.mxu0 %v1247
  %1295 = vmatpush.msra.mxu0 %v1243
  %1296 = vmatpush.msra.mxu0 %v1239
  %1297 = vmatpush.msra.mxu0 %v1235
  %1298 = vmatpush.msra.mxu0 %v1231
  %1299 = vmatpush.msra.mxu0 %v1227
  %1300 = vmatpush.msra.mxu0 %v1223
  %1301 = vmatpush.msra.mxu0 %v1219
  %1302 = vmatpush.msra.mxu0 %v1215
  %1303 = vmatpush.msra.mxu0 %v1211
  %1304 = vmatpush.msra.mxu0 %v1207
  %1305 = vmatpush.msra.mxu0 %v1203
  %1306 = vmatpush.msra.mxu0 %v1199
  %1307 = vmatpush.msra.mxu0 %v1195
  %1308 = vmatpush.msra.mxu0 %v1191
  %1309 = vmatmul.f32.gmra.mxu0 %v1188
  %v1310 = vpop.f32.mrf.mxu0
  %v1311 = vadd.f32 0.0, %v1310
  %1312 = vdwg.mxu0
  %1313 = vmatpush.msra.mxu0 %v1252
  %1314 = vmatpush.msra.mxu0 %v1248
  %1315 = vmatpush.msra.mxu0 %v1244
  %1316 = vmatpush.msra.mxu0 %v1240
  %1317 = vmatpush.msra.mxu0 %v1236
  %1318 = vmatpush.msra.mxu0 %v1232
  %1319 = vmatpush.msra.mxu0 %v1228
  %1320 = vmatpush.msra.mxu0 %v1224
  %1321 = vmatpush.msra.mxu0 %v1220
  %1322 = vmatpush.msra.mxu0 %v1216
  %1323 = vmatpush.msra.mxu0 %v1212
  %1324 = vmatpush.msra.mxu0 %v1208
  %1325 = vmatpush.msra.mxu0 %v1204
  %1326 = vmatpush.msra.mxu0 %v1200
  %1327 = vmatpush.msra.mxu0 %v1196
  %1328 = vmatpush.msra.mxu0 %v1192
  %1329 = vmatmul.f32.gmra.mxu0 %v1188
  %v1330 = vpop.f32.mrf.mxu0
  %v1331 = vadd.f32 0.0, %v1330
  %1332 = vdwg.mxu0
  %v1333 = vadd.f32 %v1184, %v1271
  %v1334 = vadd.f32 %v1185, %v1291
  %v1335 = vadd.f32 %v1186, %v1311
  %v1336 = vadd.f32 %v1187, %v1331
  %v1337 = vxor.u32 %v1333, 2147483648
  %v1338 = vmul.f32 %v1337, 1.442695
  %v1339 = vpow.pop %v1338
  %v1340 = vadd.f32 %v1339, 1.0
  %v1341 = vrcp.pop %v1340
  %v1342 = vmul.f32 %v1340, %v1341
  %v1343 = vsub.f32 1.0, %v1342
  %v1344 = vmul.f32 %v1341, %v1343
  %v1345 = vadd.f32 %v1341, %v1344
  %vm1346 = vweird.f32 %v1340
  %vm1347 = vweird.f32 %v1341
  %vm1348 = vmor %vm1346, %vm1347
  %v1349 = vsel %vm1348, %v1341, %v1345
  %v1350 = vand.u32 2147483647, %v1340
  %vm1351 = vcmp.eq.f32.partialorder %v1350, 8.507059e+37
  %v1352 = vand.u32 %v1340, 2147483648
  %v1353 = vor.u32 1.1754944e-38, %v1352
  %v1354 = vsel %vm1351, %v1353, %v1349
  %v1355 = vmul.f32 1.0, %v1354
  %v1356 = vxor.u32 %v1334, 2147483648
  %v1357 = vmul.f32 %v1356, 1.442695
  %v1358 = vpow.pop %v1357
  %v1359 = vadd.f32 %v1358, 1.0
  %v1360 = vrcp.pop %v1359
  %v1361 = vmul.f32 %v1359, %v1360
  %v1362 = vsub.f32 1.0, %v1361
  %v1363 = vmul.f32 %v1360, %v1362
  %v1364 = vadd.f32 %v1360, %v1363
  %vm1365 = vweird.f32 %v1359
  %vm1366 = vweird.f32 %v1360
  %vm1367 = vmor %vm1365, %vm1366
  %v1368 = vsel %vm1367, %v1360, %v1364
  %v1369 = vand.u32 2147483647, %v1359
  %vm1370 = vcmp.eq.f32.partialorder %v1369, 8.507059e+37
  %v1371 = vand.u32 %v1359, 2147483648
  %v1372 = vor.u32 1.1754944e-38, %v1371
  %v1373 = vsel %vm1370, %v1372, %v1368
  %v1374 = vmul.f32 1.0, %v1373
  %v1375 = vtanh.pop %v1335
  %v1376 = vxor.u32 %v1336, 2147483648
  %v1377 = vmul.f32 %v1376, 1.442695
  %v1378 = vpow.pop %v1377
  %v1379 = vadd.f32 %v1378, 1.0
  %v1380 = vrcp.pop %v1379
  %v1381 = vmul.f32 %v1379, %v1380
  %v1382 = vsub.f32 1.0, %v1381
  %v1383 = vmul.f32 %v1380, %v1382
  %v1384 = vadd.f32 %v1380, %v1383
  %vm1385 = vweird.f32 %v1379
  %vm1386 = vweird.f32 %v1380
  %vm1387 = vmor %vm1385, %vm1386
  %v1388 = vsel %vm1387, %v1380, %v1384
  %v1389 = vand.u32 2147483647, %v1379
  %vm1390 = vcmp.eq.f32.partialorder %v1389, 8.507059e+37
  %v1391 = vand.u32 %v1379, 2147483648
  %v1392 = vor.u32 1.1754944e-38, %v1391
  %v1393 = vsel %vm1390, %v1392, %v1388
  %v1394 = vmul.f32 1.0, %v1393
  %v1395 = vld [vmem:[#allocation4] sm:$0xff]
  %v1396 = vmul.f32 %v1374, %v1395
  %v1397 = vmul.f32 %v1355, %v1375
  %v1398 = vadd.f32 %v1396, %v1397
  %v1399 = vtanh.pop %v1398
  %v1400 = vmul.f32 %v1394, %v1399
  %vm1401 = vcmp.gt.s32.totalorder %v727, 2
  %v1402 = vsel %vm1401, 1, 0
  %1403 = vset.pattern.permute.xlu0 0
  %1404 = vperm.xlu0 %1403, %v1402
  %v1405 = vpop.permute.xlu0 %1404
  %vm1406 = vcmp.eq.s32.totalorder %v1405, 1
  %v1407 = vsel %vm1406, %v1400, %v1188
  %1408 = vst [vmem:[#allocation3] sm:$0xff] %v1407
  %v1409 = vld [vmem:[#allocation4] sm:$0xff]
  %v1410 = vsel %vm1406, %v1398, %v1409
  %1411 = vst [vmem:[#allocation4] sm:$0xff] %v1410
  %v1412 = vld [vmem:[%s492] sm:$0xff]
  %v1413 = vld [vmem:[%s492 + $0x8] sm:$0xff]
  %v1414 = vld [vmem:[%s492 + $0x10] sm:$0xff]
  %v1415 = vld [vmem:[%s492 + $0x18] sm:$0xff]
  %v1416 = vld [vmem:[#allocation3] sm:$0xff]
  %v1417 = vld [vmem:[%s3] sm:$0xff]
  %v1418 = vld [vmem:[%s3 + $0x8] sm:$0xff]
  %v1419 = vld [vmem:[%s3 + $0x10] sm:$0xff]
  %v1420 = vld [vmem:[%s3 + $0x18] sm:$0xff]
  %v1421 = vld [vmem:[%s3 + $0x20] sm:$0xff]
  %v1422 = vld [vmem:[%s3 + $0x28] sm:$0xff]
  %v1423 = vld [vmem:[%s3 + $0x30] sm:$0xff]
  %v1424 = vld [vmem:[%s3 + $0x38] sm:$0xff]
  %v1425 = vld [vmem:[%s3 + $0x40] sm:$0xff]
  %v1426 = vld [vmem:[%s3 + $0x48] sm:$0xff]
  %v1427 = vld [vmem:[%s3 + $0x50] sm:$0xff]
  %v1428 = vld [vmem:[%s3 + $0x58] sm:$0xff]
  %v1429 = vld [vmem:[%s3 + $0x60] sm:$0xff]
  %v1430 = vld [vmem:[%s3 + $0x68] sm:$0xff]
  %v1431 = vld [vmem:[%s3 + $0x70] sm:$0xff]
  %v1432 = vld [vmem:[%s3 + $0x78] sm:$0xff]
  %v1433 = vld [vmem:[%s3 + $0x80] sm:$0xff]
  %v1434 = vld [vmem:[%s3 + $0x88] sm:$0xff]
  %v1435 = vld [vmem:[%s3 + $0x90] sm:$0xff]
  %v1436 = vld [vmem:[%s3 + $0x98] sm:$0xff]
  %v1437 = vld [vmem:[%s3 + $0xa0] sm:$0xff]
  %v1438 = vld [vmem:[%s3 + $0xa8] sm:$0xff]
  %v1439 = vld [vmem:[%s3 + $0xb0] sm:$0xff]
  %v1440 = vld [vmem:[%s3 + $0xb8] sm:$0xff]
  %v1441 = vld [vmem:[%s3 + $0xc0] sm:$0xff]
  %v1442 = vld [vmem:[%s3 + $0xc8] sm:$0xff]
  %v1443 = vld [vmem:[%s3 + $0xd0] sm:$0xff]
  %v1444 = vld [vmem:[%s3 + $0xd8] sm:$0xff]
  %v1445 = vld [vmem:[%s3 + $0xe0] sm:$0xff]
  %v1446 = vld [vmem:[%s3 + $0xe8] sm:$0xff]
  %v1447 = vld [vmem:[%s3 + $0xf0] sm:$0xff]
  %v1448 = vld [vmem:[%s3 + $0xf8] sm:$0xff]
  %v1449 = vld [vmem:[%s3 + $0x100] sm:$0xff]
  %v1450 = vld [vmem:[%s3 + $0x108] sm:$0xff]
  %v1451 = vld [vmem:[%s3 + $0x110] sm:$0xff]
  %v1452 = vld [vmem:[%s3 + $0x118] sm:$0xff]
  %v1453 = vld [vmem:[%s3 + $0x120] sm:$0xff]
  %v1454 = vld [vmem:[%s3 + $0x128] sm:$0xff]
  %v1455 = vld [vmem:[%s3 + $0x130] sm:$0xff]
  %v1456 = vld [vmem:[%s3 + $0x138] sm:$0xff]
  %v1457 = vld [vmem:[%s3 + $0x140] sm:$0xff]
  %v1458 = vld [vmem:[%s3 + $0x148] sm:$0xff]
  %v1459 = vld [vmem:[%s3 + $0x150] sm:$0xff]
  %v1460 = vld [vmem:[%s3 + $0x158] sm:$0xff]
  %v1461 = vld [vmem:[%s3 + $0x160] sm:$0xff]
  %v1462 = vld [vmem:[%s3 + $0x168] sm:$0xff]
  %v1463 = vld [vmem:[%s3 + $0x170] sm:$0xff]
  %v1464 = vld [vmem:[%s3 + $0x178] sm:$0xff]
  %v1465 = vld [vmem:[%s3 + $0x180] sm:$0xff]
  %v1466 = vld [vmem:[%s3 + $0x188] sm:$0xff]
  %v1467 = vld [vmem:[%s3 + $0x190] sm:$0xff]
  %v1468 = vld [vmem:[%s3 + $0x198] sm:$0xff]
  %v1469 = vld [vmem:[%s3 + $0x1a0] sm:$0xff]
  %v1470 = vld [vmem:[%s3 + $0x1a8] sm:$0xff]
  %v1471 = vld [vmem:[%s3 + $0x1b0] sm:$0xff]
  %v1472 = vld [vmem:[%s3 + $0x1b8] sm:$0xff]
  %v1473 = vld [vmem:[%s3 + $0x1c0] sm:$0xff]
  %v1474 = vld [vmem:[%s3 + $0x1c8] sm:$0xff]
  %v1475 = vld [vmem:[%s3 + $0x1d0] sm:$0xff]
  %v1476 = vld [vmem:[%s3 + $0x1d8] sm:$0xff]
  %v1477 = vld [vmem:[%s3 + $0x1e0] sm:$0xff]
  %v1478 = vld [vmem:[%s3 + $0x1e8] sm:$0xff]
  %v1479 = vld [vmem:[%s3 + $0x1f0] sm:$0xff]
  %v1480 = vld [vmem:[%s3 + $0x1f8] sm:$0xff]
  %1481 = vmatpush.msra.mxu0 %v1477
  %1482 = vmatpush.msra.mxu0 %v1473
  %1483 = vmatpush.msra.mxu0 %v1469
  %1484 = vmatpush.msra.mxu0 %v1465
  %1485 = vmatpush.msra.mxu0 %v1461
  %1486 = vmatpush.msra.mxu0 %v1457
  %1487 = vmatpush.msra.mxu0 %v1453
  %1488 = vmatpush.msra.mxu0 %v1449
  %1489 = vmatpush.msra.mxu0 %v1445
  %1490 = vmatpush.msra.mxu0 %v1441
  %1491 = vmatpush.msra.mxu0 %v1437
  %1492 = vmatpush.msra.mxu0 %v1433
  %1493 = vmatpush.msra.mxu0 %v1429
  %1494 = vmatpush.msra.mxu0 %v1425
  %1495 = vmatpush.msra.mxu0 %v1421
  %1496 = vmatpush.msra.mxu0 %v1417
  %1497 = vmatmul.f32.gmra.mxu0 %v1416
  %v1498 = vpop.f32.mrf.mxu0
  %v1499 = vadd.f32 0.0, %v1498
  %1500 = vdwg.mxu0
  %1501 = vmatpush.msra.mxu0 %v1478
  %1502 = vmatpush.msra.mxu0 %v1474
  %1503 = vmatpush.msra.mxu0 %v1470
  %1504 = vmatpush.msra.mxu0 %v1466
  %1505 = vmatpush.msra.mxu0 %v1462
  %1506 = vmatpush.msra.mxu0 %v1458
  %1507 = vmatpush.msra.mxu0 %v1454
  %1508 = vmatpush.msra.mxu0 %v1450
  %1509 = vmatpush.msra.mxu0 %v1446
  %1510 = vmatpush.msra.mxu0 %v1442
  %1511 = vmatpush.msra.mxu0 %v1438
  %1512 = vmatpush.msra.mxu0 %v1434
  %1513 = vmatpush.msra.mxu0 %v1430
  %1514 = vmatpush.msra.mxu0 %v1426
  %1515 = vmatpush.msra.mxu0 %v1422
  %1516 = vmatpush.msra.mxu0 %v1418
  %1517 = vmatmul.f32.gmra.mxu0 %v1416
  %v1518 = vpop.f32.mrf.mxu0
  %v1519 = vadd.f32 0.0, %v1518
  %1520 = vdwg.mxu0
  %1521 = vmatpush.msra.mxu0 %v1479
  %1522 = vmatpush.msra.mxu0 %v1475
  %1523 = vmatpush.msra.mxu0 %v1471
  %1524 = vmatpush.msra.mxu0 %v1467
  %1525 = vmatpush.msra.mxu0 %v1463
  %1526 = vmatpush.msra.mxu0 %v1459
  %1527 = vmatpush.msra.mxu0 %v1455
  %1528 = vmatpush.msra.mxu0 %v1451
  %1529 = vmatpush.msra.mxu0 %v1447
  %1530 = vmatpush.msra.mxu0 %v1443
  %1531 = vmatpush.msra.mxu0 %v1439
  %1532 = vmatpush.msra.mxu0 %v1435
  %1533 = vmatpush.msra.mxu0 %v1431
  %1534 = vmatpush.msra.mxu0 %v1427
  %1535 = vmatpush.msra.mxu0 %v1423
  %1536 = vmatpush.msra.mxu0 %v1419
  %1537 = vmatmul.f32.gmra.mxu0 %v1416
  %v1538 = vpop.f32.mrf.mxu0
  %v1539 = vadd.f32 0.0, %v1538
  %1540 = vdwg.mxu0
  %1541 = vmatpush.msra.mxu0 %v1480
  %1542 = vmatpush.msra.mxu0 %v1476
  %1543 = vmatpush.msra.mxu0 %v1472
  %1544 = vmatpush.msra.mxu0 %v1468
  %1545 = vmatpush.msra.mxu0 %v1464
  %1546 = vmatpush.msra.mxu0 %v1460
  %1547 = vmatpush.msra.mxu0 %v1456
  %1548 = vmatpush.msra.mxu0 %v1452
  %1549 = vmatpush.msra.mxu0 %v1448
  %1550 = vmatpush.msra.mxu0 %v1444
  %1551 = vmatpush.msra.mxu0 %v1440
  %1552 = vmatpush.msra.mxu0 %v1436
  %1553 = vmatpush.msra.mxu0 %v1432
  %1554 = vmatpush.msra.mxu0 %v1428
  %1555 = vmatpush.msra.mxu0 %v1424
  %1556 = vmatpush.msra.mxu0 %v1420
  %1557 = vmatmul.f32.gmra.mxu0 %v1416
  %v1558 = vpop.f32.mrf.mxu0
  %v1559 = vadd.f32 0.0, %v1558
  %1560 = vdwg.mxu0
  %v1561 = vadd.f32 %v1412, %v1499
  %v1562 = vadd.f32 %v1413, %v1519
  %v1563 = vadd.f32 %v1414, %v1539
  %v1564 = vadd.f32 %v1415, %v1559
  %v1565 = vxor.u32 %v1561, 2147483648
  %v1566 = vmul.f32 %v1565, 1.442695
  %v1567 = vpow.pop %v1566
  %v1568 = vadd.f32 %v1567, 1.0
  %v1569 = vrcp.pop %v1568
  %v1570 = vmul.f32 %v1568, %v1569
  %v1571 = vsub.f32 1.0, %v1570
  %v1572 = vmul.f32 %v1569, %v1571
  %v1573 = vadd.f32 %v1569, %v1572
  %vm1574 = vweird.f32 %v1568
  %vm1575 = vweird.f32 %v1569
  %vm1576 = vmor %vm1574, %vm1575
  %v1577 = vsel %vm1576, %v1569, %v1573
  %v1578 = vand.u32 2147483647, %v1568
  %vm1579 = vcmp.eq.f32.partialorder %v1578, 8.507059e+37
  %v1580 = vand.u32 %v1568, 2147483648
  %v1581 = vor.u32 1.1754944e-38, %v1580
  %v1582 = vsel %vm1579, %v1581, %v1577
  %v1583 = vmul.f32 1.0, %v1582
  %v1584 = vxor.u32 %v1562, 2147483648
  %v1585 = vmul.f32 %v1584, 1.442695
  %v1586 = vpow.pop %v1585
  %v1587 = vadd.f32 %v1586, 1.0
  %v1588 = vrcp.pop %v1587
  %v1589 = vmul.f32 %v1587, %v1588
  %v1590 = vsub.f32 1.0, %v1589
  %v1591 = vmul.f32 %v1588, %v1590
  %v1592 = vadd.f32 %v1588, %v1591
  %vm1593 = vweird.f32 %v1587
  %vm1594 = vweird.f32 %v1588
  %vm1595 = vmor %vm1593, %vm1594
  %v1596 = vsel %vm1595, %v1588, %v1592
  %v1597 = vand.u32 2147483647, %v1587
  %vm1598 = vcmp.eq.f32.partialorder %v1597, 8.507059e+37
  %v1599 = vand.u32 %v1587, 2147483648
  %v1600 = vor.u32 1.1754944e-38, %v1599
  %v1601 = vsel %vm1598, %v1600, %v1596
  %v1602 = vmul.f32 1.0, %v1601
  %v1603 = vtanh.pop %v1563
  %v1604 = vxor.u32 %v1564, 2147483648
  %v1605 = vmul.f32 %v1604, 1.442695
  %v1606 = vpow.pop %v1605
  %v1607 = vadd.f32 %v1606, 1.0
  %v1608 = vrcp.pop %v1607
  %v1609 = vmul.f32 %v1607, %v1608
  %v1610 = vsub.f32 1.0, %v1609
  %v1611 = vmul.f32 %v1608, %v1610
  %v1612 = vadd.f32 %v1608, %v1611
  %vm1613 = vweird.f32 %v1607
  %vm1614 = vweird.f32 %v1608
  %vm1615 = vmor %vm1613, %vm1614
  %v1616 = vsel %vm1615, %v1608, %v1612
  %v1617 = vand.u32 2147483647, %v1607
  %vm1618 = vcmp.eq.f32.partialorder %v1617, 8.507059e+37
  %v1619 = vand.u32 %v1607, 2147483648
  %v1620 = vor.u32 1.1754944e-38, %v1619
  %v1621 = vsel %vm1618, %v1620, %v1616
  %v1622 = vmul.f32 1.0, %v1621
  %v1623 = vld [vmem:[#allocation4] sm:$0xff]
  %v1624 = vmul.f32 %v1602, %v1623
  %v1625 = vmul.f32 %v1583, %v1603
  %v1626 = vadd.f32 %v1624, %v1625
  %v1627 = vtanh.pop %v1626
  %v1628 = vmul.f32 %v1622, %v1627
  %vm1629 = vcmp.gt.s32.totalorder %v727, 3
  %v1630 = vsel %vm1629, 1, 0
  %1631 = vset.pattern.permute.xlu0 0
  %1632 = vperm.xlu0 %1631, %v1630
  %v1633 = vpop.permute.xlu0 %1632
  %vm1634 = vcmp.eq.s32.totalorder %v1633, 1
  %v1635 = vsel %vm1634, %v1628, %v1416
  %1636 = vst [vmem:[#allocation3] sm:$0xff] %v1635
  %v1637 = vld [vmem:[#allocation4] sm:$0xff]
  %v1638 = vsel %vm1634, %v1626, %v1637
  %1639 = vst [vmem:[#allocation4] sm:$0xff] %v1638
  %v1640 = vld [vmem:[%s606] sm:$0xff]
  %v1641 = vld [vmem:[%s606 + $0x8] sm:$0xff]
  %v1642 = vld [vmem:[%s606 + $0x10] sm:$0xff]
  %v1643 = vld [vmem:[%s606 + $0x18] sm:$0xff]
  %v1644 = vld [vmem:[#allocation3] sm:$0xff]
  %v1645 = vld [vmem:[%s3] sm:$0xff]
  %v1646 = vld [vmem:[%s3 + $0x8] sm:$0xff]
  %v1647 = vld [vmem:[%s3 + $0x10] sm:$0xff]
  %v1648 = vld [vmem:[%s3 + $0x18] sm:$0xff]
  %v1649 = vld [vmem:[%s3 + $0x20] sm:$0xff]
  %v1650 = vld [vmem:[%s3 + $0x28] sm:$0xff]
  %v1651 = vld [vmem:[%s3 + $0x30] sm:$0xff]
  %v1652 = vld [vmem:[%s3 + $0x38] sm:$0xff]
  %v1653 = vld [vmem:[%s3 + $0x40] sm:$0xff]
  %v1654 = vld [vmem:[%s3 + $0x48] sm:$0xff]
  %v1655 = vld [vmem:[%s3 + $0x50] sm:$0xff]
  %v1656 = vld [vmem:[%s3 + $0x58] sm:$0xff]
  %v1657 = vld [vmem:[%s3 + $0x60] sm:$0xff]
  %v1658 = vld [vmem:[%s3 + $0x68] sm:$0xff]
  %v1659 = vld [vmem:[%s3 + $0x70] sm:$0xff]
  %v1660 = vld [vmem:[%s3 + $0x78] sm:$0xff]
  %v1661 = vld [vmem:[%s3 + $0x80] sm:$0xff]
  %v1662 = vld [vmem:[%s3 + $0x88] sm:$0xff]
  %v1663 = vld [vmem:[%s3 + $0x90] sm:$0xff]
  %v1664 = vld [vmem:[%s3 + $0x98] sm:$0xff]
  %v1665 = vld [vmem:[%s3 + $0xa0] sm:$0xff]
  %v1666 = vld [vmem:[%s3 + $0xa8] sm:$0xff]
  %v1667 = vld [vmem:[%s3 + $0xb0] sm:$0xff]
  %v1668 = vld [vmem:[%s3 + $0xb8] sm:$0xff]
  %v1669 = vld [vmem:[%s3 + $0xc0] sm:$0xff]
  %v1670 = vld [vmem:[%s3 + $0xc8] sm:$0xff]
  %v1671 = vld [vmem:[%s3 + $0xd0] sm:$0xff]
  %v1672 = vld [vmem:[%s3 + $0xd8] sm:$0xff]
  %v1673 = vld [vmem:[%s3 + $0xe0] sm:$0xff]
  %v1674 = vld [vmem:[%s3 + $0xe8] sm:$0xff]
  %v1675 = vld [vmem:[%s3 + $0xf0] sm:$0xff]
  %v1676 = vld [vmem:[%s3 + $0xf8] sm:$0xff]
  %v1677 = vld [vmem:[%s3 + $0x100] sm:$0xff]
  %v1678 = vld [vmem:[%s3 + $0x108] sm:$0xff]
  %v1679 = vld [vmem:[%s3 + $0x110] sm:$0xff]
  %v1680 = vld [vmem:[%s3 + $0x118] sm:$0xff]
  %v1681 = vld [vmem:[%s3 + $0x120] sm:$0xff]
  %v1682 = vld [vmem:[%s3 + $0x128] sm:$0xff]
  %v1683 = vld [vmem:[%s3 + $0x130] sm:$0xff]
  %v1684 = vld [vmem:[%s3 + $0x138] sm:$0xff]
  %v1685 = vld [vmem:[%s3 + $0x140] sm:$0xff]
  %v1686 = vld [vmem:[%s3 + $0x148] sm:$0xff]
  %v1687 = vld [vmem:[%s3 + $0x150] sm:$0xff]
  %v1688 = vld [vmem:[%s3 + $0x158] sm:$0xff]
  %v1689 = vld [vmem:[%s3 + $0x160] sm:$0xff]
  %v1690 = vld [vmem:[%s3 + $0x168] sm:$0xff]
  %v1691 = vld [vmem:[%s3 + $0x170] sm:$0xff]
  %v1692 = vld [vmem:[%s3 + $0x178] sm:$0xff]
  %v1693 = vld [vmem:[%s3 + $0x180] sm:$0xff]
  %v1694 = vld [vmem:[%s3 + $0x188] sm:$0xff]
  %v1695 = vld [vmem:[%s3 + $0x190] sm:$0xff]
  %v1696 = vld [vmem:[%s3 + $0x198] sm:$0xff]
  %v1697 = vld [vmem:[%s3 + $0x1a0] sm:$0xff]
  %v1698 = vld [vmem:[%s3 + $0x1a8] sm:$0xff]
  %v1699 = vld [vmem:[%s3 + $0x1b0] sm:$0xff]
  %v1700 = vld [vmem:[%s3 + $0x1b8] sm:$0xff]
  %v1701 = vld [vmem:[%s3 + $0x1c0] sm:$0xff]
  %v1702 = vld [vmem:[%s3 + $0x1c8] sm:$0xff]
  %v1703 = vld [vmem:[%s3 + $0x1d0] sm:$0xff]
  %v1704 = vld [vmem:[%s3 + $0x1d8] sm:$0xff]
  %v1705 = vld [vmem:[%s3 + $0x1e0] sm:$0xff]
  %v1706 = vld [vmem:[%s3 + $0x1e8] sm:$0xff]
  %v1707 = vld [vmem:[%s3 + $0x1f0] sm:$0xff]
  %v1708 = vld [vmem:[%s3 + $0x1f8] sm:$0xff]
  %1709 = vmatpush.msra.mxu0 %v1705
  %1710 = vmatpush.msra.mxu0 %v1701
  %1711 = vmatpush.msra.mxu0 %v1697
  %1712 = vmatpush.msra.mxu0 %v1693
  %1713 = vmatpush.msra.mxu0 %v1689
  %1714 = vmatpush.msra.mxu0 %v1685
  %1715 = vmatpush.msra.mxu0 %v1681
  %1716 = vmatpush.msra.mxu0 %v1677
  %1717 = vmatpush.msra.mxu0 %v1673
  %1718 = vmatpush.msra.mxu0 %v1669
  %1719 = vmatpush.msra.mxu0 %v1665
  %1720 = vmatpush.msra.mxu0 %v1661
  %1721 = vmatpush.msra.mxu0 %v1657
  %1722 = vmatpush.msra.mxu0 %v1653
  %1723 = vmatpush.msra.mxu0 %v1649
  %1724 = vmatpush.msra.mxu0 %v1645
  %1725 = vmatmul.f32.gmra.mxu0 %v1644
  %v1726 = vpop.f32.mrf.mxu0
  %v1727 = vadd.f32 0.0, %v1726
  %1728 = vdwg.mxu0
  %1729 = vmatpush.msra.mxu0 %v1706
  %1730 = vmatpush.msra.mxu0 %v1702
  %1731 = vmatpush.msra.mxu0 %v1698
  %1732 = vmatpush.msra.mxu0 %v1694
  %1733 = vmatpush.msra.mxu0 %v1690
  %1734 = vmatpush.msra.mxu0 %v1686
  %1735 = vmatpush.msra.mxu0 %v1682
  %1736 = vmatpush.msra.mxu0 %v1678
  %1737 = vmatpush.msra.mxu0 %v1674
  %1738 = vmatpush.msra.mxu0 %v1670
  %1739 = vmatpush.msra.mxu0 %v1666
  %1740 = vmatpush.msra.mxu0 %v1662
  %1741 = vmatpush.msra.mxu0 %v1658
  %1742 = vmatpush.msra.mxu0 %v1654
  %1743 = vmatpush.msra.mxu0 %v1650
  %1744 = vmatpush.msra.mxu0 %v1646
  %1745 = vmatmul.f32.gmra.mxu0 %v1644
  %v1746 = vpop.f32.mrf.mxu0
  %v1747 = vadd.f32 0.0, %v1746
  %1748 = vdwg.mxu0
  %1749 = vmatpush.msra.mxu0 %v1707
  %1750 = vmatpush.msra.mxu0 %v1703
  %1751 = vmatpush.msra.mxu0 %v1699
  %1752 = vmatpush.msra.mxu0 %v1695
  %1753 = vmatpush.msra.mxu0 %v1691
  %1754 = vmatpush.msra.mxu0 %v1687
  %1755 = vmatpush.msra.mxu0 %v1683
  %1756 = vmatpush.msra.mxu0 %v1679
  %1757 = vmatpush.msra.mxu0 %v1675
  %1758 = vmatpush.msra.mxu0 %v1671
  %1759 = vmatpush.msra.mxu0 %v1667
  %1760 = vmatpush.msra.mxu0 %v1663
  %1761 = vmatpush.msra.mxu0 %v1659
  %1762 = vmatpush.msra.mxu0 %v1655
  %1763 = vmatpush.msra.mxu0 %v1651
  %1764 = vmatpush.msra.mxu0 %v1647
  %1765 = vmatmul.f32.gmra.mxu0 %v1644
  %v1766 = vpop.f32.mrf.mxu0
  %v1767 = vadd.f32 0.0, %v1766
  %1768 = vdwg.mxu0
  %1769 = vmatpush.msra.mxu0 %v1708
  %1770 = vmatpush.msra.mxu0 %v1704
  %1771 = vmatpush.msra.mxu0 %v1700
  %1772 = vmatpush.msra.mxu0 %v1696
  %1773 = vmatpush.msra.mxu0 %v1692
  %1774 = vmatpush.msra.mxu0 %v1688
  %1775 = vmatpush.msra.mxu0 %v1684
  %1776 = vmatpush.msra.mxu0 %v1680
  %1777 = vmatpush.msra.mxu0 %v1676
  %1778 = vmatpush.msra.mxu0 %v1672
  %1779 = vmatpush.msra.mxu0 %v1668
  %1780 = vmatpush.msra.mxu0 %v1664
  %1781 = vmatpush.msra.mxu0 %v1660
  %1782 = vmatpush.msra.mxu0 %v1656
  %1783 = vmatpush.msra.mxu0 %v1652
  %1784 = vmatpush.msra.mxu0 %v1648
  %1785 = vmatmul.f32.gmra.mxu0 %v1644
  %v1786 = vpop.f32.mrf.mxu0
  %v1787 = vadd.f32 0.0, %v1786
  %1788 = vdwg.mxu0
  %v1789 = vadd.f32 %v1640, %v1727
  %v1790 = vadd.f32 %v1641, %v1747
  %v1791 = vadd.f32 %v1642, %v1767
  %v1792 = vadd.f32 %v1643, %v1787
  %v1793 = vxor.u32 %v1789, 2147483648
  %v1794 = vmul.f32 %v1793, 1.442695
  %v1795 = vpow.pop %v1794
  %v1796 = vadd.f32 %v1795, 1.0
  %v1797 = vrcp.pop %v1796
  %v1798 = vmul.f32 %v1796, %v1797
  %v1799 = vsub.f32 1.0, %v1798
  %v1800 = vmul.f32 %v1797, %v1799
  %v1801 = vadd.f32 %v1797, %v1800
  %vm1802 = vweird.f32 %v1796
  %vm1803 = vweird.f32 %v1797
  %vm1804 = vmor %vm1802, %vm1803
  %v1805 = vsel %vm1804, %v1797, %v1801
  %v1806 = vand.u32 2147483647, %v1796
  %vm1807 = vcmp.eq.f32.partialorder %v1806, 8.507059e+37
  %v1808 = vand.u32 %v1796, 2147483648
  %v1809 = vor.u32 1.1754944e-38, %v1808
  %v1810 = vsel %vm1807, %v1809, %v1805
  %v1811 = vmul.f32 1.0, %v1810
  %v1812 = vxor.u32 %v1790, 2147483648
  %v1813 = vmul.f32 %v1812, 1.442695
  %v1814 = vpow.pop %v1813
  %v1815 = vadd.f32 %v1814, 1.0
  %v1816 = vrcp.pop %v1815
  %v1817 = vmul.f32 %v1815, %v1816
  %v1818 = vsub.f32 1.0, %v1817
  %v1819 = vmul.f32 %v1816, %v1818
  %v1820 = vadd.f32 %v1816, %v1819
  %vm1821 = vweird.f32 %v1815
  %vm1822 = vweird.f32 %v1816
  %vm1823 = vmor %vm1821, %vm1822
  %v1824 = vsel %vm1823, %v1816, %v1820
  %v1825 = vand.u32 2147483647, %v1815
  %vm1826 = vcmp.eq.f32.partialorder %v1825, 8.507059e+37
  %v1827 = vand.u32 %v1815, 2147483648
  %v1828 = vor.u32 1.1754944e-38, %v1827
  %v1829 = vsel %vm1826, %v1828, %v1824
  %v1830 = vmul.f32 1.0, %v1829
  %v1831 = vtanh.pop %v1791
  %v1832 = vxor.u32 %v1792, 2147483648
  %v1833 = vmul.f32 %v1832, 1.442695
  %v1834 = vpow.pop %v1833
  %v1835 = vadd.f32 %v1834, 1.0
  %v1836 = vrcp.pop %v1835
  %v1837 = vmul.f32 %v1835, %v1836
  %v1838 = vsub.f32 1.0, %v1837
  %v1839 = vmul.f32 %v1836, %v1838
  %v1840 = vadd.f32 %v1836, %v1839
  %vm1841 = vweird.f32 %v1835
  %vm1842 = vweird.f32 %v1836
  %vm1843 = vmor %vm1841, %vm1842
  %v1844 = vsel %vm1843, %v1836, %v1840
  %v1845 = vand.u32 2147483647, %v1835
  %vm1846 = vcmp.eq.f32.partialorder %v1845, 8.507059e+37
  %v1847 = vand.u32 %v1835, 2147483648
  %v1848 = vor.u32 1.1754944e-38, %v1847
  %v1849 = vsel %vm1846, %v1848, %v1844
  %v1850 = vmul.f32 1.0, %v1849
  %v1851 = vld [vmem:[#allocation4] sm:$0xff]
  %v1852 = vmul.f32 %v1830, %v1851
  %v1853 = vmul.f32 %v1811, %v1831
  %v1854 = vadd.f32 %v1852, %v1853
  %v1855 = vtanh.pop %v1854
  %v1856 = vmul.f32 %v1850, %v1855
  %vm1857 = vcmp.gt.s32.totalorder %v727, 4
  %v1858 = vsel %vm1857, 1, 0
  %1859 = vset.pattern.permute.xlu0 0
  %1860 = vperm.xlu0 %1859, %v1858
  %v1861 = vpop.permute.xlu0 %1860
  %vm1862 = vcmp.eq.s32.totalorder %v1861, 1
  %v1863 = vsel %vm1862, %v1856, %v1644
  %1864 = vst [vmem:[#allocation3] sm:$0xff] %v1863
  %v1865 = vld [vmem:[#allocation4] sm:$0xff]
  %v1866 = vsel %vm1862, %v1854, %v1865
  %1867 = vst [vmem:[#allocation4] sm:$0xff] %v1866
  %v1868 = vld [vmem:[%s720] sm:$0xff]
  %v1869 = vld [vmem:[%s720 + $0x8] sm:$0xff]
  %v1870 = vld [vmem:[%s720 + $0x10] sm:$0xff]
  %v1871 = vld [vmem:[%s720 + $0x18] sm:$0xff]
  %v1872 = vld [vmem:[#allocation3] sm:$0xff]
  %v1873 = vld [vmem:[%s3] sm:$0xff]
  %v1874 = vld [vmem:[%s3 + $0x8] sm:$0xff]
  %v1875 = vld [vmem:[%s3 + $0x10] sm:$0xff]
  %v1876 = vld [vmem:[%s3 + $0x18] sm:$0xff]
  %v1877 = vld [vmem:[%s3 + $0x20] sm:$0xff]
  %v1878 = vld [vmem:[%s3 + $0x28] sm:$0xff]
  %v1879 = vld [vmem:[%s3 + $0x30] sm:$0xff]
  %v1880 = vld [vmem:[%s3 + $0x38] sm:$0xff]
  %v1881 = vld [vmem:[%s3 + $0x40] sm:$0xff]
  %v1882 = vld [vmem:[%s3 + $0x48] sm:$0xff]
  %v1883 = vld [vmem:[%s3 + $0x50] sm:$0xff]
  %v1884 = vld [vmem:[%s3 + $0x58] sm:$0xff]
  %v1885 = vld [vmem:[%s3 + $0x60] sm:$0xff]
  %v1886 = vld [vmem:[%s3 + $0x68] sm:$0xff]
  %v1887 = vld [vmem:[%s3 + $0x70] sm:$0xff]
  %v1888 = vld [vmem:[%s3 + $0x78] sm:$0xff]
  %v1889 = vld [vmem:[%s3 + $0x80] sm:$0xff]
  %v1890 = vld [vmem:[%s3 + $0x88] sm:$0xff]
  %v1891 = vld [vmem:[%s3 + $0x90] sm:$0xff]
  %v1892 = vld [vmem:[%s3 + $0x98] sm:$0xff]
  %v1893 = vld [vmem:[%s3 + $0xa0] sm:$0xff]
  %v1894 = vld [vmem:[%s3 + $0xa8] sm:$0xff]
  %v1895 = vld [vmem:[%s3 + $0xb0] sm:$0xff]
  %v1896 = vld [vmem:[%s3 + $0xb8] sm:$0xff]
  %v1897 = vld [vmem:[%s3 + $0xc0] sm:$0xff]
  %v1898 = vld [vmem:[%s3 + $0xc8] sm:$0xff]
  %v1899 = vld [vmem:[%s3 + $0xd0] sm:$0xff]
  %v1900 = vld [vmem:[%s3 + $0xd8] sm:$0xff]
  %v1901 = vld [vmem:[%s3 + $0xe0] sm:$0xff]
  %v1902 = vld [vmem:[%s3 + $0xe8] sm:$0xff]
  %v1903 = vld [vmem:[%s3 + $0xf0] sm:$0xff]
  %v1904 = vld [vmem:[%s3 + $0xf8] sm:$0xff]
  %v1905 = vld [vmem:[%s3 + $0x100] sm:$0xff]
  %v1906 = vld [vmem:[%s3 + $0x108] sm:$0xff]
  %v1907 = vld [vmem:[%s3 + $0x110] sm:$0xff]
  %v1908 = vld [vmem:[%s3 + $0x118] sm:$0xff]
  %v1909 = vld [vmem:[%s3 + $0x120] sm:$0xff]
  %v1910 = vld [vmem:[%s3 + $0x128] sm:$0xff]
  %v1911 = vld [vmem:[%s3 + $0x130] sm:$0xff]
  %v1912 = vld [vmem:[%s3 + $0x138] sm:$0xff]
  %v1913 = vld [vmem:[%s3 + $0x140] sm:$0xff]
  %v1914 = vld [vmem:[%s3 + $0x148] sm:$0xff]
  %v1915 = vld [vmem:[%s3 + $0x150] sm:$0xff]
  %v1916 = vld [vmem:[%s3 + $0x158] sm:$0xff]
  %v1917 = vld [vmem:[%s3 + $0x160] sm:$0xff]
  %v1918 = vld [vmem:[%s3 + $0x168] sm:$0xff]
  %v1919 = vld [vmem:[%s3 + $0x170] sm:$0xff]
  %v1920 = vld [vmem:[%s3 + $0x178] sm:$0xff]
  %v1921 = vld [vmem:[%s3 + $0x180] sm:$0xff]
  %v1922 = vld [vmem:[%s3 + $0x188] sm:$0xff]
  %v1923 = vld [vmem:[%s3 + $0x190] sm:$0xff]
  %v1924 = vld [vmem:[%s3 + $0x198] sm:$0xff]
  %v1925 = vld [vmem:[%s3 + $0x1a0] sm:$0xff]
  %v1926 = vld [vmem:[%s3 + $0x1a8] sm:$0xff]
  %v1927 = vld [vmem:[%s3 + $0x1b0] sm:$0xff]
  %v1928 = vld [vmem:[%s3 + $0x1b8] sm:$0xff]
  %v1929 = vld [vmem:[%s3 + $0x1c0] sm:$0xff]
  %v1930 = vld [vmem:[%s3 + $0x1c8] sm:$0xff]
  %v1931 = vld [vmem:[%s3 + $0x1d0] sm:$0xff]
  %v1932 = vld [vmem:[%s3 + $0x1d8] sm:$0xff]
  %v1933 = vld [vmem:[%s3 + $0x1e0] sm:$0xff]
  %v1934 = vld [vmem:[%s3 + $0x1e8] sm:$0xff]
  %v1935 = vld [vmem:[%s3 + $0x1f0] sm:$0xff]
  %v1936 = vld [vmem:[%s3 + $0x1f8] sm:$0xff]
  %1937 = vmatpush.msra.mxu0 %v1933
  %1938 = vmatpush.msra.mxu0 %v1929
  %1939 = vmatpush.msra.mxu0 %v1925
  %1940 = vmatpush.msra.mxu0 %v1921
  %1941 = vmatpush.msra.mxu0 %v1917
  %1942 = vmatpush.msra.mxu0 %v1913
  %1943 = vmatpush.msra.mxu0 %v1909
  %1944 = vmatpush.msra.mxu0 %v1905
  %1945 = vmatpush.msra.mxu0 %v1901
  %1946 = vmatpush.msra.mxu0 %v1897
  %1947 = vmatpush.msra.mxu0 %v1893
  %1948 = vmatpush.msra.mxu0 %v1889
  %1949 = vmatpush.msra.mxu0 %v1885
  %1950 = vmatpush.msra.mxu0 %v1881
  %1951 = vmatpush.msra.mxu0 %v1877
  %1952 = vmatpush.msra.mxu0 %v1873
  %1953 = vmatmul.f32.gmra.mxu0 %v1872
  %v1954 = vpop.f32.mrf.mxu0
  %v1955 = vadd.f32 0.0, %v1954
  %1956 = vdwg.mxu0
  %1957 = vmatpush.msra.mxu0 %v1934
  %1958 = vmatpush.msra.mxu0 %v1930
  %1959 = vmatpush.msra.mxu0 %v1926
  %1960 = vmatpush.msra.mxu0 %v1922
  %1961 = vmatpush.msra.mxu0 %v1918
  %1962 = vmatpush.msra.mxu0 %v1914
  %1963 = vmatpush.msra.mxu0 %v1910
  %1964 = vmatpush.msra.mxu0 %v1906
  %1965 = vmatpush.msra.mxu0 %v1902
  %1966 = vmatpush.msra.mxu0 %v1898
  %1967 = vmatpush.msra.mxu0 %v1894
  %1968 = vmatpush.msra.mxu0 %v1890
  %1969 = vmatpush.msra.mxu0 %v1886
  %1970 = vmatpush.msra.mxu0 %v1882
  %1971 = vmatpush.msra.mxu0 %v1878
  %1972 = vmatpush.msra.mxu0 %v1874
  %1973 = vmatmul.f32.gmra.mxu0 %v1872
  %v1974 = vpop.f32.mrf.mxu0
  %v1975 = vadd.f32 0.0, %v1974
  %1976 = vdwg.mxu0
  %1977 = vmatpush.msra.mxu0 %v1935
  %1978 = vmatpush.msra.mxu0 %v1931
  %1979 = vmatpush.msra.mxu0 %v1927
  %1980 = vmatpush.msra.mxu0 %v1923
  %1981 = vmatpush.msra.mxu0 %v1919
  %1982 = vmatpush.msra.mxu0 %v1915
  %1983 = vmatpush.msra.mxu0 %v1911
  %1984 = vmatpush.msra.mxu0 %v1907
  %1985 = vmatpush.msra.mxu0 %v1903
  %1986 = vmatpush.msra.mxu0 %v1899
  %1987 = vmatpush.msra.mxu0 %v1895
  %1988 = vmatpush.msra.mxu0 %v1891
  %1989 = vmatpush.msra.mxu0 %v1887
  %1990 = vmatpush.msra.mxu0 %v1883
  %1991 = vmatpush.msra.mxu0 %v1879
  %1992 = vmatpush.msra.mxu0 %v1875
  %1993 = vmatmul.f32.gmra.mxu0 %v1872
  %v1994 = vpop.f32.mrf.mxu0
  %v1995 = vadd.f32 0.0, %v1994
  %1996 = vdwg.mxu0
  %1997 = vmatpush.msra.mxu0 %v1936
  %1998 = vmatpush.msra.mxu0 %v1932
  %1999 = vmatpush.msra.mxu0 %v1928
  %2000 = vmatpush.msra.mxu0 %v1924
  %2001 = vmatpush.msra.mxu0 %v1920
  %2002 = vmatpush.msra.mxu0 %v1916
  %2003 = vmatpush.msra.mxu0 %v1912
  %2004 = vmatpush.msra.mxu0 %v1908
  %2005 = vmatpush.msra.mxu0 %v1904
  %2006 = vmatpush.msra.mxu0 %v1900
  %2007 = vmatpush.msra.mxu0 %v1896
  %2008 = vmatpush.msra.mxu0 %v1892
  %2009 = vmatpush.msra.mxu0 %v1888
  %2010 = vmatpush.msra.mxu0 %v1884
  %2011 = vmatpush.msra.mxu0 %v1880
  %2012 = vmatpush.msra.mxu0 %v1876
  %2013 = vmatmul.f32.gmra.mxu0 %v1872
  %v2014 = vpop.f32.mrf.mxu0
  %v2015 = vadd.f32 0.0, %v2014
  %2016 = vdwg.mxu0
  %v2017 = vadd.f32 %v1868, %v1955
  %v2018 = vadd.f32 %v1869, %v1975
  %v2019 = vadd.f32 %v1870, %v1995
  %v2020 = vadd.f32 %v1871, %v2015
  %v2021 = vxor.u32 %v2017, 2147483648
  %v2022 = vmul.f32 %v2021, 1.442695
  %v2023 = vpow.pop %v2022
  %v2024 = vadd.f32 %v2023, 1.0
  %v2025 = vrcp.pop %v2024
  %v2026 = vmul.f32 %v2024, %v2025
  %v2027 = vsub.f32 1.0, %v2026
  %v2028 = vmul.f32 %v2025, %v2027
  %v2029 = vadd.f32 %v2025, %v2028
  %vm2030 = vweird.f32 %v2024
  %vm2031 = vweird.f32 %v2025
  %vm2032 = vmor %vm2030, %vm2031
  %v2033 = vsel %vm2032, %v2025, %v2029
  %v2034 = vand.u32 2147483647, %v2024
  %vm2035 = vcmp.eq.f32.partialorder %v2034, 8.507059e+37
  %v2036 = vand.u32 %v2024, 2147483648
  %v2037 = vor.u32 1.1754944e-38, %v2036
  %v2038 = vsel %vm2035, %v2037, %v2033
  %v2039 = vmul.f32 1.0, %v2038
  %v2040 = vxor.u32 %v2018, 2147483648
  %v2041 = vmul.f32 %v2040, 1.442695
  %v2042 = vpow.pop %v2041
  %v2043 = vadd.f32 %v2042, 1.0
  %v2044 = vrcp.pop %v2043
  %v2045 = vmul.f32 %v2043, %v2044
  %v2046 = vsub.f32 1.0, %v2045
  %v2047 = vmul.f32 %v2044, %v2046
  %v2048 = vadd.f32 %v2044, %v2047
  %vm2049 = vweird.f32 %v2043
  %vm2050 = vweird.f32 %v2044
  %vm2051 = vmor %vm2049, %vm2050
  %v2052 = vsel %vm2051, %v2044, %v2048
  %v2053 = vand.u32 2147483647, %v2043
  %vm2054 = vcmp.eq.f32.partialorder %v2053, 8.507059e+37
  %v2055 = vand.u32 %v2043, 2147483648
  %v2056 = vor.u32 1.1754944e-38, %v2055
  %v2057 = vsel %vm2054, %v2056, %v2052
  %v2058 = vmul.f32 1.0, %v2057
  %v2059 = vtanh.pop %v2019
  %v2060 = vxor.u32 %v2020, 2147483648
  %v2061 = vmul.f32 %v2060, 1.442695
  %v2062 = vpow.pop %v2061
  %v2063 = vadd.f32 %v2062, 1.0
  %v2064 = vrcp.pop %v2063
  %v2065 = vmul.f32 %v2063, %v2064
  %v2066 = vsub.f32 1.0, %v2065
  %v2067 = vmul.f32 %v2064, %v2066
  %v2068 = vadd.f32 %v2064, %v2067
  %vm2069 = vweird.f32 %v2063
  %vm2070 = vweird.f32 %v2064
  %vm2071 = vmor %vm2069, %vm2070
  %v2072 = vsel %vm2071, %v2064, %v2068
  %v2073 = vand.u32 2147483647, %v2063
  %vm2074 = vcmp.eq.f32.partialorder %v2073, 8.507059e+37
  %v2075 = vand.u32 %v2063, 2147483648
  %v2076 = vor.u32 1.1754944e-38, %v2075
  %v2077 = vsel %vm2074, %v2076, %v2072
  %v2078 = vmul.f32 1.0, %v2077
  %v2079 = vld [vmem:[#allocation4] sm:$0xff]
  %v2080 = vmul.f32 %v2058, %v2079
  %v2081 = vmul.f32 %v2039, %v2059
  %v2082 = vadd.f32 %v2080, %v2081
  %v2083 = vtanh.pop %v2082
  %v2084 = vmul.f32 %v2078, %v2083
  %vm2085 = vcmp.gt.s32.totalorder %v727, 5
  %v2086 = vsel %vm2085, 1, 0
  %2087 = vset.pattern.permute.xlu0 0
  %2088 = vperm.xlu0 %2087, %v2086
  %v2089 = vpop.permute.xlu0 %2088
  %vm2090 = vcmp.eq.s32.totalorder %v2089, 1
  %v2091 = vsel %vm2090, %v2084, %v1872
  %2092 = vst [vmem:[#allocation3] sm:$0xff] %v2091
  %v2093 = vld [vmem:[#allocation4] sm:$0xff]
  %v2094 = vsel %vm2090, %v2082, %v2093
  %2095 = vst [vmem:[#allocation4] sm:$0xff] %v2094
  %v2096 = vld [vmem:[#allocation3] sm:$0xff]
  %v2097 = vld [vmem:[%s5] sm:$0xff]
  %v2098 = vld [vmem:[%s5 + $0x8] sm:$0xff]
  %v2099 = vld [vmem:[%s5 + $0x10] sm:$0xff]
  %v2100 = vld [vmem:[%s5 + $0x18] sm:$0xff]
  %v2101 = vld [vmem:[%s5 + $0x20] sm:$0xff]
  %v2102 = vld [vmem:[%s5 + $0x28] sm:$0xff]
  %v2103 = vld [vmem:[%s5 + $0x30] sm:$0xff]
  %v2104 = vld [vmem:[%s5 + $0x38] sm:$0xff]
  %v2105 = vld [vmem:[%s5 + $0x40] sm:$0xff]
  %v2106 = vld [vmem:[%s5 + $0x48] sm:$0xff]
  %v2107 = vld [vmem:[%s5 + $0x50] sm:$0xff]
  %v2108 = vld [vmem:[%s5 + $0x58] sm:$0xff]
  %v2109 = vld [vmem:[%s5 + $0x60] sm:$0xff]
  %v2110 = vld [vmem:[%s5 + $0x68] sm:$0xff]
  %v2111 = vld [vmem:[%s5 + $0x70] sm:$0xff]
  %v2112 = vld [vmem:[%s5 + $0x78] sm:$0xff]
  %v2113 = vld [vmem:[%s6] sm:$0x1]
  %v2115 = vperm.slane %v2113, 0
  %2117 = vmatpush.msra.mxu0 %v2112
  %2118 = vmatpush.msra.mxu0 %v2111
  %2119 = vmatpush.msra.mxu0 %v2110
  %2120 = vmatpush.msra.mxu0 %v2109
  %2121 = vmatpush.msra.mxu0 %v2108
  %2122 = vmatpush.msra.mxu0 %v2107
  %2123 = vmatpush.msra.mxu0 %v2106
  %2124 = vmatpush.msra.mxu0 %v2105
  %2125 = vmatpush.msra.mxu0 %v2104
  %2126 = vmatpush.msra.mxu0 %v2103
  %2127 = vmatpush.msra.mxu0 %v2102
  %2128 = vmatpush.msra.mxu0 %v2101
  %2129 = vmatpush.msra.mxu0 %v2100
  %2130 = vmatpush.msra.mxu0 %v2099
  %2131 = vmatpush.msra.mxu0 %v2098
  %2132 = vmatpush.msra.mxu0 %v2097
  %2133 = vmatmul.f32.gmra.mxu0 %v2096
  %v2134 = vpop.f32.mrf.mxu0
  %v2135 = vadd.f32 %v2115, %v2134
  %2136 = vdwg.mxu0
  %v2137 = vmax.f32 %v2135, 0.0
  %v2138 = vld [vmem:[%s7] sm:$0xff]
  %v2139 = vld [vmem:[%s7 + $0x8] sm:$0xff]
  %v2140 = vld [vmem:[%s7 + $0x10] sm:$0xff]
  %v2141 = vld [vmem:[%s7 + $0x18] sm:$0xff]
  %v2142 = vld [vmem:[%s8] sm:$0x1]
  %v2144 = vperm.slane %v2142, 0
  %vm2146 = vcmask 261120
  %v2148 = vsel %vm2146, %v2137, 0
  %2150 = vmatpush.msra.mxu0 0.0
  %2151 = vmatpush.msra.mxu0 0.0
  %2152 = vmatpush.msra.mxu0 0.0
  %2153 = vmatpush.msra.mxu0 0.0
  %2154 = vmatpush.msra.mxu0 0.0
  %2155 = vmatpush.msra.mxu0 0.0
  %2156 = vmatpush.msra.mxu0 0.0
  %2157 = vmatpush.msra.mxu0 0.0
  %2158 = vmatpush.msra.mxu0 0.0
  %2159 = vmatpush.msra.mxu0 0.0
  %2160 = vmatpush.msra.mxu0 0.0
  %2161 = vmatpush.msra.mxu0 0.0
  %2162 = vmatpush.msra.mxu0 %v2141
  %2163 = vmatpush.msra.mxu0 %v2140
  %2164 = vmatpush.msra.mxu0 %v2139
  %2165 = vmatpush.msra.mxu0 %v2138
  %2166 = vmatmul.f32.gmra.mxu0 %v2148
  %v2167 = vpop.f32.mrf.mxu0
  %v2168 = vadd.f32 %v2144, %v2167
  %2169 = vdwg.mxu0
  %2170 = vst [vmem:[%s9] sm:$0xff] %v2168
  // Predicated region
  $region38: #{kprn_forward.1} parent=0 // pred_check
    _
  $region39: #{kprn_forward.1} parent=0 // pred_check_branch
    %2172 = sbr.rel (0) target = $region41
  $region40: #{kprn_forward.1} parent=0 // pred_region
    _
  $region41: #{kprn_forward.1} parent=0 // pred_fallthru
    _
  // Predicated region
  $region42: #{kprn_forward.1} parent=0 // pred_check
    _
  $region43: #{kprn_forward.1} parent=0 // pred_check_branch
    %2174 = sbr.rel (0) target = $region45
  $region44: #{kprn_forward.1} parent=0 // pred_region
    _
  $region45: #{kprn_forward.1} parent=0 // pred_fallthru
    _

</llo_original>
